<compile_context>
chip_gen: v6e
topology: v6e:2x2x1
jax: 0.10.0
libtpu: 0.0.40
codegen_flags: <defaults>
</compile_context>

<pallas_src>
import math
from functools import partial

import jax
import jax.numpy as jnp
from jax.experimental import pallas as pl
from jax.experimental.pallas import tpu as pltpu


# ----------------------------------------------------------------------------
# In-kernel helpers
# ----------------------------------------------------------------------------

def _ln_f32(x, g, b, eps=1e-5):
    mu = jnp.mean(x, axis=-1, keepdims=True)
    xc = x - mu
    var = jnp.mean(xc * xc, axis=-1, keepdims=True)
    return xc * jax.lax.rsqrt(var + eps) * g + b


def _const_spec(shape):
    """Whole-array block, constant block index across the batch grid.

    Weight blocks never change across the grid, so request single buffering
    when the installed Pallas supports pipeline_mode (halves weight VMEM)."""
    idx = lambda b: (0,) * len(shape)
    buffered = getattr(pl, "Buffered", None)
    if buffered is not None:
        try:
            return pl.BlockSpec(shape, idx, pipeline_mode=buffered(1))
        except TypeError:
            pass
    return pl.BlockSpec(shape, idx)


def _pick_bb(B, S, target_rows=256):
    """Rows-per-grid-step: aim for ~target_rows matmul rows, keep >=2 grid
    steps when B >= 2 so both TensorCores get work on v7x."""
    bb = max(1, min(B, target_rows // max(S, 1)))
    while B % bb:
        bb -= 1
    if B >= 2 and B // bb < 2:
        bb = max(1, bb // 2)
        while B % bb:
            bb -= 1
    return bb


# ----------------------------------------------------------------------------
# Fused ResidualAttentionBlock kernel (one grid step == Bb batch elements)
# ----------------------------------------------------------------------------

def _make_block_kernel(n_head, add_pos, bb, seq, dim):
    def kernel(*refs):
        if add_pos:
            (x_ref, pos_ref, ln1g, ln1b, wqkv, bqkv, wo_r, bo_r,
             ln2g, ln2b, wfc, bfc, wpr, bpr, o_ref) = refs
        else:
            (x_ref, ln1g, ln1b, wqkv, bqkv, wo_r, bo_r,
             ln2g, ln2b, wfc, bfc, wpr, bpr, o_ref) = refs
            pos_ref = None

        S, D = seq, dim
        Dh = D // n_head
        scale = 1.0 / math.sqrt(Dh)
        mm_dtype = wqkv.dtype                     # bf16 matmul operands, f32 accum

        x = x_ref[...].astype(jnp.float32)        # (Bb, S, D)
        if add_pos:
            x = x + pos_ref[...].astype(jnp.float32)[None]
        xf = x.reshape(bb * S, D)                 # flatten rows for the big matmuls

        # ---- attention branch: LN1 + fused QKV proj ------------------------
        h = _ln_f32(xf, ln1g[...].astype(jnp.float32), ln1b[...].astype(jnp.float32))
        qkv = (jnp.dot(h.astype(mm_dtype), wqkv[...],
                       preferred_element_type=jnp.float32)
               + bqkv[...].astype(jnp.float32))   # (Bb*S, 3D), f32
        qkv = qkv.reshape(bb, S, 3 * D)

        # causal additive mask, built in-kernel (saves an HBM input)
        ri = jax.lax.broadcasted_iota(jnp.int32, (S, S), 0)
        ci = jax.lax.broadcasted_iota(jnp.int32, (S, S), 1)
        neg_mask = jnp.where(ci > ri, jnp.float32(-1e30), jnp.float32(0.0))

        # per-sample, per-head SDPA; heads concatenated, ONE out-proj matmul.
        per_sample = []
        for b in range(bb):                       # static: Bb small by construction
            heads = []
            for hd in range(n_head):
                lo = hd * Dh
                qh = qkv[b, :, lo:lo + Dh] * scale               # scale folded into q
                kh = qkv[b, :, D + lo:D + lo + Dh]
                vh = qkv[b, :, 2 * D + lo:2 * D + lo + Dh]
                s = jnp.dot(qh.astype(mm_dtype), kh.astype(mm_dtype).T,
                            preferred_element_type=jnp.float32) + neg_mask
                m = jnp.max(s, axis=-1, keepdims=True)
                p = jnp.exp(s - m)                                # f32 softmax
                l = jnp.sum(p, axis=-1, keepdims=True)
                oh = jnp.dot(p.astype(mm_dtype), vh.astype(mm_dtype),
                             preferred_element_type=jnp.float32)  # (S, Dh)
                # normalize the (S, Dh) output instead of the (S, S) probs
                oh = oh * pl.reciprocal(l, approx=True)           # EUP, not VPU divide
                heads.append(oh)
            per_sample.append(jnp.concatenate(heads, axis=-1))    # (S, D)
        attn = jnp.concatenate(per_sample, axis=0)                # (Bb*S, D)

        # single K=D out-projection for all rows + fused residual add
        xf = xf + (jnp.dot(attn.astype(mm_dtype), wo_r[...],
                           preferred_element_type=jnp.float32)
                   + bo_r[...].astype(jnp.float32))

        # ---- MLP branch: LN2 + fc + QuickGELU + proj + residual -------------
        h = _ln_f32(xf, ln2g[...].astype(jnp.float32), ln2b[...].astype(jnp.float32))
        h = (jnp.dot(h.astype(mm_dtype), wfc[...],
                     preferred_element_type=jnp.float32)
             + bfc[...].astype(jnp.float32))
        h = h * jax.nn.sigmoid(1.702 * h)                         # QuickGELU (f32)
        h = (jnp.dot(h.astype(mm_dtype), wpr[...],
                     preferred_element_type=jnp.float32)
             + bpr[...].astype(jnp.float32))
        xf = xf + h                                               # fused residual add

        o_ref[...] = xf.reshape(bb, S, D).astype(o_ref.dtype)

    return kernel


def residual_block(x, lp, pos_emb, n_head, add_pos, bb):
    B, S, D = x.shape
    assert B % bb == 0
    grid = (B // bb,)

    in_specs = [pl.BlockSpec((bb, S, D), lambda b: (b, 0, 0))]
    args = [x]
    if add_pos:
        in_specs.append(_const_spec(pos_emb.shape))
        args.append(pos_emb)
    for name in ("ln1_g", "ln1_b", "in_proj_w", "in_proj_b",
                 "out_proj_w", "out_proj_b", "ln2_g", "ln2_b",
                 "fc_w", "fc_b", "proj_w", "proj_b"):
        in_specs.append(_const_spec(lp[name].shape))
        args.append(lp[name])

    return pl.pallas_call(
        _make_block_kernel(n_head, add_pos, bb, S, D),
        out_shape=jax.ShapeDtypeStruct((B, S, D), x.dtype),
        grid=grid,
        in_specs=in_specs,
        out_specs=pl.BlockSpec((bb, S, D), lambda b: (b, 0, 0)),
        compiler_params=pltpu.CompilerParams(
            dimension_semantics=("parallel",),
            vmem_limit_bytes=48 * 1024 * 1024),
    )(*args)


# ----------------------------------------------------------------------------
# Fused ln_final + text_projection on the gathered EOT rows
# ----------------------------------------------------------------------------

def _final_kernel(x_ref, g_ref, b_ref, w_ref, o_ref):
    x = x_ref[...].astype(jnp.float32)                            # (B, D)
    y = _ln_f32(x, g_ref[...].astype(jnp.float32), b_ref[...].astype(jnp.float32))
    o_ref[...] = jnp.dot(y.astype(w_ref.dtype), w_ref[...],
                         preferred_element_type=jnp.float32).astype(o_ref.dtype)


def _final_project(x_eot, g, b, w):
    B, _ = x_eot.shape
    P = w.shape[1]
    vmem = pl.BlockSpec(memory_space=pltpu.MemorySpace.VMEM)
    return pl.pallas_call(
        _final_kernel,
        out_shape=jax.ShapeDtypeStruct((B, P), x_eot.dtype),
        in_specs=[vmem, vmem, vmem, vmem],
        out_specs=vmem,
    )(x_eot, g, b, w)


# ----------------------------------------------------------------------------
# Forward pass (== TextEncoderWithPrompt.forward)
# ----------------------------------------------------------------------------

def text_encoder_forward(prompts, tokenized_prompts, params):
    B, S, D = prompts.shape
    layers = params["layers"]
    bb = _pick_bb(B, S)

    x = prompts
    if not layers:                                                # degenerate case
        x = x + params["pos_emb"][None].astype(x.dtype)
    for i, lp in enumerate(layers):
        # pos-emb add fused into layer 0's kernel
        x = residual_block(x, lp, params["pos_emb"], params["n_head"],
                           add_pos=(i == 0), bb=bb)

    # EOT token gather (argmax over token ids) — tiny, B rows, plain XLA.
    eot = jnp.argmax(tokenized_prompts, axis=-1)
    x_eot = jnp.take_along_axis(x, eot[:, None, None], axis=1)[:, 0, :]   # (B, D)

    # ln_final is row-wise, so gather-then-LN == LN-then-gather; fused with
    # the text_projection matmul in one kernel.
    return _final_project(x_eot, params["lnf_g"], params["lnf_b"],
                          params["text_projection"])


# ----------------------------------------------------------------------------
# Deterministic parameter construction
#   Matmul weights stored in bf16 (MXU-native, halves weight HBM/VMEM traffic);
#   biases / LN params / positional embedding stay f32.
#   NOTE: weights are (in, out) used as x @ W; real CLIP (out, in) checkpoints
#   must be transposed when loaded.
# ----------------------------------------------------------------------------

def make_params(key, *, seq, dim, n_head, n_layers, proj_dim,
                w_dtype=jnp.bfloat16, p_dtype=jnp.float32):
    def nrm(k, shape, dtype, scale=0.02):
        return (scale * jax.random.normal(k, shape)).astype(dtype)

    keys = jax.random.split(key, 3 + n_layers)
    params = {
        "n_head": n_head,
        "pos_emb": nrm(keys[0], (seq, dim), p_dtype),
        "lnf_g": jnp.ones((1, dim), p_dtype),
        "lnf_b": jnp.zeros((1, dim), p_dtype),
        "text_projection": nrm(keys[1], (dim, proj_dim), w_dtype),
        "layers": [],
    }
    for l in range(n_layers):
        lk = jax.random.split(keys[3 + l], 8)
        params["layers"].append({
            "ln1_g": jnp.ones((1, dim), p_dtype),
            "ln1_b": jnp.zeros((1, dim), p_dtype),
            "in_proj_w": nrm(lk[0], (dim, 3 * dim), w_dtype),
            "in_proj_b": nrm(lk[1], (1, 3 * dim), p_dtype),
            "out_proj_w": nrm(lk[2], (dim, dim), w_dtype),
            "out_proj_b": nrm(lk[3], (1, dim), p_dtype),
            "ln2_g": jnp.ones((1, dim), p_dtype),
            "ln2_b": jnp.zeros((1, dim), p_dtype),
            "fc_w": nrm(lk[4], (dim, 4 * dim), w_dtype),
            "fc_b": nrm(lk[5], (1, 4 * dim), p_dtype),
            "proj_w": nrm(lk[6], (4 * dim, dim), w_dtype),
            "proj_b": nrm(lk[7], (1, dim), p_dtype),
        })
    return params


# ----------------------------------------------------------------------------
# Main
# ----------------------------------------------------------------------------

if __name__ == "__main__":
    B, S, D, H, L, P = 2, 8, 32, 4, 2, 16

    root = jax.random.PRNGKey(0)
    k_params, k_prompts, k_tok = jax.random.split(root, 3)

    params = make_params(k_params, seq=S, dim=D, n_head=H, n_layers=L, proj_dim=P)

    prompts = (0.02 * jax.random.normal(k_prompts, (B, S, D))).astype(jnp.float32)
    tokenized_prompts = jax.random.randint(k_tok, (B, S), 1, 1000, dtype=jnp.int32)

    fwd = jax.jit(partial(text_encoder_forward, params=params))
    out = fwd(prompts, tokenized_prompts)
    out = jax.block_until_ready(out)

    assert out.shape == (B, P), out.shape
    assert bool(jnp.all(jnp.isfinite(out)))
    print("KERNEL_OK")
</pallas_src>

<mosaic_0001>
module attributes {stable_mosaic.version = 11 : i64} {
  func.func @kernel(%arg0: i32, %arg1: memref<1x8x32xf32, #tpu.memory_space<vmem>>, %arg2: memref<8x32xf32, #tpu.memory_space<vmem>>, %arg3: memref<1x32xf32, #tpu.memory_space<vmem>>, %arg4: memref<1x32xf32, #tpu.memory_space<vmem>>, %arg5: memref<32x96xbf16, #tpu.memory_space<vmem>>, %arg6: memref<1x96xf32, #tpu.memory_space<vmem>>, %arg7: memref<32x32xbf16, #tpu.memory_space<vmem>>, %arg8: memref<1x32xf32, #tpu.memory_space<vmem>>, %arg9: memref<1x32xf32, #tpu.memory_space<vmem>>, %arg10: memref<1x32xf32, #tpu.memory_space<vmem>>, %arg11: memref<32x128xbf16, #tpu.memory_space<vmem>>, %arg12: memref<1x128xf32, #tpu.memory_space<vmem>>, %arg13: memref<128x32xbf16, #tpu.memory_space<vmem>>, %arg14: memref<1x32xf32, #tpu.memory_space<vmem>>, %arg15: memref<1x8x32xf32, #tpu.memory_space<vmem>>) attributes {dimension_semantics = [#tpu.dimension_semantics<parallel>], iteration_bounds = array<i64: 2>, scalar_prefetch = 0 : i64, scratch_operands = 0 : i64, tpu.core_type = #tpu.core_type<tc>, window_params = [{transform_indices = @transform_0, window_bounds = array<i64: 1, 8, 32>}, {pipeline_mode = #tpu.pipeline_mode<synchronous>, transform_indices = @transform_1, window_bounds = array<i64: 8, 32>}, {pipeline_mode = #tpu.pipeline_mode<synchronous>, transform_indices = @transform_2, window_bounds = array<i64: 1, 32>}, {pipeline_mode = #tpu.pipeline_mode<synchronous>, transform_indices = @transform_3, window_bounds = array<i64: 1, 32>}, {pipeline_mode = #tpu.pipeline_mode<synchronous>, transform_indices = @transform_4, window_bounds = array<i64: 32, 96>}, {pipeline_mode = #tpu.pipeline_mode<synchronous>, transform_indices = @transform_5, window_bounds = array<i64: 1, 96>}, {pipeline_mode = #tpu.pipeline_mode<synchronous>, transform_indices = @transform_6, window_bounds = array<i64: 32, 32>}, {pipeline_mode = #tpu.pipeline_mode<synchronous>, transform_indices = @transform_7, window_bounds = array<i64: 1, 32>}, {pipeline_mode = #tpu.pipeline_mode<synchronous>, transform_indices = @transform_8, window_bounds = array<i64: 1, 32>}, {pipeline_mode = #tpu.pipeline_mode<synchronous>, transform_indices = @transform_9, window_bounds = array<i64: 1, 32>}, {pipeline_mode = #tpu.pipeline_mode<synchronous>, transform_indices = @transform_10, window_bounds = array<i64: 32, 128>}, {pipeline_mode = #tpu.pipeline_mode<synchronous>, transform_indices = @transform_11, window_bounds = array<i64: 1, 128>}, {pipeline_mode = #tpu.pipeline_mode<synchronous>, transform_indices = @transform_12, window_bounds = array<i64: 128, 32>}, {pipeline_mode = #tpu.pipeline_mode<synchronous>, transform_indices = @transform_13, window_bounds = array<i64: 1, 32>}, {transform_indices = @transform_14, window_bounds = array<i64: 1, 8, 32>}]} {
    %c0 = arith.constant 0 : index
    %c0_0 = arith.constant 0 : index
    %c0_1 = arith.constant 0 : index
    %0 = vector.load %arg1[%c0, %c0_0, %c0_1] : memref<1x8x32xf32, #tpu.memory_space<vmem>>, vector<1x8x32xf32>
    %c0_2 = arith.constant 0 : index
    %c0_3 = arith.constant 0 : index
    %1 = vector.load %arg2[%c0_2, %c0_3] : memref<8x32xf32, #tpu.memory_space<vmem>>, vector<8x32xf32>
    %2 = vector.shape_cast %1 : vector<8x32xf32> to vector<1x8x32xf32>
    %3 = arith.addf %0, %2 : vector<1x8x32xf32>
    %4 = vector.shape_cast %3 : vector<1x8x32xf32> to vector<8x32xf32>
    %c0_4 = arith.constant 0 : index
    %c0_5 = arith.constant 0 : index
    %5 = vector.load %arg3[%c0_4, %c0_5] : memref<1x32xf32, #tpu.memory_space<vmem>>, vector<1x32xf32>
    %c0_6 = arith.constant 0 : index
    %c0_7 = arith.constant 0 : index
    %6 = vector.load %arg4[%c0_6, %c0_7] : memref<1x32xf32, #tpu.memory_space<vmem>>, vector<1x32xf32>
    %cst = arith.constant dense<0.000000e+00> : vector<8xf32>
    %7 = vector.multi_reduction <add>, %4, %cst [1] : vector<8x32xf32> to vector<8xf32>
    %8 = vector.shape_cast %7 : vector<8xf32> to vector<8x1xf32>
    %cst_8 = arith.constant 3.200000e+01 : f32
    %9 = vector.broadcast %cst_8 : f32 to vector<8x1xf32>
    %10 = arith.divf %8, %9 : vector<8x1xf32>
    %11 = vector.broadcast %10 : vector<8x1xf32> to vector<8x32xf32>
    %12 = arith.subf %4, %11 : vector<8x32xf32>
    %13 = arith.mulf %12, %12 : vector<8x32xf32>
    %cst_9 = arith.constant dense<0.000000e+00> : vector<8xf32>
    %14 = vector.multi_reduction <add>, %13, %cst_9 [1] : vector<8x32xf32> to vector<8xf32>
    %15 = vector.shape_cast %14 : vector<8xf32> to vector<8x1xf32>
    %cst_10 = arith.constant 3.200000e+01 : f32
    %16 = vector.broadcast %cst_10 : f32 to vector<8x1xf32>
    %17 = arith.divf %15, %16 : vector<8x1xf32>
    %cst_11 = arith.constant 9.99999974E-6 : f32
    %18 = vector.broadcast %cst_11 : f32 to vector<8x1xf32>
    %19 = arith.addf %17, %18 : vector<8x1xf32>
    %20 = math.rsqrt %19 : vector<8x1xf32>
    %21 = vector.broadcast %20 : vector<8x1xf32> to vector<8x32xf32>
    %22 = arith.mulf %12, %21 : vector<8x32xf32>
    %23 = vector.broadcast %5 : vector<1x32xf32> to vector<8x32xf32>
    %24 = arith.mulf %22, %23 : vector<8x32xf32>
    %25 = vector.broadcast %6 : vector<1x32xf32> to vector<8x32xf32>
    %26 = arith.addf %24, %25 : vector<8x32xf32>
    %27 = arith.truncf %26 : vector<8x32xf32> to vector<8x32xbf16>
    %c0_12 = arith.constant 0 : index
    %c0_13 = arith.constant 0 : index
    %28 = vector.load %arg5[%c0_12, %c0_13] : memref<32x96xbf16, #tpu.memory_space<vmem>>, vector<32x96xbf16>
    %cst_14 = arith.constant dense<0.000000e+00> : vector<8x96xf32>
    %29 = tpu.matmul %27, %28, %cst_14 {dimension_numbers = #tpu.dot_dimension_numbers<[1], [0], [0], [1], [0, 0, 1, 1], [], []>} : vector<8x32xbf16>, vector<32x96xbf16>, vector<8x96xf32> -> vector<8x96xf32>
    %c0_15 = arith.constant 0 : index
    %c0_16 = arith.constant 0 : index
    %30 = vector.load %arg6[%c0_15, %c0_16] : memref<1x96xf32, #tpu.memory_space<vmem>>, vector<1x96xf32>
    %31 = vector.broadcast %30 : vector<1x96xf32> to vector<8x96xf32>
    %32 = arith.addf %29, %31 : vector<8x96xf32>
    %33 = vector.shape_cast %32 : vector<8x96xf32> to vector<1x8x96xf32>
    %34 = tpu.iota {dimensions = array<i32: 0>} : vector<8x8xi32>
    %35 = tpu.iota {dimensions = array<i32: 1>} : vector<8x8xi32>
    %36 = arith.cmpi sgt, %35, %34 : vector<8x8xi32>
    %cst_17 = arith.constant -1.000000e+30 : f32
    %cst_18 = arith.constant 0.000000e+00 : f32
    %37 = vector.broadcast %cst_17 : f32 to vector<8x8xf32>
    %38 = vector.broadcast %cst_18 : f32 to vector<8x8xf32>
    %39 = arith.select %36, %37, %38 : vector<8x8xi1>, vector<8x8xf32>
    %40 = vector.extract_strided_slice %33 {offsets = [0, 0, 0], sizes = [1, 8, 8], strides = [1, 1, 1]} : vector<1x8x96xf32> to vector<1x8x8xf32>
    %41 = vector.shape_cast %40 : vector<1x8x8xf32> to vector<8x8xf32>
    %cst_19 = arith.constant 0.353553385 : f32
    %42 = vector.broadcast %cst_19 : f32 to vector<8x8xf32>
    %43 = arith.mulf %41, %42 : vector<8x8xf32>
    %44 = vector.extract_strided_slice %33 {offsets = [0, 0, 32], sizes = [1, 8, 8], strides = [1, 1, 1]} : vector<1x8x96xf32> to vector<1x8x8xf32>
    %45 = vector.shape_cast %44 : vector<1x8x8xf32> to vector<8x8xf32>
    %46 = vector.extract_strided_slice %33 {offsets = [0, 0, 64], sizes = [1, 8, 8], strides = [1, 1, 1]} : vector<1x8x96xf32> to vector<1x8x8xf32>
    %47 = vector.shape_cast %46 : vector<1x8x8xf32> to vector<8x8xf32>
    %48 = arith.truncf %43 : vector<8x8xf32> to vector<8x8xbf16>
    %49 = arith.truncf %45 : vector<8x8xf32> to vector<8x8xbf16>
    %50 = tpu.transpose %49, [1, 0] : vector<8x8xbf16> -> vector<8x8xbf16>
    %cst_20 = arith.constant dense<0.000000e+00> : vector<8x8xf32>
    %51 = tpu.matmul %48, %50, %cst_20 {dimension_numbers = #tpu.dot_dimension_numbers<[1], [0], [0], [1], [0, 0, 1, 1], [], []>} : vector<8x8xbf16>, vector<8x8xbf16>, vector<8x8xf32> -> vector<8x8xf32>
    %52 = arith.addf %51, %39 : vector<8x8xf32>
    %cst_21 = arith.constant dense<0xFF800000> : vector<8xf32>
    %53 = vector.multi_reduction <maximumf>, %52, %cst_21 [1] : vector<8x8xf32> to vector<8xf32>
    %54 = vector.shape_cast %53 : vector<8xf32> to vector<8x1xf32>
    %55 = vector.broadcast %54 : vector<8x1xf32> to vector<8x8xf32>
    %56 = arith.subf %52, %55 : vector<8x8xf32>
    %57 = math.exp %56 : vector<8x8xf32>
    %cst_22 = arith.constant dense<0.000000e+00> : vector<8xf32>
    %58 = vector.multi_reduction <add>, %57, %cst_22 [1] : vector<8x8xf32> to vector<8xf32>
    %59 = vector.shape_cast %58 : vector<8xf32> to vector<8x1xf32>
    %60 = arith.truncf %57 : vector<8x8xf32> to vector<8x8xbf16>
    %61 = arith.truncf %47 : vector<8x8xf32> to vector<8x8xbf16>
    %cst_23 = arith.constant dense<0.000000e+00> : vector<8x8xf32>
    %62 = tpu.matmul %60, %61, %cst_23 {dimension_numbers = #tpu.dot_dimension_numbers<[1], [0], [0], [1], [0, 0, 1, 1], [], []>} : vector<8x8xbf16>, vector<8x8xbf16>, vector<8x8xf32> -> vector<8x8xf32>
    %63 = tpu.reciprocal %59 {approx = true} : vector<8x1xf32> -> vector<8x1xf32>
    %64 = vector.broadcast %63 : vector<8x1xf32> to vector<8x8xf32>
    %65 = arith.mulf %62, %64 : vector<8x8xf32>
    %66 = vector.extract_strided_slice %33 {offsets = [0, 0, 8], sizes = [1, 8, 8], strides = [1, 1, 1]} : vector<1x8x96xf32> to vector<1x8x8xf32>
    %67 = vector.shape_cast %66 : vector<1x8x8xf32> to vector<8x8xf32>
    %cst_24 = arith.constant 0.353553385 : f32
    %68 = vector.broadcast %cst_24 : f32 to vector<8x8xf32>
    %69 = arith.mulf %67, %68 : vector<8x8xf32>
    %70 = vector.extract_strided_slice %33 {offsets = [0, 0, 40], sizes = [1, 8, 8], strides = [1, 1, 1]} : vector<1x8x96xf32> to vector<1x8x8xf32>
    %71 = vector.shape_cast %70 : vector<1x8x8xf32> to vector<8x8xf32>
    %72 = vector.extract_strided_slice %33 {offsets = [0, 0, 72], sizes = [1, 8, 8], strides = [1, 1, 1]} : vector<1x8x96xf32> to vector<1x8x8xf32>
    %73 = vector.shape_cast %72 : vector<1x8x8xf32> to vector<8x8xf32>
    %74 = arith.truncf %69 : vector<8x8xf32> to vector<8x8xbf16>
    %75 = arith.truncf %71 : vector<8x8xf32> to vector<8x8xbf16>
    %76 = tpu.transpose %75, [1, 0] : vector<8x8xbf16> -> vector<8x8xbf16>
    %cst_25 = arith.constant dense<0.000000e+00> : vector<8x8xf32>
    %77 = tpu.matmul %74, %76, %cst_25 {dimension_numbers = #tpu.dot_dimension_numbers<[1], [0], [0], [1], [0, 0, 1, 1], [], []>} : vector<8x8xbf16>, vector<8x8xbf16>, vector<8x8xf32> -> vector<8x8xf32>
    %78 = arith.addf %77, %39 : vector<8x8xf32>
    %cst_26 = arith.constant dense<0xFF800000> : vector<8xf32>
    %79 = vector.multi_reduction <maximumf>, %78, %cst_26 [1] : vector<8x8xf32> to vector<8xf32>
    %80 = vector.shape_cast %79 : vector<8xf32> to vector<8x1xf32>
    %81 = vector.broadcast %80 : vector<8x1xf32> to vector<8x8xf32>
    %82 = arith.subf %78, %81 : vector<8x8xf32>
    %83 = math.exp %82 : vector<8x8xf32>
    %cst_27 = arith.constant dense<0.000000e+00> : vector<8xf32>
    %84 = vector.multi_reduction <add>, %83, %cst_27 [1] : vector<8x8xf32> to vector<8xf32>
    %85 = vector.shape_cast %84 : vector<8xf32> to vector<8x1xf32>
    %86 = arith.truncf %83 : vector<8x8xf32> to vector<8x8xbf16>
    %87 = arith.truncf %73 : vector<8x8xf32> to vector<8x8xbf16>
    %cst_28 = arith.constant dense<0.000000e+00> : vector<8x8xf32>
    %88 = tpu.matmul %86, %87, %cst_28 {dimension_numbers = #tpu.dot_dimension_numbers<[1], [0], [0], [1], [0, 0, 1, 1], [], []>} : vector<8x8xbf16>, vector<8x8xbf16>, vector<8x8xf32> -> vector<8x8xf32>
    %89 = tpu.reciprocal %85 {approx = true} : vector<8x1xf32> -> vector<8x1xf32>
    %90 = vector.broadcast %89 : vector<8x1xf32> to vector<8x8xf32>
    %91 = arith.mulf %88, %90 : vector<8x8xf32>
    %92 = vector.extract_strided_slice %33 {offsets = [0, 0, 16], sizes = [1, 8, 8], strides = [1, 1, 1]} : vector<1x8x96xf32> to vector<1x8x8xf32>
    %93 = vector.shape_cast %92 : vector<1x8x8xf32> to vector<8x8xf32>
    %cst_29 = arith.constant 0.353553385 : f32
    %94 = vector.broadcast %cst_29 : f32 to vector<8x8xf32>
    %95 = arith.mulf %93, %94 : vector<8x8xf32>
    %96 = vector.extract_strided_slice %33 {offsets = [0, 0, 48], sizes = [1, 8, 8], strides = [1, 1, 1]} : vector<1x8x96xf32> to vector<1x8x8xf32>
    %97 = vector.shape_cast %96 : vector<1x8x8xf32> to vector<8x8xf32>
    %98 = vector.extract_strided_slice %33 {offsets = [0, 0, 80], sizes = [1, 8, 8], strides = [1, 1, 1]} : vector<1x8x96xf32> to vector<1x8x8xf32>
    %99 = vector.shape_cast %98 : vector<1x8x8xf32> to vector<8x8xf32>
    %100 = arith.truncf %95 : vector<8x8xf32> to vector<8x8xbf16>
    %101 = arith.truncf %97 : vector<8x8xf32> to vector<8x8xbf16>
    %102 = tpu.transpose %101, [1, 0] : vector<8x8xbf16> -> vector<8x8xbf16>
    %cst_30 = arith.constant dense<0.000000e+00> : vector<8x8xf32>
    %103 = tpu.matmul %100, %102, %cst_30 {dimension_numbers = #tpu.dot_dimension_numbers<[1], [0], [0], [1], [0, 0, 1, 1], [], []>} : vector<8x8xbf16>, vector<8x8xbf16>, vector<8x8xf32> -> vector<8x8xf32>
    %104 = arith.addf %103, %39 : vector<8x8xf32>
    %cst_31 = arith.constant dense<0xFF800000> : vector<8xf32>
    %105 = vector.multi_reduction <maximumf>, %104, %cst_31 [1] : vector<8x8xf32> to vector<8xf32>
    %106 = vector.shape_cast %105 : vector<8xf32> to vector<8x1xf32>
    %107 = vector.broadcast %106 : vector<8x1xf32> to vector<8x8xf32>
    %108 = arith.subf %104, %107 : vector<8x8xf32>
    %109 = math.exp %108 : vector<8x8xf32>
    %cst_32 = arith.constant dense<0.000000e+00> : vector<8xf32>
    %110 = vector.multi_reduction <add>, %109, %cst_32 [1] : vector<8x8xf32> to vector<8xf32>
    %111 = vector.shape_cast %110 : vector<8xf32> to vector<8x1xf32>
    %112 = arith.truncf %109 : vector<8x8xf32> to vector<8x8xbf16>
    %113 = arith.truncf %99 : vector<8x8xf32> to vector<8x8xbf16>
    %cst_33 = arith.constant dense<0.000000e+00> : vector<8x8xf32>
    %114 = tpu.matmul %112, %113, %cst_33 {dimension_numbers = #tpu.dot_dimension_numbers<[1], [0], [0], [1], [0, 0, 1, 1], [], []>} : vector<8x8xbf16>, vector<8x8xbf16>, vector<8x8xf32> -> vector<8x8xf32>
    %115 = tpu.reciprocal %111 {approx = true} : vector<8x1xf32> -> vector<8x1xf32>
    %116 = vector.broadcast %115 : vector<8x1xf32> to vector<8x8xf32>
    %117 = arith.mulf %114, %116 : vector<8x8xf32>
    %118 = vector.extract_strided_slice %33 {offsets = [0, 0, 24], sizes = [1, 8, 8], strides = [1, 1, 1]} : vector<1x8x96xf32> to vector<1x8x8xf32>
    %119 = vector.shape_cast %118 : vector<1x8x8xf32> to vector<8x8xf32>
    %cst_34 = arith.constant 0.353553385 : f32
    %120 = vector.broadcast %cst_34 : f32 to vector<8x8xf32>
    %121 = arith.mulf %119, %120 : vector<8x8xf32>
    %122 = vector.extract_strided_slice %33 {offsets = [0, 0, 56], sizes = [1, 8, 8], strides = [1, 1, 1]} : vector<1x8x96xf32> to vector<1x8x8xf32>
    %123 = vector.shape_cast %122 : vector<1x8x8xf32> to vector<8x8xf32>
    %124 = vector.extract_strided_slice %33 {offsets = [0, 0, 88], sizes = [1, 8, 8], strides = [1, 1, 1]} : vector<1x8x96xf32> to vector<1x8x8xf32>
    %125 = vector.shape_cast %124 : vector<1x8x8xf32> to vector<8x8xf32>
    %126 = arith.truncf %121 : vector<8x8xf32> to vector<8x8xbf16>
    %127 = arith.truncf %123 : vector<8x8xf32> to vector<8x8xbf16>
    %128 = tpu.transpose %127, [1, 0] : vector<8x8xbf16> -> vector<8x8xbf16>
    %cst_35 = arith.constant dense<0.000000e+00> : vector<8x8xf32>
    %129 = tpu.matmul %126, %128, %cst_35 {dimension_numbers = #tpu.dot_dimension_numbers<[1], [0], [0], [1], [0, 0, 1, 1], [], []>} : vector<8x8xbf16>, vector<8x8xbf16>, vector<8x8xf32> -> vector<8x8xf32>
    %130 = arith.addf %129, %39 : vector<8x8xf32>
    %cst_36 = arith.constant dense<0xFF800000> : vector<8xf32>
    %131 = vector.multi_reduction <maximumf>, %130, %cst_36 [1] : vector<8x8xf32> to vector<8xf32>
    %132 = vector.shape_cast %131 : vector<8xf32> to vector<8x1xf32>
    %133 = vector.broadcast %132 : vector<8x1xf32> to vector<8x8xf32>
    %134 = arith.subf %130, %133 : vector<8x8xf32>
    %135 = math.exp %134 : vector<8x8xf32>
    %cst_37 = arith.constant dense<0.000000e+00> : vector<8xf32>
    %136 = vector.multi_reduction <add>, %135, %cst_37 [1] : vector<8x8xf32> to vector<8xf32>
    %137 = vector.shape_cast %136 : vector<8xf32> to vector<8x1xf32>
    %138 = arith.truncf %135 : vector<8x8xf32> to vector<8x8xbf16>
    %139 = arith.truncf %125 : vector<8x8xf32> to vector<8x8xbf16>
    %cst_38 = arith.constant dense<0.000000e+00> : vector<8x8xf32>
    %140 = tpu.matmul %138, %139, %cst_38 {dimension_numbers = #tpu.dot_dimension_numbers<[1], [0], [0], [1], [0, 0, 1, 1], [], []>} : vector<8x8xbf16>, vector<8x8xbf16>, vector<8x8xf32> -> vector<8x8xf32>
    %141 = tpu.reciprocal %137 {approx = true} : vector<8x1xf32> -> vector<8x1xf32>
    %142 = vector.broadcast %141 : vector<8x1xf32> to vector<8x8xf32>
    %143 = arith.mulf %140, %142 : vector<8x8xf32>
    %144 = tpu.concatenate %65, %91, %117, %143 in 1 : vector<8x8xf32>, vector<8x8xf32>, vector<8x8xf32>, vector<8x8xf32> -> vector<8x32xf32>
    %145 = arith.truncf %144 : vector<8x32xf32> to vector<8x32xbf16>
    %c0_39 = arith.constant 0 : index
    %c0_40 = arith.constant 0 : index
    %146 = vector.load %arg7[%c0_39, %c0_40] : memref<32x32xbf16, #tpu.memory_space<vmem>>, vector<32x32xbf16>
    %cst_41 = arith.constant dense<0.000000e+00> : vector<8x32xf32>
    %147 = tpu.matmul %145, %146, %cst_41 {dimension_numbers = #tpu.dot_dimension_numbers<[1], [0], [0], [1], [0, 0, 1, 1], [], []>} : vector<8x32xbf16>, vector<32x32xbf16>, vector<8x32xf32> -> vector<8x32xf32>
    %c0_42 = arith.constant 0 : index
    %c0_43 = arith.constant 0 : index
    %148 = vector.load %arg8[%c0_42, %c0_43] : memref<1x32xf32, #tpu.memory_space<vmem>>, vector<1x32xf32>
    %149 = vector.broadcast %148 : vector<1x32xf32> to vector<8x32xf32>
    %150 = arith.addf %147, %149 : vector<8x32xf32>
    %151 = arith.addf %4, %150 : vector<8x32xf32>
    %c0_44 = arith.constant 0 : index
    %c0_45 = arith.constant 0 : index
    %152 = vector.load %arg9[%c0_44, %c0_45] : memref<1x32xf32, #tpu.memory_space<vmem>>, vector<1x32xf32>
    %c0_46 = arith.constant 0 : index
    %c0_47 = arith.constant 0 : index
    %153 = vector.load %arg10[%c0_46, %c0_47] : memref<1x32xf32, #tpu.memory_space<vmem>>, vector<1x32xf32>
    %cst_48 = arith.constant dense<0.000000e+00> : vector<8xf32>
    %154 = vector.multi_reduction <add>, %151, %cst_48 [1] : vector<8x32xf32> to vector<8xf32>
    %155 = vector.shape_cast %154 : vector<8xf32> to vector<8x1xf32>
    %cst_49 = arith.constant 3.200000e+01 : f32
    %156 = vector.broadcast %cst_49 : f32 to vector<8x1xf32>
    %157 = arith.divf %155, %156 : vector<8x1xf32>
    %158 = vector.broadcast %157 : vector<8x1xf32> to vector<8x32xf32>
    %159 = arith.subf %151, %158 : vector<8x32xf32>
    %160 = arith.mulf %159, %159 : vector<8x32xf32>
    %cst_50 = arith.constant dense<0.000000e+00> : vector<8xf32>
    %161 = vector.multi_reduction <add>, %160, %cst_50 [1] : vector<8x32xf32> to vector<8xf32>
    %162 = vector.shape_cast %161 : vector<8xf32> to vector<8x1xf32>
    %cst_51 = arith.constant 3.200000e+01 : f32
    %163 = vector.broadcast %cst_51 : f32 to vector<8x1xf32>
    %164 = arith.divf %162, %163 : vector<8x1xf32>
    %cst_52 = arith.constant 9.99999974E-6 : f32
    %165 = vector.broadcast %cst_52 : f32 to vector<8x1xf32>
    %166 = arith.addf %164, %165 : vector<8x1xf32>
    %167 = math.rsqrt %166 : vector<8x1xf32>
    %168 = vector.broadcast %167 : vector<8x1xf32> to vector<8x32xf32>
    %169 = arith.mulf %159, %168 : vector<8x32xf32>
    %170 = vector.broadcast %152 : vector<1x32xf32> to vector<8x32xf32>
    %171 = arith.mulf %169, %170 : vector<8x32xf32>
    %172 = vector.broadcast %153 : vector<1x32xf32> to vector<8x32xf32>
    %173 = arith.addf %171, %172 : vector<8x32xf32>
    %174 = arith.truncf %173 : vector<8x32xf32> to vector<8x32xbf16>
    %c0_53 = arith.constant 0 : index
    %c0_54 = arith.constant 0 : index
    %175 = vector.load %arg11[%c0_53, %c0_54] : memref<32x128xbf16, #tpu.memory_space<vmem>>, vector<32x128xbf16>
    %cst_55 = arith.constant dense<0.000000e+00> : vector<8x128xf32>
    %176 = tpu.matmul %174, %175, %cst_55 {dimension_numbers = #tpu.dot_dimension_numbers<[1], [0], [0], [1], [0, 0, 1, 1], [], []>} : vector<8x32xbf16>, vector<32x128xbf16>, vector<8x128xf32> -> vector<8x128xf32>
    %c0_56 = arith.constant 0 : index
    %c0_57 = arith.constant 0 : index
    %177 = vector.load %arg12[%c0_56, %c0_57] : memref<1x128xf32, #tpu.memory_space<vmem>>, vector<1x128xf32>
    %178 = vector.broadcast %177 : vector<1x128xf32> to vector<8x128xf32>
    %179 = arith.addf %176, %178 : vector<8x128xf32>
    %cst_58 = arith.constant 1.702000e+00 : f32
    %180 = vector.broadcast %cst_58 : f32 to vector<8x128xf32>
    %181 = arith.mulf %180, %179 : vector<8x128xf32>
    %182 = arith.negf %181 : vector<8x128xf32>
    %183 = math.exp %182 : vector<8x128xf32>
    %cst_59 = arith.constant 1.000000e+00 : f32
    %184 = vector.broadcast %cst_59 : f32 to vector<8x128xf32>
    %185 = arith.addf %184, %183 : vector<8x128xf32>
    %186 = arith.divf %184, %185 : vector<8x128xf32>
    %187 = arith.mulf %179, %186 : vector<8x128xf32>
    %188 = arith.truncf %187 : vector<8x128xf32> to vector<8x128xbf16>
    %c0_60 = arith.constant 0 : index
    %c0_61 = arith.constant 0 : index
    %189 = vector.load %arg13[%c0_60, %c0_61] : memref<128x32xbf16, #tpu.memory_space<vmem>>, vector<128x32xbf16>
    %cst_62 = arith.constant dense<0.000000e+00> : vector<8x32xf32>
    %190 = tpu.matmul %188, %189, %cst_62 {dimension_numbers = #tpu.dot_dimension_numbers<[1], [0], [0], [1], [0, 0, 1, 1], [], []>} : vector<8x128xbf16>, vector<128x32xbf16>, vector<8x32xf32> -> vector<8x32xf32>
    %c0_63 = arith.constant 0 : index
    %c0_64 = arith.constant 0 : index
    %191 = vector.load %arg14[%c0_63, %c0_64] : memref<1x32xf32, #tpu.memory_space<vmem>>, vector<1x32xf32>
    %192 = vector.broadcast %191 : vector<1x32xf32> to vector<8x32xf32>
    %193 = arith.addf %190, %192 : vector<8x32xf32>
    %194 = arith.addf %151, %193 : vector<8x32xf32>
    %195 = vector.shape_cast %194 : vector<8x32xf32> to vector<1x8x32xf32>
    %c0_65 = arith.constant 0 : index
    %c0_66 = arith.constant 0 : index
    %c0_67 = arith.constant 0 : index
    %196 = vector.load %arg15[%c0_65, %c0_66, %c0_67] : memref<1x8x32xf32, #tpu.memory_space<vmem>>, vector<1x8x32xf32>
    tpu.vector_store %arg15[%c0_65, %c0_66, %c0_67], %195 {strides = array<i32>} : memref<1x8x32xf32, #tpu.memory_space<vmem>>, vector<1x8x32xf32>,
    return
  }
  func.func @transform_0(%arg0: i32) -> (i32, i32, i32) {
    %c0_i32 = arith.constant 0 : i32
    %c0_i32_0 = arith.constant 0 : i32
    %c0_i32_1 = arith.constant 0 : i32
    return %arg0, %c0_i32, %c0_i32_0 : i32, i32, i32
  }
  func.func @transform_1(%arg0: i32) -> (i32, i32) {
    %c0_i32 = arith.constant 0 : i32
    %c0_i32_0 = arith.constant 0 : i32
    %c0_i32_1 = arith.constant 0 : i32
    return %c0_i32, %c0_i32_0 : i32, i32
  }
  func.func @transform_2(%arg0: i32) -> (i32, i32) {
    %c0_i32 = arith.constant 0 : i32
    %c0_i32_0 = arith.constant 0 : i32
    %c0_i32_1 = arith.constant 0 : i32
    return %c0_i32, %c0_i32_0 : i32, i32
  }
  func.func @transform_3(%arg0: i32) -> (i32, i32) {
    %c0_i32 = arith.constant 0 : i32
    %c0_i32_0 = arith.constant 0 : i32
    %c0_i32_1 = arith.constant 0 : i32
    return %c0_i32, %c0_i32_0 : i32, i32
  }
  func.func @transform_4(%arg0: i32) -> (i32, i32) {
    %c0_i32 = arith.constant 0 : i32
    %c0_i32_0 = arith.constant 0 : i32
    %c0_i32_1 = arith.constant 0 : i32
    return %c0_i32, %c0_i32_0 : i32, i32
  }
  func.func @transform_5(%arg0: i32) -> (i32, i32) {
    %c0_i32 = arith.constant 0 : i32
    %c0_i32_0 = arith.constant 0 : i32
    %c0_i32_1 = arith.constant 0 : i32
    return %c0_i32, %c0_i32_0 : i32, i32
  }
  func.func @transform_6(%arg0: i32) -> (i32, i32) {
    %c0_i32 = arith.constant 0 : i32
    %c0_i32_0 = arith.constant 0 : i32
    %c0_i32_1 = arith.constant 0 : i32
    return %c0_i32, %c0_i32_0 : i32, i32
  }
  func.func @transform_7(%arg0: i32) -> (i32, i32) {
    %c0_i32 = arith.constant 0 : i32
    %c0_i32_0 = arith.constant 0 : i32
    %c0_i32_1 = arith.constant 0 : i32
    return %c0_i32, %c0_i32_0 : i32, i32
  }
  func.func @transform_8(%arg0: i32) -> (i32, i32) {
    %c0_i32 = arith.constant 0 : i32
    %c0_i32_0 = arith.constant 0 : i32
    %c0_i32_1 = arith.constant 0 : i32
    return %c0_i32, %c0_i32_0 : i32, i32
  }
  func.func @transform_9(%arg0: i32) -> (i32, i32) {
    %c0_i32 = arith.constant 0 : i32
    %c0_i32_0 = arith.constant 0 : i32
    %c0_i32_1 = arith.constant 0 : i32
    return %c0_i32, %c0_i32_0 : i32, i32
  }
  func.func @transform_10(%arg0: i32) -> (i32, i32) {
    %c0_i32 = arith.constant 0 : i32
    %c0_i32_0 = arith.constant 0 : i32
    %c0_i32_1 = arith.constant 0 : i32
    return %c0_i32, %c0_i32_0 : i32, i32
  }
  func.func @transform_11(%arg0: i32) -> (i32, i32) {
    %c0_i32 = arith.constant 0 : i32
    %c0_i32_0 = arith.constant 0 : i32
    %c0_i32_1 = arith.constant 0 : i32
    return %c0_i32, %c0_i32_0 : i32, i32
  }
  func.func @transform_12(%arg0: i32) -> (i32, i32) {
    %c0_i32 = arith.constant 0 : i32
    %c0_i32_0 = arith.constant 0 : i32
    %c0_i32_1 = arith.constant 0 : i32
    return %c0_i32, %c0_i32_0 : i32, i32
  }
  func.func @transform_13(%arg0: i32) -> (i32, i32) {
    %c0_i32 = arith.constant 0 : i32
    %c0_i32_0 = arith.constant 0 : i32
    %c0_i32_1 = arith.constant 0 : i32
    return %c0_i32, %c0_i32_0 : i32, i32
  }
  func.func @transform_14(%arg0: i32) -> (i32, i32, i32) {
    %c0_i32 = arith.constant 0 : i32
    %c0_i32_0 = arith.constant 0 : i32
    %c0_i32_1 = arith.constant 0 : i32
    return %arg0, %c0_i32, %c0_i32_0 : i32, i32, i32
  }
}

module attributes {stable_mosaic.version = 11 : i64} {
  func.func @kernel(%arg0: i32, %arg1: memref<1x8x32xf32, #tpu.memory_space<vmem>>, %arg2: memref<1x32xf32, #tpu.memory_space<vmem>>, %arg3: memref<1x32xf32, #tpu.memory_space<vmem>>, %arg4: memref<32x96xbf16, #tpu.memory_space<vmem>>, %arg5: memref<1x96xf32, #tpu.memory_space<vmem>>, %arg6: memref<32x32xbf16, #tpu.memory_space<vmem>>, %arg7: memref<1x32xf32, #tpu.memory_space<vmem>>, %arg8: memref<1x32xf32, #tpu.memory_space<vmem>>, %arg9: memref<1x32xf32, #tpu.memory_space<vmem>>, %arg10: memref<32x128xbf16, #tpu.memory_space<vmem>>, %arg11: memref<1x128xf32, #tpu.memory_space<vmem>>, %arg12: memref<128x32xbf16, #tpu.memory_space<vmem>>, %arg13: memref<1x32xf32, #tpu.memory_space<vmem>>, %arg14: memref<1x8x32xf32, #tpu.memory_space<vmem>>) attributes {dimension_semantics = [#tpu.dimension_semantics<parallel>], iteration_bounds = array<i64: 2>, scalar_prefetch = 0 : i64, scratch_operands = 0 : i64, tpu.core_type = #tpu.core_type<tc>, window_params = [{transform_indices = @transform_0, window_bounds = array<i64: 1, 8, 32>}, {pipeline_mode = #tpu.pipeline_mode<synchronous>, transform_indices = @transform_1, window_bounds = array<i64: 1, 32>}, {pipeline_mode = #tpu.pipeline_mode<synchronous>, transform_indices = @transform_2, window_bounds = array<i64: 1, 32>}, {pipeline_mode = #tpu.pipeline_mode<synchronous>, transform_indices = @transform_3, window_bounds = array<i64: 32, 96>}, {pipeline_mode = #tpu.pipeline_mode<synchronous>, transform_indices = @transform_4, window_bounds = array<i64: 1, 96>}, {pipeline_mode = #tpu.pipeline_mode<synchronous>, transform_indices = @transform_5, window_bounds = array<i64: 32, 32>}, {pipeline_mode = #tpu.pipeline_mode<synchronous>, transform_indices = @transform_6, window_bounds = array<i64: 1, 32>}, {pipeline_mode = #tpu.pipeline_mode<synchronous>, transform_indices = @transform_7, window_bounds = array<i64: 1, 32>}, {pipeline_mode = #tpu.pipeline_mode<synchronous>, transform_indices = @transform_8, window_bounds = array<i64: 1, 32>}, {pipeline_mode = #tpu.pipeline_mode<synchronous>, transform_indices = @transform_9, window_bounds = array<i64: 32, 128>}, {pipeline_mode = #tpu.pipeline_mode<synchronous>, transform_indices = @transform_10, window_bounds = array<i64: 1, 128>}, {pipeline_mode = #tpu.pipeline_mode<synchronous>, transform_indices = @transform_11, window_bounds = array<i64: 128, 32>}, {pipeline_mode = #tpu.pipeline_mode<synchronous>, transform_indices = @transform_12, window_bounds = array<i64: 1, 32>}, {transform_indices = @transform_13, window_bounds = array<i64: 1, 8, 32>}]} {
    %c0 = arith.constant 0 : index
    %c0_0 = arith.constant 0 : index
    %c0_1 = arith.constant 0 : index
    %0 = vector.load %arg1[%c0, %c0_0, %c0_1] : memref<1x8x32xf32, #tpu.memory_space<vmem>>, vector<1x8x32xf32>
    %1 = vector.shape_cast %0 : vector<1x8x32xf32> to vector<8x32xf32>
    %c0_2 = arith.constant 0 : index
    %c0_3 = arith.constant 0 : index
    %2 = vector.load %arg2[%c0_2, %c0_3] : memref<1x32xf32, #tpu.memory_space<vmem>>, vector<1x32xf32>
    %c0_4 = arith.constant 0 : index
    %c0_5 = arith.constant 0 : index
    %3 = vector.load %arg3[%c0_4, %c0_5] : memref<1x32xf32, #tpu.memory_space<vmem>>, vector<1x32xf32>
    %cst = arith.constant dense<0.000000e+00> : vector<8xf32>
    %4 = vector.multi_reduction <add>, %1, %cst [1] : vector<8x32xf32> to vector<8xf32>
    %5 = vector.shape_cast %4 : vector<8xf32> to vector<8x1xf32>
    %cst_6 = arith.constant 3.200000e+01 : f32
    %6 = vector.broadcast %cst_6 : f32 to vector<8x1xf32>
    %7 = arith.divf %5, %6 : vector<8x1xf32>
    %8 = vector.broadcast %7 : vector<8x1xf32> to vector<8x32xf32>
    %9 = arith.subf %1, %8 : vector<8x32xf32>
    %10 = arith.mulf %9, %9 : vector<8x32xf32>
    %cst_7 = arith.constant dense<0.000000e+00> : vector<8xf32>
    %11 = vector.multi_reduction <add>, %10, %cst_7 [1] : vector<8x32xf32> to vector<8xf32>
    %12 = vector.shape_cast %11 : vector<8xf32> to vector<8x1xf32>
    %cst_8 = arith.constant 3.200000e+01 : f32
    %13 = vector.broadcast %cst_8 : f32 to vector<8x1xf32>
    %14 = arith.divf %12, %13 : vector<8x1xf32>
    %cst_9 = arith.constant 9.99999974E-6 : f32
    %15 = vector.broadcast %cst_9 : f32 to vector<8x1xf32>
    %16 = arith.addf %14, %15 : vector<8x1xf32>
    %17 = math.rsqrt %16 : vector<8x1xf32>
    %18 = vector.broadcast %17 : vector<8x1xf32> to vector<8x32xf32>
    %19 = arith.mulf %9, %18 : vector<8x32xf32>
    %20 = vector.broadcast %2 : vector<1x32xf32> to vector<8x32xf32>
    %21 = arith.mulf %19, %20 : vector<8x32xf32>
    %22 = vector.broadcast %3 : vector<1x32xf32> to vector<8x32xf32>
    %23 = arith.addf %21, %22 : vector<8x32xf32>
    %24 = arith.truncf %23 : vector<8x32xf32> to vector<8x32xbf16>
    %c0_10 = arith.constant 0 : index
    %c0_11 = arith.constant 0 : index
    %25 = vector.load %arg4[%c0_10, %c0_11] : memref<32x96xbf16, #tpu.memory_space<vmem>>, vector<32x96xbf16>
    %cst_12 = arith.constant dense<0.000000e+00> : vector<8x96xf32>
    %26 = tpu.matmul %24, %25, %cst_12 {dimension_numbers = #tpu.dot_dimension_numbers<[1], [0], [0], [1], [0, 0, 1, 1], [], []>} : vector<8x32xbf16>, vector<32x96xbf16>, vector<8x96xf32> -> vector<8x96xf32>
    %c0_13 = arith.constant 0 : index
    %c0_14 = arith.constant 0 : index
    %27 = vector.load %arg5[%c0_13, %c0_14] : memref<1x96xf32, #tpu.memory_space<vmem>>, vector<1x96xf32>
    %28 = vector.broadcast %27 : vector<1x96xf32> to vector<8x96xf32>
    %29 = arith.addf %26, %28 : vector<8x96xf32>
    %30 = vector.shape_cast %29 : vector<8x96xf32> to vector<1x8x96xf32>
    %31 = tpu.iota {dimensions = array<i32: 0>} : vector<8x8xi32>
    %32 = tpu.iota {dimensions = array<i32: 1>} : vector<8x8xi32>
    %33 = arith.cmpi sgt, %32, %31 : vector<8x8xi32>
    %cst_15 = arith.constant -1.000000e+30 : f32
    %cst_16 = arith.constant 0.000000e+00 : f32
    %34 = vector.broadcast %cst_15 : f32 to vector<8x8xf32>
    %35 = vector.broadcast %cst_16 : f32 to vector<8x8xf32>
    %36 = arith.select %33, %34, %35 : vector<8x8xi1>, vector<8x8xf32>
    %37 = vector.extract_strided_slice %30 {offsets = [0, 0, 0], sizes = [1, 8, 8], strides = [1, 1, 1]} : vector<1x8x96xf32> to vector<1x8x8xf32>
    %38 = vector.shape_cast %37 : vector<1x8x8xf32> to vector<8x8xf32>
    %cst_17 = arith.constant 0.353553385 : f32
    %39 = vector.broadcast %cst_17 : f32 to vector<8x8xf32>
    %40 = arith.mulf %38, %39 : vector<8x8xf32>
    %41 = vector.extract_strided_slice %30 {offsets = [0, 0, 32], sizes = [1, 8, 8], strides = [1, 1, 1]} : vector<1x8x96xf32> to vector<1x8x8xf32>
    %42 = vector.shape_cast %41 : vector<1x8x8xf32> to vector<8x8xf32>
    %43 = vector.extract_strided_slice %30 {offsets = [0, 0, 64], sizes = [1, 8, 8], strides = [1, 1, 1]} : vector<1x8x96xf32> to vector<1x8x8xf32>
    %44 = vector.shape_cast %43 : vector<1x8x8xf32> to vector<8x8xf32>
    %45 = arith.truncf %40 : vector<8x8xf32> to vector<8x8xbf16>
    %46 = arith.truncf %42 : vector<8x8xf32> to vector<8x8xbf16>
    %47 = tpu.transpose %46, [1, 0] : vector<8x8xbf16> -> vector<8x8xbf16>
    %cst_18 = arith.constant dense<0.000000e+00> : vector<8x8xf32>
    %48 = tpu.matmul %45, %47, %cst_18 {dimension_numbers = #tpu.dot_dimension_numbers<[1], [0], [0], [1], [0, 0, 1, 1], [], []>} : vector<8x8xbf16>, vector<8x8xbf16>, vector<8x8xf32> -> vector<8x8xf32>
    %49 = arith.addf %48, %36 : vector<8x8xf32>
    %cst_19 = arith.constant dense<0xFF800000> : vector<8xf32>
    %50 = vector.multi_reduction <maximumf>, %49, %cst_19 [1] : vector<8x8xf32> to vector<8xf32>
    %51 = vector.shape_cast %50 : vector<8xf32> to vector<8x1xf32>
    %52 = vector.broadcast %51 : vector<8x1xf32> to vector<8x8xf32>
    %53 = arith.subf %49, %52 : vector<8x8xf32>
    %54 = math.exp %53 : vector<8x8xf32>
    %cst_20 = arith.constant dense<0.000000e+00> : vector<8xf32>
    %55 = vector.multi_reduction <add>, %54, %cst_20 [1] : vector<8x8xf32> to vector<8xf32>
    %56 = vector.shape_cast %55 : vector<8xf32> to vector<8x1xf32>
    %57 = arith.truncf %54 : vector<8x8xf32> to vector<8x8xbf16>
    %58 = arith.truncf %44 : vector<8x8xf32> to vector<8x8xbf16>
    %cst_21 = arith.constant dense<0.000000e+00> : vector<8x8xf32>
    %59 = tpu.matmul %57, %58, %cst_21 {dimension_numbers = #tpu.dot_dimension_numbers<[1], [0], [0], [1], [0, 0, 1, 1], [], []>} : vector<8x8xbf16>, vector<8x8xbf16>, vector<8x8xf32> -> vector<8x8xf32>
    %60 = tpu.reciprocal %56 {approx = true} : vector<8x1xf32> -> vector<8x1xf32>
    %61 = vector.broadcast %60 : vector<8x1xf32> to vector<8x8xf32>
    %62 = arith.mulf %59, %61 : vector<8x8xf32>
    %63 = vector.extract_strided_slice %30 {offsets = [0, 0, 8], sizes = [1, 8, 8], strides = [1, 1, 1]} : vector<1x8x96xf32> to vector<1x8x8xf32>
    %64 = vector.shape_cast %63 : vector<1x8x8xf32> to vector<8x8xf32>
    %cst_22 = arith.constant 0.353553385 : f32
    %65 = vector.broadcast %cst_22 : f32 to vector<8x8xf32>
    %66 = arith.mulf %64, %65 : vector<8x8xf32>
    %67 = vector.extract_strided_slice %30 {offsets = [0, 0, 40], sizes = [1, 8, 8], strides = [1, 1, 1]} : vector<1x8x96xf32> to vector<1x8x8xf32>
    %68 = vector.shape_cast %67 : vector<1x8x8xf32> to vector<8x8xf32>
    %69 = vector.extract_strided_slice %30 {offsets = [0, 0, 72], sizes = [1, 8, 8], strides = [1, 1, 1]} : vector<1x8x96xf32> to vector<1x8x8xf32>
    %70 = vector.shape_cast %69 : vector<1x8x8xf32> to vector<8x8xf32>
    %71 = arith.truncf %66 : vector<8x8xf32> to vector<8x8xbf16>
    %72 = arith.truncf %68 : vector<8x8xf32> to vector<8x8xbf16>
    %73 = tpu.transpose %72, [1, 0] : vector<8x8xbf16> -> vector<8x8xbf16>
    %cst_23 = arith.constant dense<0.000000e+00> : vector<8x8xf32>
    %74 = tpu.matmul %71, %73, %cst_23 {dimension_numbers = #tpu.dot_dimension_numbers<[1], [0], [0], [1], [0, 0, 1, 1], [], []>} : vector<8x8xbf16>, vector<8x8xbf16>, vector<8x8xf32> -> vector<8x8xf32>
    %75 = arith.addf %74, %36 : vector<8x8xf32>
    %cst_24 = arith.constant dense<0xFF800000> : vector<8xf32>
    %76 = vector.multi_reduction <maximumf>, %75, %cst_24 [1] : vector<8x8xf32> to vector<8xf32>
    %77 = vector.shape_cast %76 : vector<8xf32> to vector<8x1xf32>
    %78 = vector.broadcast %77 : vector<8x1xf32> to vector<8x8xf32>
    %79 = arith.subf %75, %78 : vector<8x8xf32>
    %80 = math.exp %79 : vector<8x8xf32>
    %cst_25 = arith.constant dense<0.000000e+00> : vector<8xf32>
    %81 = vector.multi_reduction <add>, %80, %cst_25 [1] : vector<8x8xf32> to vector<8xf32>
    %82 = vector.shape_cast %81 : vector<8xf32> to vector<8x1xf32>
    %83 = arith.truncf %80 : vector<8x8xf32> to vector<8x8xbf16>
    %84 = arith.truncf %70 : vector<8x8xf32> to vector<8x8xbf16>
    %cst_26 = arith.constant dense<0.000000e+00> : vector<8x8xf32>
    %85 = tpu.matmul %83, %84, %cst_26 {dimension_numbers = #tpu.dot_dimension_numbers<[1], [0], [0], [1], [0, 0, 1, 1], [], []>} : vector<8x8xbf16>, vector<8x8xbf16>, vector<8x8xf32> -> vector<8x8xf32>
    %86 = tpu.reciprocal %82 {approx = true} : vector<8x1xf32> -> vector<8x1xf32>
    %87 = vector.broadcast %86 : vector<8x1xf32> to vector<8x8xf32>
    %88 = arith.mulf %85, %87 : vector<8x8xf32>
    %89 = vector.extract_strided_slice %30 {offsets = [0, 0, 16], sizes = [1, 8, 8], strides = [1, 1, 1]} : vector<1x8x96xf32> to vector<1x8x8xf32>
    %90 = vector.shape_cast %89 : vector<1x8x8xf32> to vector<8x8xf32>
    %cst_27 = arith.constant 0.353553385 : f32
    %91 = vector.broadcast %cst_27 : f32 to vector<8x8xf32>
    %92 = arith.mulf %90, %91 : vector<8x8xf32>
    %93 = vector.extract_strided_slice %30 {offsets = [0, 0, 48], sizes = [1, 8, 8], strides = [1, 1, 1]} : vector<1x8x96xf32> to vector<1x8x8xf32>
    %94 = vector.shape_cast %93 : vector<1x8x8xf32> to vector<8x8xf32>
    %95 = vector.extract_strided_slice %30 {offsets = [0, 0, 80], sizes = [1, 8, 8], strides = [1, 1, 1]} : vector<1x8x96xf32> to vector<1x8x8xf32>
    %96 = vector.shape_cast %95 : vector<1x8x8xf32> to vector<8x8xf32>
    %97 = arith.truncf %92 : vector<8x8xf32> to vector<8x8xbf16>
    %98 = arith.truncf %94 : vector<8x8xf32> to vector<8x8xbf16>
    %99 = tpu.transpose %98, [1, 0] : vector<8x8xbf16> -> vector<8x8xbf16>
    %cst_28 = arith.constant dense<0.000000e+00> : vector<8x8xf32>
    %100 = tpu.matmul %97, %99, %cst_28 {dimension_numbers = #tpu.dot_dimension_numbers<[1], [0], [0], [1], [0, 0, 1, 1], [], []>} : vector<8x8xbf16>, vector<8x8xbf16>, vector<8x8xf32> -> vector<8x8xf32>
    %101 = arith.addf %100, %36 : vector<8x8xf32>
    %cst_29 = arith.constant dense<0xFF800000> : vector<8xf32>
    %102 = vector.multi_reduction <maximumf>, %101, %cst_29 [1] : vector<8x8xf32> to vector<8xf32>
    %103 = vector.shape_cast %102 : vector<8xf32> to vector<8x1xf32>
    %104 = vector.broadcast %103 : vector<8x1xf32> to vector<8x8xf32>
    %105 = arith.subf %101, %104 : vector<8x8xf32>
    %106 = math.exp %105 : vector<8x8xf32>
    %cst_30 = arith.constant dense<0.000000e+00> : vector<8xf32>
    %107 = vector.multi_reduction <add>, %106, %cst_30 [1] : vector<8x8xf32> to vector<8xf32>
    %108 = vector.shape_cast %107 : vector<8xf32> to vector<8x1xf32>
    %109 = arith.truncf %106 : vector<8x8xf32> to vector<8x8xbf16>
    %110 = arith.truncf %96 : vector<8x8xf32> to vector<8x8xbf16>
    %cst_31 = arith.constant dense<0.000000e+00> : vector<8x8xf32>
    %111 = tpu.matmul %109, %110, %cst_31 {dimension_numbers = #tpu.dot_dimension_numbers<[1], [0], [0], [1], [0, 0, 1, 1], [], []>} : vector<8x8xbf16>, vector<8x8xbf16>, vector<8x8xf32> -> vector<8x8xf32>
    %112 = tpu.reciprocal %108 {approx = true} : vector<8x1xf32> -> vector<8x1xf32>
    %113 = vector.broadcast %112 : vector<8x1xf32> to vector<8x8xf32>
    %114 = arith.mulf %111, %113 : vector<8x8xf32>
    %115 = vector.extract_strided_slice %30 {offsets = [0, 0, 24], sizes = [1, 8, 8], strides = [1, 1, 1]} : vector<1x8x96xf32> to vector<1x8x8xf32>
    %116 = vector.shape_cast %115 : vector<1x8x8xf32> to vector<8x8xf32>
    %cst_32 = arith.constant 0.353553385 : f32
    %117 = vector.broadcast %cst_32 : f32 to vector<8x8xf32>
    %118 = arith.mulf %116, %117 : vector<8x8xf32>
    %119 = vector.extract_strided_slice %30 {offsets = [0, 0, 56], sizes = [1, 8, 8], strides = [1, 1, 1]} : vector<1x8x96xf32> to vector<1x8x8xf32>
    %120 = vector.shape_cast %119 : vector<1x8x8xf32> to vector<8x8xf32>
    %121 = vector.extract_strided_slice %30 {offsets = [0, 0, 88], sizes = [1, 8, 8], strides = [1, 1, 1]} : vector<1x8x96xf32> to vector<1x8x8xf32>
    %122 = vector.shape_cast %121 : vector<1x8x8xf32> to vector<8x8xf32>
    %123 = arith.truncf %118 : vector<8x8xf32> to vector<8x8xbf16>
    %124 = arith.truncf %120 : vector<8x8xf32> to vector<8x8xbf16>
    %125 = tpu.transpose %124, [1, 0] : vector<8x8xbf16> -> vector<8x8xbf16>
    %cst_33 = arith.constant dense<0.000000e+00> : vector<8x8xf32>
    %126 = tpu.matmul %123, %125, %cst_33 {dimension_numbers = #tpu.dot_dimension_numbers<[1], [0], [0], [1], [0, 0, 1, 1], [], []>} : vector<8x8xbf16>, vector<8x8xbf16>, vector<8x8xf32> -> vector<8x8xf32>
    %127 = arith.addf %126, %36 : vector<8x8xf32>
    %cst_34 = arith.constant dense<0xFF800000> : vector<8xf32>
    %128 = vector.multi_reduction <maximumf>, %127, %cst_34 [1] : vector<8x8xf32> to vector<8xf32>
    %129 = vector.shape_cast %128 : vector<8xf32> to vector<8x1xf32>
    %130 = vector.broadcast %129 : vector<8x1xf32> to vector<8x8xf32>
    %131 = arith.subf %127, %130 : vector<8x8xf32>
    %132 = math.exp %131 : vector<8x8xf32>
    %cst_35 = arith.constant dense<0.000000e+00> : vector<8xf32>
    %133 = vector.multi_reduction <add>, %132, %cst_35 [1] : vector<8x8xf32> to vector<8xf32>
    %134 = vector.shape_cast %133 : vector<8xf32> to vector<8x1xf32>
    %135 = arith.truncf %132 : vector<8x8xf32> to vector<8x8xbf16>
    %136 = arith.truncf %122 : vector<8x8xf32> to vector<8x8xbf16>
    %cst_36 = arith.constant dense<0.000000e+00> : vector<8x8xf32>
    %137 = tpu.matmul %135, %136, %cst_36 {dimension_numbers = #tpu.dot_dimension_numbers<[1], [0], [0], [1], [0, 0, 1, 1], [], []>} : vector<8x8xbf16>, vector<8x8xbf16>, vector<8x8xf32> -> vector<8x8xf32>
    %138 = tpu.reciprocal %134 {approx = true} : vector<8x1xf32> -> vector<8x1xf32>
    %139 = vector.broadcast %138 : vector<8x1xf32> to vector<8x8xf32>
    %140 = arith.mulf %137, %139 : vector<8x8xf32>
    %141 = tpu.concatenate %62, %88, %114, %140 in 1 : vector<8x8xf32>, vector<8x8xf32>, vector<8x8xf32>, vector<8x8xf32> -> vector<8x32xf32>
    %142 = arith.truncf %141 : vector<8x32xf32> to vector<8x32xbf16>
    %c0_37 = arith.constant 0 : index
    %c0_38 = arith.constant 0 : index
    %143 = vector.load %arg6[%c0_37, %c0_38] : memref<32x32xbf16, #tpu.memory_space<vmem>>, vector<32x32xbf16>
    %cst_39 = arith.constant dense<0.000000e+00> : vector<8x32xf32>
    %144 = tpu.matmul %142, %143, %cst_39 {dimension_numbers = #tpu.dot_dimension_numbers<[1], [0], [0], [1], [0, 0, 1, 1], [], []>} : vector<8x32xbf16>, vector<32x32xbf16>, vector<8x32xf32> -> vector<8x32xf32>
    %c0_40 = arith.constant 0 : index
    %c0_41 = arith.constant 0 : index
    %145 = vector.load %arg7[%c0_40, %c0_41] : memref<1x32xf32, #tpu.memory_space<vmem>>, vector<1x32xf32>
    %146 = vector.broadcast %145 : vector<1x32xf32> to vector<8x32xf32>
    %147 = arith.addf %144, %146 : vector<8x32xf32>
    %148 = arith.addf %1, %147 : vector<8x32xf32>
    %c0_42 = arith.constant 0 : index
    %c0_43 = arith.constant 0 : index
    %149 = vector.load %arg8[%c0_42, %c0_43] : memref<1x32xf32, #tpu.memory_space<vmem>>, vector<1x32xf32>
    %c0_44 = arith.constant 0 : index
    %c0_45 = arith.constant 0 : index
    %150 = vector.load %arg9[%c0_44, %c0_45] : memref<1x32xf32, #tpu.memory_space<vmem>>, vector<1x32xf32>
    %cst_46 = arith.constant dense<0.000000e+00> : vector<8xf32>
    %151 = vector.multi_reduction <add>, %148, %cst_46 [1] : vector<8x32xf32> to vector<8xf32>
    %152 = vector.shape_cast %151 : vector<8xf32> to vector<8x1xf32>
    %cst_47 = arith.constant 3.200000e+01 : f32
    %153 = vector.broadcast %cst_47 : f32 to vector<8x1xf32>
    %154 = arith.divf %152, %153 : vector<8x1xf32>
    %155 = vector.broadcast %154 : vector<8x1xf32> to vector<8x32xf32>
    %156 = arith.subf %148, %155 : vector<8x32xf32>
    %157 = arith.mulf %156, %156 : vector<8x32xf32>
    %cst_48 = arith.constant dense<0.000000e+00> : vector<8xf32>
    %158 = vector.multi_reduction <add>, %157, %cst_48 [1] : vector<8x32xf32> to vector<8xf32>
    %159 = vector.shape_cast %158 : vector<8xf32> to vector<8x1xf32>
    %cst_49 = arith.constant 3.200000e+01 : f32
    %160 = vector.broadcast %cst_49 : f32 to vector<8x1xf32>
    %161 = arith.divf %159, %160 : vector<8x1xf32>
    %cst_50 = arith.constant 9.99999974E-6 : f32
    %162 = vector.broadcast %cst_50 : f32 to vector<8x1xf32>
    %163 = arith.addf %161, %162 : vector<8x1xf32>
    %164 = math.rsqrt %163 : vector<8x1xf32>
    %165 = vector.broadcast %164 : vector<8x1xf32> to vector<8x32xf32>
    %166 = arith.mulf %156, %165 : vector<8x32xf32>
    %167 = vector.broadcast %149 : vector<1x32xf32> to vector<8x32xf32>
    %168 = arith.mulf %166, %167 : vector<8x32xf32>
    %169 = vector.broadcast %150 : vector<1x32xf32> to vector<8x32xf32>
    %170 = arith.addf %168, %169 : vector<8x32xf32>
    %171 = arith.truncf %170 : vector<8x32xf32> to vector<8x32xbf16>
    %c0_51 = arith.constant 0 : index
    %c0_52 = arith.constant 0 : index
    %172 = vector.load %arg10[%c0_51, %c0_52] : memref<32x128xbf16, #tpu.memory_space<vmem>>, vector<32x128xbf16>
    %cst_53 = arith.constant dense<0.000000e+00> : vector<8x128xf32>
    %173 = tpu.matmul %171, %172, %cst_53 {dimension_numbers = #tpu.dot_dimension_numbers<[1], [0], [0], [1], [0, 0, 1, 1], [], []>} : vector<8x32xbf16>, vector<32x128xbf16>, vector<8x128xf32> -> vector<8x128xf32>
    %c0_54 = arith.constant 0 : index
    %c0_55 = arith.constant 0 : index
    %174 = vector.load %arg11[%c0_54, %c0_55] : memref<1x128xf32, #tpu.memory_space<vmem>>, vector<1x128xf32>
    %175 = vector.broadcast %174 : vector<1x128xf32> to vector<8x128xf32>
    %176 = arith.addf %173, %175 : vector<8x128xf32>
    %cst_56 = arith.constant 1.702000e+00 : f32
    %177 = vector.broadcast %cst_56 : f32 to vector<8x128xf32>
    %178 = arith.mulf %177, %176 : vector<8x128xf32>
    %179 = arith.negf %178 : vector<8x128xf32>
    %180 = math.exp %179 : vector<8x128xf32>
    %cst_57 = arith.constant 1.000000e+00 : f32
    %181 = vector.broadcast %cst_57 : f32 to vector<8x128xf32>
    %182 = arith.addf %181, %180 : vector<8x128xf32>
    %183 = arith.divf %181, %182 : vector<8x128xf32>
    %184 = arith.mulf %176, %183 : vector<8x128xf32>
    %185 = arith.truncf %184 : vector<8x128xf32> to vector<8x128xbf16>
    %c0_58 = arith.constant 0 : index
    %c0_59 = arith.constant 0 : index
    %186 = vector.load %arg12[%c0_58, %c0_59] : memref<128x32xbf16, #tpu.memory_space<vmem>>, vector<128x32xbf16>
    %cst_60 = arith.constant dense<0.000000e+00> : vector<8x32xf32>
    %187 = tpu.matmul %185, %186, %cst_60 {dimension_numbers = #tpu.dot_dimension_numbers<[1], [0], [0], [1], [0, 0, 1, 1], [], []>} : vector<8x128xbf16>, vector<128x32xbf16>, vector<8x32xf32> -> vector<8x32xf32>
    %c0_61 = arith.constant 0 : index
    %c0_62 = arith.constant 0 : index
    %188 = vector.load %arg13[%c0_61, %c0_62] : memref<1x32xf32, #tpu.memory_space<vmem>>, vector<1x32xf32>
    %189 = vector.broadcast %188 : vector<1x32xf32> to vector<8x32xf32>
    %190 = arith.addf %187, %189 : vector<8x32xf32>
    %191 = arith.addf %148, %190 : vector<8x32xf32>
    %192 = vector.shape_cast %191 : vector<8x32xf32> to vector<1x8x32xf32>
    %c0_63 = arith.constant 0 : index
    %c0_64 = arith.constant 0 : index
    %c0_65 = arith.constant 0 : index
    %193 = vector.load %arg14[%c0_63, %c0_64, %c0_65] : memref<1x8x32xf32, #tpu.memory_space<vmem>>, vector<1x8x32xf32>
    tpu.vector_store %arg14[%c0_63, %c0_64, %c0_65], %192 {strides = array<i32>} : memref<1x8x32xf32, #tpu.memory_space<vmem>>, vector<1x8x32xf32>,
    return
  }
  func.func @transform_0(%arg0: i32) -> (i32, i32, i32) {
    %c0_i32 = arith.constant 0 : i32
    %c0_i32_0 = arith.constant 0 : i32
    %c0_i32_1 = arith.constant 0 : i32
    return %arg0, %c0_i32, %c0_i32_0 : i32, i32, i32
  }
  func.func @transform_1(%arg0: i32) -> (i32, i32) {
    %c0_i32 = arith.constant 0 : i32
    %c0_i32_0 = arith.constant 0 : i32
    %c0_i32_1 = arith.constant 0 : i32
    return %c0_i32, %c0_i32_0 : i32, i32
  }
  func.func @transform_2(%arg0: i32) -> (i32, i32) {
    %c0_i32 = arith.constant 0 : i32
    %c0_i32_0 = arith.constant 0 : i32
    %c0_i32_1 = arith.constant 0 : i32
    return %c0_i32, %c0_i32_0 : i32, i32
  }
  func.func @transform_3(%arg0: i32) -> (i32, i32) {
    %c0_i32 = arith.constant 0 : i32
    %c0_i32_0 = arith.constant 0 : i32
    %c0_i32_1 = arith.constant 0 : i32
    return %c0_i32, %c0_i32_0 : i32, i32
  }
  func.func @transform_4(%arg0: i32) -> (i32, i32) {
    %c0_i32 = arith.constant 0 : i32
    %c0_i32_0 = arith.constant 0 : i32
    %c0_i32_1 = arith.constant 0 : i32
    return %c0_i32, %c0_i32_0 : i32, i32
  }
  func.func @transform_5(%arg0: i32) -> (i32, i32) {
    %c0_i32 = arith.constant 0 : i32
    %c0_i32_0 = arith.constant 0 : i32
    %c0_i32_1 = arith.constant 0 : i32
    return %c0_i32, %c0_i32_0 : i32, i32
  }
  func.func @transform_6(%arg0: i32) -> (i32, i32) {
    %c0_i32 = arith.constant 0 : i32
    %c0_i32_0 = arith.constant 0 : i32
    %c0_i32_1 = arith.constant 0 : i32
    return %c0_i32, %c0_i32_0 : i32, i32
  }
  func.func @transform_7(%arg0: i32) -> (i32, i32) {
    %c0_i32 = arith.constant 0 : i32
    %c0_i32_0 = arith.constant 0 : i32
    %c0_i32_1 = arith.constant 0 : i32
    return %c0_i32, %c0_i32_0 : i32, i32
  }
  func.func @transform_8(%arg0: i32) -> (i32, i32) {
    %c0_i32 = arith.constant 0 : i32
    %c0_i32_0 = arith.constant 0 : i32
    %c0_i32_1 = arith.constant 0 : i32
    return %c0_i32, %c0_i32_0 : i32, i32
  }
  func.func @transform_9(%arg0: i32) -> (i32, i32) {
    %c0_i32 = arith.constant 0 : i32
    %c0_i32_0 = arith.constant 0 : i32
    %c0_i32_1 = arith.constant 0 : i32
    return %c0_i32, %c0_i32_0 : i32, i32
  }
  func.func @transform_10(%arg0: i32) -> (i32, i32) {
    %c0_i32 = arith.constant 0 : i32
    %c0_i32_0 = arith.constant 0 : i32
    %c0_i32_1 = arith.constant 0 : i32
    return %c0_i32, %c0_i32_0 : i32, i32
  }
  func.func @transform_11(%arg0: i32) -> (i32, i32) {
    %c0_i32 = arith.constant 0 : i32
    %c0_i32_0 = arith.constant 0 : i32
    %c0_i32_1 = arith.constant 0 : i32
    return %c0_i32, %c0_i32_0 : i32, i32
  }
  func.func @transform_12(%arg0: i32) -> (i32, i32) {
    %c0_i32 = arith.constant 0 : i32
    %c0_i32_0 = arith.constant 0 : i32
    %c0_i32_1 = arith.constant 0 : i32
    return %c0_i32, %c0_i32_0 : i32, i32
  }
  func.func @transform_13(%arg0: i32) -> (i32, i32, i32) {
    %c0_i32 = arith.constant 0 : i32
    %c0_i32_0 = arith.constant 0 : i32
    %c0_i32_1 = arith.constant 0 : i32
    return %arg0, %c0_i32, %c0_i32_0 : i32, i32, i32
  }
}

module attributes {stable_mosaic.version = 11 : i64} {
  func.func @_final_kernel(%arg0: memref<2x32xf32, #tpu.memory_space<vmem>>, %arg1: memref<1x32xf32, #tpu.memory_space<vmem>>, %arg2: memref<1x32xf32, #tpu.memory_space<vmem>>, %arg3: memref<32x16xbf16, #tpu.memory_space<vmem>>, %arg4: memref<2x16xf32, #tpu.memory_space<vmem>>) attributes {dimension_semantics = [], scalar_prefetch = 0 : i64, scratch_operands = 0 : i64, tpu.core_type = #tpu.core_type<tc>} {
    %c0 = arith.constant 0 : index
    %c0_0 = arith.constant 0 : index
    %0 = vector.load %arg0[%c0, %c0_0] : memref<2x32xf32, #tpu.memory_space<vmem>>, vector<2x32xf32>
    %c0_1 = arith.constant 0 : index
    %c0_2 = arith.constant 0 : index
    %1 = vector.load %arg1[%c0_1, %c0_2] : memref<1x32xf32, #tpu.memory_space<vmem>>, vector<1x32xf32>
    %c0_3 = arith.constant 0 : index
    %c0_4 = arith.constant 0 : index
    %2 = vector.load %arg2[%c0_3, %c0_4] : memref<1x32xf32, #tpu.memory_space<vmem>>, vector<1x32xf32>
    %cst = arith.constant dense<0.000000e+00> : vector<2xf32>
    %3 = vector.multi_reduction <add>, %0, %cst [1] : vector<2x32xf32> to vector<2xf32>
    %4 = vector.shape_cast %3 : vector<2xf32> to vector<2x1xf32>
    %cst_5 = arith.constant 3.200000e+01 : f32
    %5 = vector.broadcast %cst_5 : f32 to vector<2x1xf32>
    %6 = arith.divf %4, %5 : vector<2x1xf32>
    %7 = vector.broadcast %6 : vector<2x1xf32> to vector<2x32xf32>
    %8 = arith.subf %0, %7 : vector<2x32xf32>
    %9 = arith.mulf %8, %8 : vector<2x32xf32>
    %cst_6 = arith.constant dense<0.000000e+00> : vector<2xf32>
    %10 = vector.multi_reduction <add>, %9, %cst_6 [1] : vector<2x32xf32> to vector<2xf32>
    %11 = vector.shape_cast %10 : vector<2xf32> to vector<2x1xf32>
    %cst_7 = arith.constant 3.200000e+01 : f32
    %12 = vector.broadcast %cst_7 : f32 to vector<2x1xf32>
    %13 = arith.divf %11, %12 : vector<2x1xf32>
    %cst_8 = arith.constant 9.99999974E-6 : f32
    %14 = vector.broadcast %cst_8 : f32 to vector<2x1xf32>
    %15 = arith.addf %13, %14 : vector<2x1xf32>
    %16 = math.rsqrt %15 : vector<2x1xf32>
    %17 = vector.broadcast %16 : vector<2x1xf32> to vector<2x32xf32>
    %18 = arith.mulf %8, %17 : vector<2x32xf32>
    %19 = vector.broadcast %1 : vector<1x32xf32> to vector<2x32xf32>
    %20 = arith.mulf %18, %19 : vector<2x32xf32>
    %21 = vector.broadcast %2 : vector<1x32xf32> to vector<2x32xf32>
    %22 = arith.addf %20, %21 : vector<2x32xf32>
    %23 = arith.truncf %22 : vector<2x32xf32> to vector<2x32xbf16>
    %c0_9 = arith.constant 0 : index
    %c0_10 = arith.constant 0 : index
    %24 = vector.load %arg3[%c0_9, %c0_10] : memref<32x16xbf16, #tpu.memory_space<vmem>>, vector<32x16xbf16>
    %cst_11 = arith.constant dense<0.000000e+00> : vector<2x16xf32>
    %25 = tpu.matmul %23, %24, %cst_11 {dimension_numbers = #tpu.dot_dimension_numbers<[1], [0], [0], [1], [0, 0, 1, 1], [], []>} : vector<2x32xbf16>, vector<32x16xbf16>, vector<2x16xf32> -> vector<2x16xf32>
    %c0_12 = arith.constant 0 : index
    %c0_13 = arith.constant 0 : index
    %26 = vector.load %arg4[%c0_12, %c0_13] : memref<2x16xf32, #tpu.memory_space<vmem>>, vector<2x16xf32>
    tpu.vector_store %arg4[%c0_12, %c0_13], %25 {strides = array<i32>} : memref<2x16xf32, #tpu.memory_space<vmem>>, vector<2x16xf32>,
    return
  }
}

</mosaic_0001>

<llo_original>
// kernel: text_encoder_forward.5
$region0: #{text_encoder_forward.5}
  #allocation0 [shape = 'u32[]', space=smem, size = 0x4, offset = 0x4, fixed_abs, tag = 'smem constant byte address 0x4 - core index']
  #allocation1 [shape = 'u32[144,128]{1,0:T(1,128)}', space=vmem, size = 0x12000, scoped, tag = 'internal scratch']
  %s0 = inlined_call_operand.vmem [shape: f32[2,32], index: 0, kind: input, shape index: {}]
  %s1 = inlined_call_operand.vmem [shape: f32[1,32], index: 1, kind: input, shape index: {}]
  %s2 = inlined_call_operand.vmem [shape: f32[1,32], index: 2, kind: input, shape index: {}]
  %s3 = inlined_call_operand.vmem [shape: bf16[32,16], index: 3, kind: input, shape index: {}]
  %s4 = inlined_call_operand.hbm [shape: f32[2,16], index: 4, kind: output, shape index: {}]
  %s5 = sld [smem:[#allocation0]]
  $region26: #{text_encoder_forward.5} parent=0
    _
  %s7 = ssub.s32 1, %s5
  %s8 = scalar_select 0, %s7, %s5
  $region1: #{text_encoder_forward.5} parent=0
    #allocation2 [shape = 'u8[1024]{0}', space=vmem, size = 0x400, scoped, tag = 'output window, operand 0, single buffered']
    #allocation3 [shape = 's32[1]{0}', space=sflag, size = 0x4, scoped, tag = 'scoped memory for text_encoder_forward.5']
    %9 = vsyncpa [#allocation3], 0
    // Predicated region
    $region2: #{text_encoder_forward.5} parent=1 // pred_check
      _
    $region3: #{text_encoder_forward.5} parent=1 // pred_check_branch
      %11 = sbr.rel (0) target = $region5
    $region4: #{text_encoder_forward.5} parent=1 // pred_region
      _
    $region5: #{text_encoder_forward.5} parent=1 // pred_fallthru
      _
    // Predicated region
    $region6: #{text_encoder_forward.5} parent=1 // pred_check
      _
    $region7: #{text_encoder_forward.5} parent=1 // pred_check_branch
      %13 = sbr.rel (0) target = $region9
    $region8: #{text_encoder_forward.5} parent=1 // pred_region
      _
    $region9: #{text_encoder_forward.5} parent=1 // pred_fallthru
      _
    // Predicated region
    $region10: #{text_encoder_forward.5} parent=1 // pred_check
      _
    $region11: #{text_encoder_forward.5} parent=1 // pred_check_branch
      %15 = sbr.rel (0) target = $region13
    $region12: #{text_encoder_forward.5} parent=1 // pred_region
      _
    $region13: #{text_encoder_forward.5} parent=1 // pred_fallthru
      _
    // Predicated region
    $region14: #{text_encoder_forward.5} parent=1 // pred_check
      _
    $region15: #{text_encoder_forward.5} parent=1 // pred_check_branch
      %17 = sbr.rel (0) target = $region17
    $region16: #{text_encoder_forward.5} parent=1 // pred_region
      _
    $region17: #{text_encoder_forward.5} parent=1 // pred_fallthru
      _
    %v19 = vld [vmem:[%s0] sm:$0x3]
    %v20 = vld [vmem:[%s1] sm:$0x1]
    %v21 = vld [vmem:[%s2] sm:$0x1]
    %vm22 = vcmask 254976
    %v23 = vsel %vm22, %v19, 0.0
    %24 = vadd.xlane.f32.xlu0 %v23
    %v25 = vpop.xlane.xlu0 %24
    %v26 = vrcp.pop 32.0
    %v27 = vmul.f32 %v25, %v26
    %v28 = vsub.f32 %v19, %v27
    %v29 = vmul.f32 %v28, %v28
    %v30 = vsel %vm22, %v29, 0.0
    %31 = vadd.xlane.f32.xlu0 %v30
    %v32 = vpop.xlane.xlu0 %31
    %v33 = vmul.f32 %v32, %v26
    %v34 = vadd.f32 %v33, 1e-05
    %v35 = vrsqrt.pop %v34
    %v36 = vmul.f32 %v28, %v35
    %v38 = vlaneseq
    %v39 = vshrl.u32 %v38, 7
    %v40 = vsub.s32 0, %v39
    %v41 = vrot.slane %v20, %v40
    %v43 = vmul.f32 %v36, %v41
    %v45 = vlaneseq
    %v46 = vshrl.u32 %v45, 7
    %v47 = vsub.s32 0, %v46
    %v48 = vrot.slane %v21, %v47
    %v50 = vadd.f32 %v43, %v48
    %v51 = vpack.c.bf16 %v50, %v50
    %v52 = vld [vmem:[%s3] sm:$0xf]
    %v53 = vld [vmem:[%s3 + $0x4] sm:$0xf]
    %v54 = vld [vmem:[%s3 + $0x8] sm:$0xf]
    %v55 = vld [vmem:[%s3 + $0xc] sm:$0xf]
    %v60 = vunpack.c.l.b16 %v52
    %v61 = vunpack.c.l.b16 %v53
    %v62 = vunpack.c.l.b16 %v54
    %v63 = vunpack.c.l.b16 %v55
    %v64 = vpack.c.b16 %v61, %v60
    %v65 = vpack.c.b16 %v63, %v62
    %vm68 = vcmask 261120
    %v70 = vsel %vm68, %v51, 0
    %72 = vmatprep.subr.bf16.mxu0 0
    %73 = vmatpush1.bf16.msra.mxu0 0
    %74 = vmatprep.subr.bf16.mxu0 0
    %75 = vmatpush1.bf16.msra.mxu0 0
    %76 = vmatprep.subr.bf16.mxu0 0
    %77 = vmatpush1.bf16.msra.mxu0 0
    %78 = vmatprep.subr.bf16.mxu0 0
    %79 = vmatpush1.bf16.msra.mxu0 0
    %80 = vmatprep.subr.bf16.mxu0 0
    %81 = vmatpush1.bf16.msra.mxu0 0
    %82 = vmatprep.subr.bf16.mxu0 0
    %83 = vmatpush1.bf16.msra.mxu0 0
    %84 = vmatprep.subr.bf16.mxu0 0
    %85 = vmatpush1.bf16.msra.mxu0 %v65
    %86 = vmatprep.subr.bf16.mxu0 0
    %87 = vmatpush1.bf16.msra.mxu0 %v64
    %88 = vmatprep.subr.bf16.mxu0 0
    %89 = vmatpush2.bf16.msra.mxu0 0
    %90 = vmatprep.subr.bf16.mxu0 0
    %91 = vmatpush2.bf16.msra.mxu0 0
    %92 = vmatprep.subr.bf16.mxu0 0
    %93 = vmatpush2.bf16.msra.mxu0 0
    %94 = vmatprep.subr.bf16.mxu0 0
    %95 = vmatpush2.bf16.msra.mxu0 0
    %96 = vmatprep.subr.bf16.mxu0 0
    %97 = vmatpush2.bf16.msra.mxu0 0
    %98 = vmatprep.subr.bf16.mxu0 0
    %99 = vmatpush2.bf16.msra.mxu0 0
    %100 = vmatprep.subr.bf16.mxu0 0
    %101 = vmatpush2.bf16.msra.mxu0 0
    %102 = vmatprep.subr.bf16.mxu0 0
    %103 = vmatpush2.bf16.msra.mxu0 0
    %104 = vmatprep.mubr.bf16.mxu0 0
    %105 = vmatmul.mubr.bf16.gmra.mxu0 %v70
    %v106 = vpop.f32.mrf.mxu0
    %v107 = vadd.f32 0.0, %v106
    %v108 = vpop.f32.mrf.mxu0
    %v109 = vpop.f32.mrf.mxu0
    %v110 = vpop.f32.mrf.mxu0
    %111 = vdwg.mxu0
    %vm112 = vcmask 123904
    %113 = vst.msk [vmem:[#allocation2] sm:$0x3] %vm112, %v107
    // Predicated region
    $region18: #{text_encoder_forward.5} parent=1 // pred_check
      _
    $region19: #{text_encoder_forward.5} parent=1 // pred_check_branch
      %115 = sbr.rel (0) target = $region21
    $region20: #{text_encoder_forward.5} parent=1 // pred_region
      %s117 = ssub.s32 32, 32
      %118 = vsyncadd [#allocation3], %s117
      %s120 = sshll.u32 [#allocation2], 4
      %s121 = int_to_ptr.vmem [resolvable:$true] %s120
      %123 = dma.vmem_to_hbm [thread:$0]  %s121, 32, %s4, [#allocation3]
    $region21: #{text_encoder_forward.5} parent=1 // pred_fallthru
      _
    // Predicated region
    $region22: #{text_encoder_forward.5} parent=1 // pred_check
      _
    $region23: #{text_encoder_forward.5} parent=1 // pred_check_branch
      %125 = sbr.rel (0) target = $region25
    $region24: #{text_encoder_forward.5} parent=1 // pred_region
      %126 = dma.done [#allocation3], 32
    $region25: #{text_encoder_forward.5} parent=1 // pred_fallthru
      _
    %127 = vsyncpa [#allocation3], 1

// kernel: text_encoder_forward.4
$region0: #{text_encoder_forward.4}
  #allocation0 [shape = 'u32[]', space=smem, size = 0x4, offset = 0x4, fixed_abs, tag = 'smem constant byte address 0x4 - core index']
  #allocation1 [shape = 'u32[144,128]{1,0:T(1,128)}', space=vmem, size = 0x12000, scoped, tag = 'internal scratch']
  %s0 = inlined_call_operand.vmem [shape: f32[2,8,32], index: 0, kind: input, shape index: {}]
  %s1 = inlined_call_operand.vmem [shape: f32[1,32], index: 1, kind: input, shape index: {}, may-alias: {1,7}]
  %s2 = inlined_call_operand.vmem [shape: f32[1,32], index: 2, kind: input, shape index: {}, may-alias: {2,8}]
  %s3 = inlined_call_operand.vmem [shape: bf16[32,96], index: 3, kind: input, shape index: {}]
  %s4 = inlined_call_operand.vmem [shape: f32[1,96], index: 4, kind: input, shape index: {}]
  %s5 = inlined_call_operand.vmem [shape: bf16[32,32], index: 5, kind: input, shape index: {}]
  %s6 = inlined_call_operand.vmem [shape: f32[1,32], index: 6, kind: input, shape index: {}]
  %s7 = inlined_call_operand.vmem [shape: f32[1,32], index: 7, kind: input, shape index: {}, may-alias: {1,7}]
  %s8 = inlined_call_operand.vmem [shape: f32[1,32], index: 8, kind: input, shape index: {}, may-alias: {2,8}]
  %s9 = inlined_call_operand.vmem [shape: bf16[32,128], index: 9, kind: input, shape index: {}]
  %s10 = inlined_call_operand.vmem [shape: f32[1,128], index: 10, kind: input, shape index: {}]
  %s11 = inlined_call_operand.vmem [shape: bf16[128,32], index: 11, kind: input, shape index: {}]
  %s12 = inlined_call_operand.vmem [shape: f32[1,32], index: 12, kind: input, shape index: {}]
  %s13 = inlined_call_operand.vmem [shape: f32[2,8,32], index: 13, kind: output, shape index: {}]
  %s14 = sld [smem:[#allocation0]]
  $region85: #{text_encoder_forward.4} parent=0
    _
  %s16 = ssub.s32 1, %s14
  %s17 = scalar_select 0, %s16, %s14
  loop: start=0, step=1, limit=4
  $region2: #{text_encoder_forward.4} parent=0 // loop_pre_header
    _
  $region3: #{text_encoder_forward.4} parent=0 // loop_header
    %s19 = sphi 0, %s23
    %p20 = scmp.ge.s32.totalorder %s19, 4
    %s29 = sphi 0, %s31
    %s32 = sphi 0, %s29
    %s33 = sphi 0, %s32
    %s49 = sphi 0, %s33
    %s53 = sphi 0, %s53
    %s55 = sphi 0, %s53
    %s56 = sphi 0, %s55
    %s70 = sphi 0, %s56
    %s74 = sphi 0, %s74
    %s76 = sphi 0, %s74
    %s77 = sphi 0, %s76
    %s91 = sphi 0, %s77
    %s95 = sphi 0, %s95
    %s97 = sphi 0, %s95
    %s98 = sphi 0, %s97
    %s112 = sphi 0, %s98
    %s116 = sphi 0, %s116
    %s118 = sphi 0, %s116
    %s119 = sphi 0, %s118
    %s133 = sphi 0, %s119
    %s137 = sphi 0, %s137
    %s139 = sphi 0, %s137
    %s140 = sphi 0, %s139
    %s154 = sphi 0, %s140
    %s158 = sphi 0, %s158
    %s160 = sphi 0, %s158
    %s161 = sphi 0, %s160
    %s175 = sphi 0, %s161
    %s179 = sphi 0, %s179
    %s181 = sphi 0, %s179
    %s182 = sphi 0, %s181
    %s196 = sphi 0, %s182
    %s200 = sphi 0, %s200
    %s202 = sphi 0, %s200
    %s203 = sphi 0, %s202
    %s217 = sphi 0, %s203
    %s221 = sphi 0, %s221
    %s223 = sphi 0, %s221
    %s224 = sphi 0, %s223
    %s238 = sphi 0, %s224
    %s242 = sphi 0, %s242
    %s244 = sphi 0, %s242
    %s245 = sphi 0, %s244
    %s259 = sphi 0, %s245
    %s263 = sphi 0, %s263
    %s265 = sphi 0, %s263
    %s266 = sphi 0, %s265
    %s280 = sphi 0, %s266
    %s284 = sphi 0, %s284
    %s286 = sphi 0, %s284
    %s287 = sphi 0, %s286
    %s301 = sphi 0, %s287
    %s307 = sphi 0, %s309
    %s310 = sphi 0, %s307
    %s311 = sphi 0, %s310
    %s327 = sphi 0, %s311
  $region4: #{text_encoder_forward.4} parent=0 // loop_header_branch
    %22 = sbr.rel (%p20) target = $region8
  $region5: #{text_encoder_forward.4} parent=0 // loop_body
    %s24 = ssub.s32 %s19, 1
    %s25 = ssub.s32 %s19, 2
    %s26 = sadd.s32 %s19, 1
    %s27 = ssub.s32 %s19, %s26
    %p28 = scmp.eq.s32.totalorder %s27, 0
    %s30 = sadd.s32 %s29, 1
    %s31 = scalar_select %p28, %s29, %s30
    %p34 = pneg %p28
    %p35 = scmp.eq.s32.totalorder %s19, 1
    %p36 = por %p34, %p35
    %p37 = scmp.ne.s32.totalorder %s29, %s32
    %p38 = scmp.eq.s32.totalorder %s19, 0
    %p39 = por %p37, %p38
    %p40 = scmp.ne.s32.totalorder %s29, %s32
    %p41 = scmp.eq.s32.totalorder %s24, 1
    %p42 = por %p40, %p41
    %p43 = scmp.ne.s32.totalorder %s32, %s33
    %p44 = scmp.eq.s32.totalorder %s24, 0
    %p45 = por %p43, %p44
    %p46 = scmp.ne.s32.totalorder %s32, %s33
    %p47 = scmp.eq.s32.totalorder %s25, 1
    %p48 = por %p46, %p47
    %p50 = scmp.ne.s32.totalorder %s33, %s49
    %p51 = scmp.eq.s32.totalorder %s25, 0
    %p52 = por %p50, %p51
    %s54 = sadd.s32 %s53, 1
    %p57 = scmp.eq.s32.totalorder %s19, 1
    %p58 = scmp.ne.s32.totalorder %s53, %s55
    %p59 = scmp.eq.s32.totalorder %s19, 0
    %p60 = por %p58, %p59
    %p61 = scmp.ne.s32.totalorder %s53, %s55
    %p62 = scmp.eq.s32.totalorder %s24, 1
    %p63 = por %p61, %p62
    %p64 = scmp.ne.s32.totalorder %s55, %s56
    %p65 = scmp.eq.s32.totalorder %s24, 0
    %p66 = por %p64, %p65
    %p67 = scmp.ne.s32.totalorder %s55, %s56
    %p68 = scmp.eq.s32.totalorder %s25, 1
    %p69 = por %p67, %p68
    %p71 = scmp.ne.s32.totalorder %s56, %s70
    %p72 = scmp.eq.s32.totalorder %s25, 0
    %p73 = por %p71, %p72
    %s75 = sadd.s32 %s74, 1
    %p78 = scmp.eq.s32.totalorder %s19, 1
    %p79 = scmp.ne.s32.totalorder %s74, %s76
    %p80 = scmp.eq.s32.totalorder %s19, 0
    %p81 = por %p79, %p80
    %p82 = scmp.ne.s32.totalorder %s74, %s76
    %p83 = scmp.eq.s32.totalorder %s24, 1
    %p84 = por %p82, %p83
    %p85 = scmp.ne.s32.totalorder %s76, %s77
    %p86 = scmp.eq.s32.totalorder %s24, 0
    %p87 = por %p85, %p86
    %p88 = scmp.ne.s32.totalorder %s76, %s77
    %p89 = scmp.eq.s32.totalorder %s25, 1
    %p90 = por %p88, %p89
    %p92 = scmp.ne.s32.totalorder %s77, %s91
    %p93 = scmp.eq.s32.totalorder %s25, 0
    %p94 = por %p92, %p93
    %s96 = sadd.s32 %s95, 1
    %p99 = scmp.eq.s32.totalorder %s19, 1
    %p100 = scmp.ne.s32.totalorder %s95, %s97
    %p101 = scmp.eq.s32.totalorder %s19, 0
    %p102 = por %p100, %p101
    %p103 = scmp.ne.s32.totalorder %s95, %s97
    %p104 = scmp.eq.s32.totalorder %s24, 1
    %p105 = por %p103, %p104
    %p106 = scmp.ne.s32.totalorder %s97, %s98
    %p107 = scmp.eq.s32.totalorder %s24, 0
    %p108 = por %p106, %p107
    %p109 = scmp.ne.s32.totalorder %s97, %s98
    %p110 = scmp.eq.s32.totalorder %s25, 1
    %p111 = por %p109, %p110
    %p113 = scmp.ne.s32.totalorder %s98, %s112
    %p114 = scmp.eq.s32.totalorder %s25, 0
    %p115 = por %p113, %p114
    %s117 = sadd.s32 %s116, 1
    %p120 = scmp.eq.s32.totalorder %s19, 1
    %p121 = scmp.ne.s32.totalorder %s116, %s118
    %p122 = scmp.eq.s32.totalorder %s19, 0
    %p123 = por %p121, %p122
    %p124 = scmp.ne.s32.totalorder %s116, %s118
    %p125 = scmp.eq.s32.totalorder %s24, 1
    %p126 = por %p124, %p125
    %p127 = scmp.ne.s32.totalorder %s118, %s119
    %p128 = scmp.eq.s32.totalorder %s24, 0
    %p129 = por %p127, %p128
    %p130 = scmp.ne.s32.totalorder %s118, %s119
    %p131 = scmp.eq.s32.totalorder %s25, 1
    %p132 = por %p130, %p131
    %p134 = scmp.ne.s32.totalorder %s119, %s133
    %p135 = scmp.eq.s32.totalorder %s25, 0
    %p136 = por %p134, %p135
    %s138 = sadd.s32 %s137, 1
    %p141 = scmp.eq.s32.totalorder %s19, 1
    %p142 = scmp.ne.s32.totalorder %s137, %s139
    %p143 = scmp.eq.s32.totalorder %s19, 0
    %p144 = por %p142, %p143
    %p145 = scmp.ne.s32.totalorder %s137, %s139
    %p146 = scmp.eq.s32.totalorder %s24, 1
    %p147 = por %p145, %p146
    %p148 = scmp.ne.s32.totalorder %s139, %s140
    %p149 = scmp.eq.s32.totalorder %s24, 0
    %p150 = por %p148, %p149
    %p151 = scmp.ne.s32.totalorder %s139, %s140
    %p152 = scmp.eq.s32.totalorder %s25, 1
    %p153 = por %p151, %p152
    %p155 = scmp.ne.s32.totalorder %s140, %s154
    %p156 = scmp.eq.s32.totalorder %s25, 0
    %p157 = por %p155, %p156
    %s159 = sadd.s32 %s158, 1
    %p162 = scmp.eq.s32.totalorder %s19, 1
    %p163 = scmp.ne.s32.totalorder %s158, %s160
    %p164 = scmp.eq.s32.totalorder %s19, 0
    %p165 = por %p163, %p164
    %p166 = scmp.ne.s32.totalorder %s158, %s160
    %p167 = scmp.eq.s32.totalorder %s24, 1
    %p168 = por %p166, %p167
    %p169 = scmp.ne.s32.totalorder %s160, %s161
    %p170 = scmp.eq.s32.totalorder %s24, 0
    %p171 = por %p169, %p170
    %p172 = scmp.ne.s32.totalorder %s160, %s161
    %p173 = scmp.eq.s32.totalorder %s25, 1
    %p174 = por %p172, %p173
    %p176 = scmp.ne.s32.totalorder %s161, %s175
    %p177 = scmp.eq.s32.totalorder %s25, 0
    %p178 = por %p176, %p177
    %s180 = sadd.s32 %s179, 1
    %p183 = scmp.eq.s32.totalorder %s19, 1
    %p184 = scmp.ne.s32.totalorder %s179, %s181
    %p185 = scmp.eq.s32.totalorder %s19, 0
    %p186 = por %p184, %p185
    %p187 = scmp.ne.s32.totalorder %s179, %s181
    %p188 = scmp.eq.s32.totalorder %s24, 1
    %p189 = por %p187, %p188
    %p190 = scmp.ne.s32.totalorder %s181, %s182
    %p191 = scmp.eq.s32.totalorder %s24, 0
    %p192 = por %p190, %p191
    %p193 = scmp.ne.s32.totalorder %s181, %s182
    %p194 = scmp.eq.s32.totalorder %s25, 1
    %p195 = por %p193, %p194
    %p197 = scmp.ne.s32.totalorder %s182, %s196
    %p198 = scmp.eq.s32.totalorder %s25, 0
    %p199 = por %p197, %p198
    %s201 = sadd.s32 %s200, 1
    %p204 = scmp.eq.s32.totalorder %s19, 1
    %p205 = scmp.ne.s32.totalorder %s200, %s202
    %p206 = scmp.eq.s32.totalorder %s19, 0
    %p207 = por %p205, %p206
    %p208 = scmp.ne.s32.totalorder %s200, %s202
    %p209 = scmp.eq.s32.totalorder %s24, 1
    %p210 = por %p208, %p209
    %p211 = scmp.ne.s32.totalorder %s202, %s203
    %p212 = scmp.eq.s32.totalorder %s24, 0
    %p213 = por %p211, %p212
    %p214 = scmp.ne.s32.totalorder %s202, %s203
    %p215 = scmp.eq.s32.totalorder %s25, 1
    %p216 = por %p214, %p215
    %p218 = scmp.ne.s32.totalorder %s203, %s217
    %p219 = scmp.eq.s32.totalorder %s25, 0
    %p220 = por %p218, %p219
    %s222 = sadd.s32 %s221, 1
    %p225 = scmp.eq.s32.totalorder %s19, 1
    %p226 = scmp.ne.s32.totalorder %s221, %s223
    %p227 = scmp.eq.s32.totalorder %s19, 0
    %p228 = por %p226, %p227
    %p229 = scmp.ne.s32.totalorder %s221, %s223
    %p230 = scmp.eq.s32.totalorder %s24, 1
    %p231 = por %p229, %p230
    %p232 = scmp.ne.s32.totalorder %s223, %s224
    %p233 = scmp.eq.s32.totalorder %s24, 0
    %p234 = por %p232, %p233
    %p235 = scmp.ne.s32.totalorder %s223, %s224
    %p236 = scmp.eq.s32.totalorder %s25, 1
    %p237 = por %p235, %p236
    %p239 = scmp.ne.s32.totalorder %s224, %s238
    %p240 = scmp.eq.s32.totalorder %s25, 0
    %p241 = por %p239, %p240
    %s243 = sadd.s32 %s242, 1
    %p246 = scmp.eq.s32.totalorder %s19, 1
    %p247 = scmp.ne.s32.totalorder %s242, %s244
    %p248 = scmp.eq.s32.totalorder %s19, 0
    %p249 = por %p247, %p248
    %p250 = scmp.ne.s32.totalorder %s242, %s244
    %p251 = scmp.eq.s32.totalorder %s24, 1
    %p252 = por %p250, %p251
    %p253 = scmp.ne.s32.totalorder %s244, %s245
    %p254 = scmp.eq.s32.totalorder %s24, 0
    %p255 = por %p253, %p254
    %p256 = scmp.ne.s32.totalorder %s244, %s245
    %p257 = scmp.eq.s32.totalorder %s25, 1
    %p258 = por %p256, %p257
    %p260 = scmp.ne.s32.totalorder %s245, %s259
    %p261 = scmp.eq.s32.totalorder %s25, 0
    %p262 = por %p260, %p261
    %s264 = sadd.s32 %s263, 1
    %p267 = scmp.eq.s32.totalorder %s19, 1
    %p268 = scmp.ne.s32.totalorder %s263, %s265
    %p269 = scmp.eq.s32.totalorder %s19, 0
    %p270 = por %p268, %p269
    %p271 = scmp.ne.s32.totalorder %s263, %s265
    %p272 = scmp.eq.s32.totalorder %s24, 1
    %p273 = por %p271, %p272
    %p274 = scmp.ne.s32.totalorder %s265, %s266
    %p275 = scmp.eq.s32.totalorder %s24, 0
    %p276 = por %p274, %p275
    %p277 = scmp.ne.s32.totalorder %s265, %s266
    %p278 = scmp.eq.s32.totalorder %s25, 1
    %p279 = por %p277, %p278
    %p281 = scmp.ne.s32.totalorder %s266, %s280
    %p282 = scmp.eq.s32.totalorder %s25, 0
    %p283 = por %p281, %p282
    %s285 = sadd.s32 %s284, 1
    %p288 = scmp.eq.s32.totalorder %s19, 1
    %p289 = scmp.ne.s32.totalorder %s284, %s286
    %p290 = scmp.eq.s32.totalorder %s19, 0
    %p291 = por %p289, %p290
    %p292 = scmp.ne.s32.totalorder %s284, %s286
    %p293 = scmp.eq.s32.totalorder %s24, 1
    %p294 = por %p292, %p293
    %p295 = scmp.ne.s32.totalorder %s286, %s287
    %p296 = scmp.eq.s32.totalorder %s24, 0
    %p297 = por %p295, %p296
    %p298 = scmp.ne.s32.totalorder %s286, %s287
    %p299 = scmp.eq.s32.totalorder %s25, 1
    %p300 = por %p298, %p299
    %p302 = scmp.ne.s32.totalorder %s287, %s301
    %p303 = scmp.eq.s32.totalorder %s25, 0
    %p304 = por %p302, %p303
    %s305 = ssub.s32 %s19, %s26
    %p306 = scmp.eq.s32.totalorder %s305, 0
    %s308 = sadd.s32 %s307, 1
    %s309 = scalar_select %p306, %s307, %s308
    %p312 = pneg %p306
    %p313 = scmp.eq.s32.totalorder %s19, 1
    %p314 = por %p312, %p313
    %p315 = scmp.ne.s32.totalorder %s307, %s310
    %p316 = scmp.eq.s32.totalorder %s19, 0
    %p317 = por %p315, %p316
    %p318 = scmp.ne.s32.totalorder %s307, %s310
    %p319 = scmp.eq.s32.totalorder %s24, 1
    %p320 = por %p318, %p319
    %p321 = scmp.ne.s32.totalorder %s310, %s311
    %p322 = scmp.eq.s32.totalorder %s24, 0
    %p323 = por %p321, %p322
    %p324 = scmp.ne.s32.totalorder %s310, %s311
    %p325 = scmp.eq.s32.totalorder %s25, 1
    %p326 = por %p324, %p325
    %p328 = scmp.ne.s32.totalorder %s311, %s327
    %p329 = scmp.eq.s32.totalorder %s25, 0
    %p330 = por %p328, %p329
    %p331 = scmp.le.s32.totalorder 1, %s19
    %p332 = scmp.lt.s32.totalorder %s19, 3
    %p333 = pnand %p331, %p332
    %p334 = pneg %p333
    // Predicated region
    $region9: #{text_encoder_forward.4} parent=5 // pred_check
      _
    $region10: #{text_encoder_forward.4} parent=5 // pred_check_branch
      %336 = sbr.rel (%p333) target = $region12
    $region11: #{text_encoder_forward.4} parent=5 // pred_region
      %s337 = ssub.s32 %s19, 1
      // Predicated region
      $region13: #{text_encoder_forward.4} parent=11 // pred_check
        %p338 = pneg %p66
      $region14: #{text_encoder_forward.4} parent=11 // pred_check_branch
        %340 = sbr.rel (%p338) target = $region16
      $region15: #{text_encoder_forward.4} parent=11 // pred_region
        _
      $region16: #{text_encoder_forward.4} parent=11 // pred_fallthru
        _
      // Predicated region
      $region17: #{text_encoder_forward.4} parent=11 // pred_check
        %p341 = pneg %p87
      $region18: #{text_encoder_forward.4} parent=11 // pred_check_branch
        %343 = sbr.rel (%p341) target = $region20
      $region19: #{text_encoder_forward.4} parent=11 // pred_region
        _
      $region20: #{text_encoder_forward.4} parent=11 // pred_fallthru
        _
      // Predicated region
      $region21: #{text_encoder_forward.4} parent=11 // pred_check
        %p344 = pneg %p108
      $region22: #{text_encoder_forward.4} parent=11 // pred_check_branch
        %346 = sbr.rel (%p344) target = $region24
      $region23: #{text_encoder_forward.4} parent=11 // pred_region
        _
      $region24: #{text_encoder_forward.4} parent=11 // pred_fallthru
        _
      // Predicated region
      $region25: #{text_encoder_forward.4} parent=11 // pred_check
        %p347 = pneg %p129
      $region26: #{text_encoder_forward.4} parent=11 // pred_check_branch
        %349 = sbr.rel (%p347) target = $region28
      $region27: #{text_encoder_forward.4} parent=11 // pred_region
        _
      $region28: #{text_encoder_forward.4} parent=11 // pred_fallthru
        _
      // Predicated region
      $region29: #{text_encoder_forward.4} parent=11 // pred_check
        %p350 = pneg %p150
      $region30: #{text_encoder_forward.4} parent=11 // pred_check_branch
        %352 = sbr.rel (%p350) target = $region32
      $region31: #{text_encoder_forward.4} parent=11 // pred_region
        _
      $region32: #{text_encoder_forward.4} parent=11 // pred_fallthru
        _
      // Predicated region
      $region33: #{text_encoder_forward.4} parent=11 // pred_check
        %p353 = pneg %p171
      $region34: #{text_encoder_forward.4} parent=11 // pred_check_branch
        %355 = sbr.rel (%p353) target = $region36
      $region35: #{text_encoder_forward.4} parent=11 // pred_region
        _
      $region36: #{text_encoder_forward.4} parent=11 // pred_fallthru
        _
      // Predicated region
      $region37: #{text_encoder_forward.4} parent=11 // pred_check
        %p356 = pneg %p192
      $region38: #{text_encoder_forward.4} parent=11 // pred_check_branch
        %358 = sbr.rel (%p356) target = $region40
      $region39: #{text_encoder_forward.4} parent=11 // pred_region
        _
      $region40: #{text_encoder_forward.4} parent=11 // pred_fallthru
        _
      // Predicated region
      $region41: #{text_encoder_forward.4} parent=11 // pred_check
        %p359 = pneg %p213
      $region42: #{text_encoder_forward.4} parent=11 // pred_check_branch
        %361 = sbr.rel (%p359) target = $region44
      $region43: #{text_encoder_forward.4} parent=11 // pred_region
        _
      $region44: #{text_encoder_forward.4} parent=11 // pred_fallthru
        _
      // Predicated region
      $region45: #{text_encoder_forward.4} parent=11 // pred_check
        %p362 = pneg %p234
      $region46: #{text_encoder_forward.4} parent=11 // pred_check_branch
        %364 = sbr.rel (%p362) target = $region48
      $region47: #{text_encoder_forward.4} parent=11 // pred_region
        _
      $region48: #{text_encoder_forward.4} parent=11 // pred_fallthru
        _
      // Predicated region
      $region49: #{text_encoder_forward.4} parent=11 // pred_check
        %p365 = pneg %p255
      $region50: #{text_encoder_forward.4} parent=11 // pred_check_branch
        %367 = sbr.rel (%p365) target = $region52
      $region51: #{text_encoder_forward.4} parent=11 // pred_region
        _
      $region52: #{text_encoder_forward.4} parent=11 // pred_fallthru
        _
      // Predicated region
      $region53: #{text_encoder_forward.4} parent=11 // pred_check
        %p368 = pneg %p276
      $region54: #{text_encoder_forward.4} parent=11 // pred_check_branch
        %370 = sbr.rel (%p368) target = $region56
      $region55: #{text_encoder_forward.4} parent=11 // pred_region
        _
      $region56: #{text_encoder_forward.4} parent=11 // pred_fallthru
        _
      // Predicated region
      $region57: #{text_encoder_forward.4} parent=11 // pred_check
        %p371 = pneg %p297
      $region58: #{text_encoder_forward.4} parent=11 // pred_check_branch
        %373 = sbr.rel (%p371) target = $region60
      $region59: #{text_encoder_forward.4} parent=11 // pred_region
        _
      $region60: #{text_encoder_forward.4} parent=11 // pred_fallthru
        _
    $region12: #{text_encoder_forward.4} parent=5 // pred_fallthru
      _
    %p374 = scmp.lt.s32.totalorder %s19, 2
    // Predicated region
    $region61: #{text_encoder_forward.4} parent=5 // pred_check
      %p375 = pneg %p374
    $region62: #{text_encoder_forward.4} parent=5 // pred_check_branch
      %377 = sbr.rel (%p375) target = $region64
    $region63: #{text_encoder_forward.4} parent=5 // pred_region
      // Predicated region
      $region65: #{text_encoder_forward.4} parent=63 // pred_check
        %p378 = pneg %p39
      $region66: #{text_encoder_forward.4} parent=63 // pred_check_branch
        %380 = sbr.rel (%p378) target = $region68
      $region67: #{text_encoder_forward.4} parent=63 // pred_region
        %p381 = scmp.lt.s32.totalorder %s19, 1
        %s382 = scalar_select %p381, %s19, 1
        %s383 = smul.addr %s382, 8
        %s384 = scalar_lea.vmem %s0, %s383
      $region68: #{text_encoder_forward.4} parent=63 // pred_fallthru
        _
    $region64: #{text_encoder_forward.4} parent=5 // pred_fallthru
      _
    %p385 = scmp.le.s32.totalorder 1, %s19
    %p386 = scmp.lt.s32.totalorder %s19, 3
    %p387 = pnand %p385, %p386
    %p388 = pneg %p387
    // Predicated region
    $region69: #{text_encoder_forward.4} parent=5 // pred_check
      _
    $region70: #{text_encoder_forward.4} parent=5 // pred_check_branch
      %390 = sbr.rel (%p387) target = $region72
    $region71: #{text_encoder_forward.4} parent=5 // pred_region
      %s391 = ssub.s32 %s19, 1
      %p392 = scmp.lt.s32.totalorder %s24, 1
      %s393 = scalar_select %p392, %s24, 1
      %s394 = smul.addr %s393, 8
      %s395 = scalar_lea.vmem %s0, %s394
      %p396 = pneg %p45
      %p397 = pneg %p42
      %p398 = pneg %p66
      %p399 = pneg %p63
      %p400 = pneg %p87
      %p401 = pneg %p84
      %p402 = pneg %p108
      %p403 = pneg %p105
      %p404 = pneg %p129
      %p405 = pneg %p126
      %p406 = pneg %p150
      %p407 = pneg %p147
      %p408 = pneg %p171
      %p409 = pneg %p168
      %p410 = pneg %p192
      %p411 = pneg %p189
      %p412 = pneg %p213
      %p413 = pneg %p210
      %p414 = pneg %p234
      %p415 = pneg %p231
      %p416 = pneg %p255
      %p417 = pneg %p252
      %p418 = pneg %p276
      %p419 = pneg %p273
      %p420 = pneg %p297
      %p421 = pneg %p294
      %p422 = pneg %p323
      %p423 = pneg %p320
      %p424 = scmp.lt.s32.totalorder %s24, 1
      %s425 = scalar_select %p424, %s24, 1
      %s426 = smul.addr %s425, 8
      %s427 = scalar_lea.vmem %s13, %s426
      %p428 = scmp.lt.s32.totalorder %s24, 1
      %s429 = scalar_select %p428, %s24, 1
      %s430 = smul.addr %s429, 8
      %s431 = scalar_lea.vmem %s0, %s430
      %p432 = scmp.lt.s32.totalorder %s24, 1
      %s433 = scalar_select %p432, %s24, 1
      %s434 = smul.addr %s433, 8
      %s435 = scalar_lea.vmem %s13, %s434
      %v437 = vld [vmem:[%s431] sm:$0xff]
      %v438 = vld [vmem:[%s1] sm:$0x1]
      %v439 = vld [vmem:[%s2] sm:$0x1]
      %vm440 = vcmask 261120
      %v441 = vsel %vm440, %v437, 0.0
      %442 = vadd.xlane.f32.xlu0 %v441
      %v443 = vpop.xlane.xlu0 %442
      %v444 = vrcp.pop 32.0
      %v445 = vmul.f32 %v443, %v444
      %v446 = vsub.f32 %v437, %v445
      %v447 = vmul.f32 %v446, %v446
      %v448 = vsel %vm440, %v447, 0.0
      %449 = vadd.xlane.f32.xlu0 %v448
      %v450 = vpop.xlane.xlu0 %449
      %v451 = vmul.f32 %v450, %v444
      %v452 = vadd.f32 %v451, 1e-05
      %v453 = vrsqrt.pop %v452
      %v454 = vmul.f32 %v446, %v453
      %v456 = vlaneseq
      %v457 = vshrl.u32 %v456, 7
      %v458 = vsub.s32 0, %v457
      %v459 = vrot.slane %v438, %v458
      %v461 = vmul.f32 %v454, %v459
      %v463 = vlaneseq
      %v464 = vshrl.u32 %v463, 7
      %v465 = vsub.s32 0, %v464
      %v466 = vrot.slane %v439, %v465
      %v468 = vadd.f32 %v461, %v466
      %v469 = vpack.c.bf16 %v468, %v468
      %v470 = vld [vmem:[%s3] sm:$0xf]
      %v471 = vld [vmem:[%s3 + $0x4] sm:$0xf]
      %v472 = vld [vmem:[%s3 + $0x8] sm:$0xf]
      %v473 = vld [vmem:[%s3 + $0xc] sm:$0xf]
      %v474 = vld [vmem:[%s4] sm:$0x1]
      %v476 = vlaneseq
      %v477 = vshrl.u32 %v476, 7
      %v478 = vsub.s32 0, %v477
      %v479 = vrot.slane %v474, %v478
      %v485 = vunpack.c.l.b16 %v470
      %v486 = vunpack.c.l.b16 %v471
      %v487 = vunpack.c.l.b16 %v472
      %v488 = vunpack.c.l.b16 %v473
      %v489 = vpack.c.b16 %v486, %v485
      %v490 = vpack.c.b16 %v488, %v487
      %v494 = vsel %vm440, %v469, 0
      %496 = vmatprep.subr.bf16.mxu0 0
      %497 = vmatpush1.bf16.msra.mxu0 0
      %498 = vmatprep.subr.bf16.mxu0 0
      %499 = vmatpush1.bf16.msra.mxu0 0
      %500 = vmatprep.subr.bf16.mxu0 0
      %501 = vmatpush1.bf16.msra.mxu0 0
      %502 = vmatprep.subr.bf16.mxu0 0
      %503 = vmatpush1.bf16.msra.mxu0 0
      %504 = vmatprep.subr.bf16.mxu0 0
      %505 = vmatpush1.bf16.msra.mxu0 0
      %506 = vmatprep.subr.bf16.mxu0 0
      %507 = vmatpush1.bf16.msra.mxu0 0
      %508 = vmatprep.subr.bf16.mxu0 0
      %509 = vmatpush1.bf16.msra.mxu0 %v490
      %510 = vmatprep.subr.bf16.mxu0 0
      %511 = vmatpush1.bf16.msra.mxu0 %v489
      %512 = vmatprep.subr.bf16.mxu0 0
      %513 = vmatpush2.bf16.msra.mxu0 0
      %514 = vmatprep.subr.bf16.mxu0 0
      %515 = vmatpush2.bf16.msra.mxu0 0
      %516 = vmatprep.subr.bf16.mxu0 0
      %517 = vmatpush2.bf16.msra.mxu0 0
      %518 = vmatprep.subr.bf16.mxu0 0
      %519 = vmatpush2.bf16.msra.mxu0 0
      %520 = vmatprep.subr.bf16.mxu0 0
      %521 = vmatpush2.bf16.msra.mxu0 0
      %522 = vmatprep.subr.bf16.mxu0 0
      %523 = vmatpush2.bf16.msra.mxu0 0
      %524 = vmatprep.subr.bf16.mxu0 0
      %525 = vmatpush2.bf16.msra.mxu0 0
      %526 = vmatprep.subr.bf16.mxu0 0
      %527 = vmatpush2.bf16.msra.mxu0 0
      %528 = vmatprep.mubr.bf16.mxu0 0
      %529 = vmatmul.mubr.bf16.gmra.mxu0 %v494
      %v530 = vpop.f32.mrf.mxu0
      %v531 = vadd.f32 %v479, %v530
      %v532 = vpop.f32.mrf.mxu0
      %v533 = vpop.f32.mrf.mxu0
      %v534 = vpop.f32.mrf.mxu0
      %535 = vdwg.mxu0
      %v536 = vlaneseq
      %v537 = vshrl.u32 %v536, 7
      %v538 = vlaneseq
      %v539 = vand.u32 %v538, 127
      %vm540 = vcmp.gt.s32.totalorder %v539, %v537
      %v541 = vsel %vm540, -1e+30, 0.0
      %v542 = vmul.f32 %v531, 0.35355338
      %v543 = vpack.c.bf16 %v542, %v542
      %v544 = vpack.c.bf16 %v531, %v531
      %546 = vrot.lane.b32.xlu0 %v544, 96
      %v547 = vpop.permute.xlu0 %546
      %vm548 = vcmask 64512
      %v550 = vsel %vm548, %v543, 0
      %v553 = vsel %vm548, %v547, 0
      %555 = vmatprep.subr.bf16.mxu0 0
      %556 = vmatpush1.bf16.xpose.msra.mxu0 0
      %557 = vmatprep.subr.bf16.mxu0 0
      %558 = vmatpush1.bf16.xpose.msra.mxu0 0
      %559 = vmatprep.subr.bf16.mxu0 0
      %560 = vmatpush1.bf16.xpose.msra.mxu0 0
      %561 = vmatprep.subr.bf16.mxu0 0
      %562 = vmatpush1.bf16.xpose.msra.mxu0 0
      %563 = vmatprep.subr.bf16.mxu0 0
      %564 = vmatpush1.bf16.xpose.msra.mxu0 0
      %565 = vmatprep.subr.bf16.mxu0 0
      %566 = vmatpush1.bf16.xpose.msra.mxu0 0
      %567 = vmatprep.subr.bf16.mxu0 0
      %568 = vmatpush1.bf16.xpose.msra.mxu0 0
      %569 = vmatprep.subr.bf16.mxu0 0
      %570 = vmatpush1.bf16.xpose.msra.mxu0 %v553
      %571 = vmatprep.subr.bf16.mxu0 0
      %572 = vmatpush2.bf16.xpose.msra.mxu0 0
      %573 = vmatprep.subr.bf16.mxu0 0
      %574 = vmatpush2.bf16.xpose.msra.mxu0 0
      %575 = vmatprep.subr.bf16.mxu0 0
      %576 = vmatpush2.bf16.xpose.msra.mxu0 0
      %577 = vmatprep.subr.bf16.mxu0 0
      %578 = vmatpush2.bf16.xpose.msra.mxu0 0
      %579 = vmatprep.subr.bf16.mxu0 0
      %580 = vmatpush2.bf16.xpose.msra.mxu0 0
      %581 = vmatprep.subr.bf16.mxu0 0
      %582 = vmatpush2.bf16.xpose.msra.mxu0 0
      %583 = vmatprep.subr.bf16.mxu0 0
      %584 = vmatpush2.bf16.xpose.msra.mxu0 0
      %585 = vmatprep.subr.bf16.mxu0 0
      %586 = vmatpush2.bf16.xpose.msra.mxu0 0
      %587 = vmatprep.mubr.bf16.mxu0 0
      %588 = vmatmul.mubr.bf16.gmra.mxu0 %v550
      %v589 = vpop.f32.mrf.mxu0
      %v590 = vadd.f32 %v541, %v589
      %v591 = vpop.f32.mrf.mxu0
      %v592 = vpop.f32.mrf.mxu0
      %v593 = vpop.f32.mrf.mxu0
      %594 = vdwg.mxu0
      %v595 = vsel %vm548, %v590, -inf
      %596 = vmax.xlane.f32.xlu0 %v595
      %v597 = vpop.xlane.xlu0 %596
      %v598 = vsub.f32 %v590, %v597
      %v599 = vmul.f32 %v598, 1.442695
      %v600 = vpow.pop %v599
      %v601 = vsel %vm548, %v600, 0.0
      %602 = vadd.xlane.f32.xlu0 %v601
      %v603 = vpop.xlane.xlu0 %602
      %v604 = vpack.c.bf16 %v600, %v600
      %605 = vrot.lane.b32.xlu0 %v544, 64
      %v606 = vpop.permute.xlu0 %605
      %v608 = vsel %vm548, %v604, 0
      %vm610 = vcmask 1043456
      %v612 = vsel %vm610, %v606, 0
      %614 = vmatprep.subr.bf16.mxu0 0
      %615 = vmatpush1.bf16.msra.mxu0 0
      %616 = vmatprep.subr.bf16.mxu0 0
      %617 = vmatpush1.bf16.msra.mxu0 0
      %618 = vmatprep.subr.bf16.mxu0 0
      %619 = vmatpush1.bf16.msra.mxu0 0
      %620 = vmatprep.subr.bf16.mxu0 0
      %621 = vmatpush1.bf16.msra.mxu0 0
      %622 = vmatprep.subr.bf16.mxu0 0
      %623 = vmatpush1.bf16.msra.mxu0 0
      %624 = vmatprep.subr.bf16.mxu0 0
      %625 = vmatpush1.bf16.msra.mxu0 0
      %626 = vmatprep.subr.bf16.mxu0 0
      %627 = vmatpush1.bf16.msra.mxu0 0
      %628 = vmatprep.subr.bf16.mxu0 0
      %629 = vmatpush1.bf16.msra.mxu0 %v612
      %630 = vmatprep.subr.bf16.mxu0 0
      %631 = vmatpush2.bf16.msra.mxu0 0
      %632 = vmatprep.subr.bf16.mxu0 0
      %633 = vmatpush2.bf16.msra.mxu0 0
      %634 = vmatprep.subr.bf16.mxu0 0
      %635 = vmatpush2.bf16.msra.mxu0 0
      %636 = vmatprep.subr.bf16.mxu0 0
      %637 = vmatpush2.bf16.msra.mxu0 0
      %638 = vmatprep.subr.bf16.mxu0 0
      %639 = vmatpush2.bf16.msra.mxu0 0
      %640 = vmatprep.subr.bf16.mxu0 0
      %641 = vmatpush2.bf16.msra.mxu0 0
      %642 = vmatprep.subr.bf16.mxu0 0
      %643 = vmatpush2.bf16.msra.mxu0 0
      %644 = vmatprep.subr.bf16.mxu0 0
      %645 = vmatpush2.bf16.msra.mxu0 0
      %646 = vmatprep.mubr.bf16.mxu0 0
      %647 = vmatmul.mubr.bf16.gmra.mxu0 %v608
      %v648 = vpop.f32.mrf.mxu0
      %v649 = vadd.f32 0.0, %v648
      %v650 = vpop.f32.mrf.mxu0
      %v651 = vpop.f32.mrf.mxu0
      %v652 = vpop.f32.mrf.mxu0
      %653 = vdwg.mxu0
      %v654 = vrcp.pop %v603
      %v655 = vmul.f32 %v649, %v654
      %657 = vrot.lane.b32.xlu0 %v543, 120
      %v658 = vpop.permute.xlu0 %657
      %659 = vrot.lane.b32.xlu0 %v544, 88
      %v660 = vpop.permute.xlu0 %659
      %v662 = vsel %vm548, %v658, 0
      %v665 = vsel %vm548, %v660, 0
      %667 = vmatprep.subr.bf16.mxu0 0
      %668 = vmatpush1.bf16.xpose.msra.mxu0 0
      %669 = vmatprep.subr.bf16.mxu0 0
      %670 = vmatpush1.bf16.xpose.msra.mxu0 0
      %671 = vmatprep.subr.bf16.mxu0 0
      %672 = vmatpush1.bf16.xpose.msra.mxu0 0
      %673 = vmatprep.subr.bf16.mxu0 0
      %674 = vmatpush1.bf16.xpose.msra.mxu0 0
      %675 = vmatprep.subr.bf16.mxu0 0
      %676 = vmatpush1.bf16.xpose.msra.mxu0 0
      %677 = vmatprep.subr.bf16.mxu0 0
      %678 = vmatpush1.bf16.xpose.msra.mxu0 0
      %679 = vmatprep.subr.bf16.mxu0 0
      %680 = vmatpush1.bf16.xpose.msra.mxu0 0
      %681 = vmatprep.subr.bf16.mxu0 0
      %682 = vmatpush1.bf16.xpose.msra.mxu0 %v665
      %683 = vmatprep.subr.bf16.mxu0 0
      %684 = vmatpush2.bf16.xpose.msra.mxu0 0
      %685 = vmatprep.subr.bf16.mxu0 0
      %686 = vmatpush2.bf16.xpose.msra.mxu0 0
      %687 = vmatprep.subr.bf16.mxu0 0
      %688 = vmatpush2.bf16.xpose.msra.mxu0 0
      %689 = vmatprep.subr.bf16.mxu0 0
      %690 = vmatpush2.bf16.xpose.msra.mxu0 0
      %691 = vmatprep.subr.bf16.mxu0 0
      %692 = vmatpush2.bf16.xpose.msra.mxu0 0
      %693 = vmatprep.subr.bf16.mxu0 0
      %694 = vmatpush2.bf16.xpose.msra.mxu0 0
      %695 = vmatprep.subr.bf16.mxu0 0
      %696 = vmatpush2.bf16.xpose.msra.mxu0 0
      %697 = vmatprep.subr.bf16.mxu0 0
      %698 = vmatpush2.bf16.xpose.msra.mxu0 0
      %699 = vmatprep.mubr.bf16.mxu0 0
      %700 = vmatmul.mubr.bf16.gmra.mxu0 %v662
      %v701 = vpop.f32.mrf.mxu0
      %v702 = vadd.f32 %v541, %v701
      %v703 = vpop.f32.mrf.mxu0
      %v704 = vpop.f32.mrf.mxu0
      %v705 = vpop.f32.mrf.mxu0
      %706 = vdwg.mxu0
      %v707 = vsel %vm548, %v702, -inf
      %708 = vmax.xlane.f32.xlu0 %v707
      %v709 = vpop.xlane.xlu0 %708
      %v710 = vsub.f32 %v702, %v709
      %v711 = vmul.f32 %v710, 1.442695
      %v712 = vpow.pop %v711
      %v713 = vsel %vm548, %v712, 0.0
      %714 = vadd.xlane.f32.xlu0 %v713
      %v715 = vpop.xlane.xlu0 %714
      %v716 = vpack.c.bf16 %v712, %v712
      %717 = vrot.lane.b32.xlu0 %v544, 56
      %v718 = vpop.permute.xlu0 %717
      %v720 = vsel %vm548, %v716, 0
      %v723 = vsel %vm610, %v718, 0
      %725 = vmatprep.subr.bf16.mxu0 0
      %726 = vmatpush1.bf16.msra.mxu0 0
      %727 = vmatprep.subr.bf16.mxu0 0
      %728 = vmatpush1.bf16.msra.mxu0 0
      %729 = vmatprep.subr.bf16.mxu0 0
      %730 = vmatpush1.bf16.msra.mxu0 0
      %731 = vmatprep.subr.bf16.mxu0 0
      %732 = vmatpush1.bf16.msra.mxu0 0
      %733 = vmatprep.subr.bf16.mxu0 0
      %734 = vmatpush1.bf16.msra.mxu0 0
      %735 = vmatprep.subr.bf16.mxu0 0
      %736 = vmatpush1.bf16.msra.mxu0 0
      %737 = vmatprep.subr.bf16.mxu0 0
      %738 = vmatpush1.bf16.msra.mxu0 0
      %739 = vmatprep.subr.bf16.mxu0 0
      %740 = vmatpush1.bf16.msra.mxu0 %v723
      %741 = vmatprep.subr.bf16.mxu0 0
      %742 = vmatpush2.bf16.msra.mxu0 0
      %743 = vmatprep.subr.bf16.mxu0 0
      %744 = vmatpush2.bf16.msra.mxu0 0
      %745 = vmatprep.subr.bf16.mxu0 0
      %746 = vmatpush2.bf16.msra.mxu0 0
      %747 = vmatprep.subr.bf16.mxu0 0
      %748 = vmatpush2.bf16.msra.mxu0 0
      %749 = vmatprep.subr.bf16.mxu0 0
      %750 = vmatpush2.bf16.msra.mxu0 0
      %751 = vmatprep.subr.bf16.mxu0 0
      %752 = vmatpush2.bf16.msra.mxu0 0
      %753 = vmatprep.subr.bf16.mxu0 0
      %754 = vmatpush2.bf16.msra.mxu0 0
      %755 = vmatprep.subr.bf16.mxu0 0
      %756 = vmatpush2.bf16.msra.mxu0 0
      %757 = vmatprep.mubr.bf16.mxu0 0
      %758 = vmatmul.mubr.bf16.gmra.mxu0 %v720
      %v759 = vpop.f32.mrf.mxu0
      %v760 = vadd.f32 0.0, %v759
      %v761 = vpop.f32.mrf.mxu0
      %v762 = vpop.f32.mrf.mxu0
      %v763 = vpop.f32.mrf.mxu0
      %764 = vdwg.mxu0
      %v765 = vrcp.pop %v715
      %v766 = vmul.f32 %v760, %v765
      %767 = vrot.lane.b32.xlu0 %v543, 112
      %v768 = vpop.permute.xlu0 %767
      %769 = vrot.lane.b32.xlu0 %v544, 80
      %v770 = vpop.permute.xlu0 %769
      %v772 = vsel %vm548, %v768, 0
      %v775 = vsel %vm548, %v770, 0
      %777 = vmatprep.subr.bf16.mxu0 0
      %778 = vmatpush1.bf16.xpose.msra.mxu0 0
      %779 = vmatprep.subr.bf16.mxu0 0
      %780 = vmatpush1.bf16.xpose.msra.mxu0 0
      %781 = vmatprep.subr.bf16.mxu0 0
      %782 = vmatpush1.bf16.xpose.msra.mxu0 0
      %783 = vmatprep.subr.bf16.mxu0 0
      %784 = vmatpush1.bf16.xpose.msra.mxu0 0
      %785 = vmatprep.subr.bf16.mxu0 0
      %786 = vmatpush1.bf16.xpose.msra.mxu0 0
      %787 = vmatprep.subr.bf16.mxu0 0
      %788 = vmatpush1.bf16.xpose.msra.mxu0 0
      %789 = vmatprep.subr.bf16.mxu0 0
      %790 = vmatpush1.bf16.xpose.msra.mxu0 0
      %791 = vmatprep.subr.bf16.mxu0 0
      %792 = vmatpush1.bf16.xpose.msra.mxu0 %v775
      %793 = vmatprep.subr.bf16.mxu0 0
      %794 = vmatpush2.bf16.xpose.msra.mxu0 0
      %795 = vmatprep.subr.bf16.mxu0 0
      %796 = vmatpush2.bf16.xpose.msra.mxu0 0
      %797 = vmatprep.subr.bf16.mxu0 0
      %798 = vmatpush2.bf16.xpose.msra.mxu0 0
      %799 = vmatprep.subr.bf16.mxu0 0
      %800 = vmatpush2.bf16.xpose.msra.mxu0 0
      %801 = vmatprep.subr.bf16.mxu0 0
      %802 = vmatpush2.bf16.xpose.msra.mxu0 0
      %803 = vmatprep.subr.bf16.mxu0 0
      %804 = vmatpush2.bf16.xpose.msra.mxu0 0
      %805 = vmatprep.subr.bf16.mxu0 0
      %806 = vmatpush2.bf16.xpose.msra.mxu0 0
      %807 = vmatprep.subr.bf16.mxu0 0
      %808 = vmatpush2.bf16.xpose.msra.mxu0 0
      %809 = vmatprep.mubr.bf16.mxu0 0
      %810 = vmatmul.mubr.bf16.gmra.mxu0 %v772
      %v811 = vpop.f32.mrf.mxu0
      %v812 = vadd.f32 %v541, %v811
      %v813 = vpop.f32.mrf.mxu0
      %v814 = vpop.f32.mrf.mxu0
      %v815 = vpop.f32.mrf.mxu0
      %816 = vdwg.mxu0
      %v817 = vsel %vm548, %v812, -inf
      %818 = vmax.xlane.f32.xlu0 %v817
      %v819 = vpop.xlane.xlu0 %818
      %v820 = vsub.f32 %v812, %v819
      %v821 = vmul.f32 %v820, 1.442695
      %v822 = vpow.pop %v821
      %v823 = vsel %vm548, %v822, 0.0
      %824 = vadd.xlane.f32.xlu0 %v823
      %v825 = vpop.xlane.xlu0 %824
      %v826 = vpack.c.bf16 %v822, %v822
      %827 = vrot.lane.b32.xlu0 %v544, 48
      %v828 = vpop.permute.xlu0 %827
      %v830 = vsel %vm548, %v826, 0
      %v833 = vsel %vm610, %v828, 0
      %835 = vmatprep.subr.bf16.mxu0 0
      %836 = vmatpush1.bf16.msra.mxu0 0
      %837 = vmatprep.subr.bf16.mxu0 0
      %838 = vmatpush1.bf16.msra.mxu0 0
      %839 = vmatprep.subr.bf16.mxu0 0
      %840 = vmatpush1.bf16.msra.mxu0 0
      %841 = vmatprep.subr.bf16.mxu0 0
      %842 = vmatpush1.bf16.msra.mxu0 0
      %843 = vmatprep.subr.bf16.mxu0 0
      %844 = vmatpush1.bf16.msra.mxu0 0
      %845 = vmatprep.subr.bf16.mxu0 0
      %846 = vmatpush1.bf16.msra.mxu0 0
      %847 = vmatprep.subr.bf16.mxu0 0
      %848 = vmatpush1.bf16.msra.mxu0 0
      %849 = vmatprep.subr.bf16.mxu0 0
      %850 = vmatpush1.bf16.msra.mxu0 %v833
      %851 = vmatprep.subr.bf16.mxu0 0
      %852 = vmatpush2.bf16.msra.mxu0 0
      %853 = vmatprep.subr.bf16.mxu0 0
      %854 = vmatpush2.bf16.msra.mxu0 0
      %855 = vmatprep.subr.bf16.mxu0 0
      %856 = vmatpush2.bf16.msra.mxu0 0
      %857 = vmatprep.subr.bf16.mxu0 0
      %858 = vmatpush2.bf16.msra.mxu0 0
      %859 = vmatprep.subr.bf16.mxu0 0
      %860 = vmatpush2.bf16.msra.mxu0 0
      %861 = vmatprep.subr.bf16.mxu0 0
      %862 = vmatpush2.bf16.msra.mxu0 0
      %863 = vmatprep.subr.bf16.mxu0 0
      %864 = vmatpush2.bf16.msra.mxu0 0
      %865 = vmatprep.subr.bf16.mxu0 0
      %866 = vmatpush2.bf16.msra.mxu0 0
      %867 = vmatprep.mubr.bf16.mxu0 0
      %868 = vmatmul.mubr.bf16.gmra.mxu0 %v830
      %v869 = vpop.f32.mrf.mxu0
      %v870 = vadd.f32 0.0, %v869
      %v871 = vpop.f32.mrf.mxu0
      %v872 = vpop.f32.mrf.mxu0
      %v873 = vpop.f32.mrf.mxu0
      %874 = vdwg.mxu0
      %v875 = vrcp.pop %v825
      %v876 = vmul.f32 %v870, %v875
      %877 = vrot.lane.b32.xlu0 %v543, 104
      %v878 = vpop.permute.xlu0 %877
      %879 = vrot.lane.b32.xlu0 %v544, 72
      %v880 = vpop.permute.xlu0 %879
      %v882 = vsel %vm548, %v878, 0
      %v885 = vsel %vm548, %v880, 0
      %887 = vmatprep.subr.bf16.mxu0 0
      %888 = vmatpush1.bf16.xpose.msra.mxu0 0
      %889 = vmatprep.subr.bf16.mxu0 0
      %890 = vmatpush1.bf16.xpose.msra.mxu0 0
      %891 = vmatprep.subr.bf16.mxu0 0
      %892 = vmatpush1.bf16.xpose.msra.mxu0 0
      %893 = vmatprep.subr.bf16.mxu0 0
      %894 = vmatpush1.bf16.xpose.msra.mxu0 0
      %895 = vmatprep.subr.bf16.mxu0 0
      %896 = vmatpush1.bf16.xpose.msra.mxu0 0
      %897 = vmatprep.subr.bf16.mxu0 0
      %898 = vmatpush1.bf16.xpose.msra.mxu0 0
      %899 = vmatprep.subr.bf16.mxu0 0
      %900 = vmatpush1.bf16.xpose.msra.mxu0 0
      %901 = vmatprep.subr.bf16.mxu0 0
      %902 = vmatpush1.bf16.xpose.msra.mxu0 %v885
      %903 = vmatprep.subr.bf16.mxu0 0
      %904 = vmatpush2.bf16.xpose.msra.mxu0 0
      %905 = vmatprep.subr.bf16.mxu0 0
      %906 = vmatpush2.bf16.xpose.msra.mxu0 0
      %907 = vmatprep.subr.bf16.mxu0 0
      %908 = vmatpush2.bf16.xpose.msra.mxu0 0
      %909 = vmatprep.subr.bf16.mxu0 0
      %910 = vmatpush2.bf16.xpose.msra.mxu0 0
      %911 = vmatprep.subr.bf16.mxu0 0
      %912 = vmatpush2.bf16.xpose.msra.mxu0 0
      %913 = vmatprep.subr.bf16.mxu0 0
      %914 = vmatpush2.bf16.xpose.msra.mxu0 0
      %915 = vmatprep.subr.bf16.mxu0 0
      %916 = vmatpush2.bf16.xpose.msra.mxu0 0
      %917 = vmatprep.subr.bf16.mxu0 0
      %918 = vmatpush2.bf16.xpose.msra.mxu0 0
      %919 = vmatprep.mubr.bf16.mxu0 0
      %920 = vmatmul.mubr.bf16.gmra.mxu0 %v882
      %v921 = vpop.f32.mrf.mxu0
      %v922 = vadd.f32 %v541, %v921
      %v923 = vpop.f32.mrf.mxu0
      %v924 = vpop.f32.mrf.mxu0
      %v925 = vpop.f32.mrf.mxu0
      %926 = vdwg.mxu0
      %v927 = vsel %vm548, %v922, -inf
      %928 = vmax.xlane.f32.xlu0 %v927
      %v929 = vpop.xlane.xlu0 %928
      %v930 = vsub.f32 %v922, %v929
      %v931 = vmul.f32 %v930, 1.442695
      %v932 = vpow.pop %v931
      %v933 = vsel %vm548, %v932, 0.0
      %934 = vadd.xlane.f32.xlu0 %v933
      %v935 = vpop.xlane.xlu0 %934
      %v936 = vpack.c.bf16 %v932, %v932
      %937 = vrot.lane.b32.xlu0 %v544, 40
      %v938 = vpop.permute.xlu0 %937
      %v940 = vsel %vm548, %v936, 0
      %v943 = vsel %vm610, %v938, 0
      %945 = vmatprep.subr.bf16.mxu0 0
      %946 = vmatpush1.bf16.msra.mxu0 0
      %947 = vmatprep.subr.bf16.mxu0 0
      %948 = vmatpush1.bf16.msra.mxu0 0
      %949 = vmatprep.subr.bf16.mxu0 0
      %950 = vmatpush1.bf16.msra.mxu0 0
      %951 = vmatprep.subr.bf16.mxu0 0
      %952 = vmatpush1.bf16.msra.mxu0 0
      %953 = vmatprep.subr.bf16.mxu0 0
      %954 = vmatpush1.bf16.msra.mxu0 0
      %955 = vmatprep.subr.bf16.mxu0 0
      %956 = vmatpush1.bf16.msra.mxu0 0
      %957 = vmatprep.subr.bf16.mxu0 0
      %958 = vmatpush1.bf16.msra.mxu0 0
      %959 = vmatprep.subr.bf16.mxu0 0
      %960 = vmatpush1.bf16.msra.mxu0 %v943
      %961 = vmatprep.subr.bf16.mxu0 0
      %962 = vmatpush2.bf16.msra.mxu0 0
      %963 = vmatprep.subr.bf16.mxu0 0
      %964 = vmatpush2.bf16.msra.mxu0 0
      %965 = vmatprep.subr.bf16.mxu0 0
      %966 = vmatpush2.bf16.msra.mxu0 0
      %967 = vmatprep.subr.bf16.mxu0 0
      %968 = vmatpush2.bf16.msra.mxu0 0
      %969 = vmatprep.subr.bf16.mxu0 0
      %970 = vmatpush2.bf16.msra.mxu0 0
      %971 = vmatprep.subr.bf16.mxu0 0
      %972 = vmatpush2.bf16.msra.mxu0 0
      %973 = vmatprep.subr.bf16.mxu0 0
      %974 = vmatpush2.bf16.msra.mxu0 0
      %975 = vmatprep.subr.bf16.mxu0 0
      %976 = vmatpush2.bf16.msra.mxu0 0
      %977 = vmatprep.mubr.bf16.mxu0 0
      %978 = vmatmul.mubr.bf16.gmra.mxu0 %v940
      %v979 = vpop.f32.mrf.mxu0
      %v980 = vadd.f32 0.0, %v979
      %v981 = vpop.f32.mrf.mxu0
      %v982 = vpop.f32.mrf.mxu0
      %v983 = vpop.f32.mrf.mxu0
      %984 = vdwg.mxu0
      %v985 = vrcp.pop %v935
      %v986 = vmul.f32 %v980, %v985
      %988 = vrot.lane.b32.xlu0 %v766, 8
      %v989 = vpop.permute.xlu0 %988
      %992 = vrot.lane.b32.xlu0 %v876, 16
      %v993 = vpop.permute.xlu0 %992
      %996 = vrot.lane.b32.xlu0 %v986, 24
      %v997 = vpop.permute.xlu0 %996
      %v999 = vsel %vm548, %v655, %v989
      %vm1000 = vcmask 130048
      %v1001 = vsel %vm1000, %v999, %v993
      %vm1002 = vcmask 195584
      %v1003 = vsel %vm1002, %v1001, %v997
      %v1004 = vpack.c.bf16 %v1003, %v1003
      %v1005 = vld [vmem:[%s5] sm:$0xf]
      %v1006 = vld [vmem:[%s5 + $0x4] sm:$0xf]
      %v1007 = vld [vmem:[%s5 + $0x8] sm:$0xf]
      %v1008 = vld [vmem:[%s5 + $0xc] sm:$0xf]
      %v1009 = vld [vmem:[%s6] sm:$0x1]
      %v1011 = vlaneseq
      %v1012 = vshrl.u32 %v1011, 7
      %v1013 = vsub.s32 0, %v1012
      %v1014 = vrot.slane %v1009, %v1013
      %v1020 = vunpack.c.l.b16 %v1005
      %v1021 = vunpack.c.l.b16 %v1006
      %v1022 = vunpack.c.l.b16 %v1007
      %v1023 = vunpack.c.l.b16 %v1008
      %v1024 = vpack.c.b16 %v1021, %v1020
      %v1025 = vpack.c.b16 %v1023, %v1022
      %v1029 = vsel %vm440, %v1004, 0
      %1031 = vmatprep.subr.bf16.mxu0 0
      %1032 = vmatpush1.bf16.msra.mxu0 0
      %1033 = vmatprep.subr.bf16.mxu0 0
      %1034 = vmatpush1.bf16.msra.mxu0 0
      %1035 = vmatprep.subr.bf16.mxu0 0
      %1036 = vmatpush1.bf16.msra.mxu0 0
      %1037 = vmatprep.subr.bf16.mxu0 0
      %1038 = vmatpush1.bf16.msra.mxu0 0
      %1039 = vmatprep.subr.bf16.mxu0 0
      %1040 = vmatpush1.bf16.msra.mxu0 0
      %1041 = vmatprep.subr.bf16.mxu0 0
      %1042 = vmatpush1.bf16.msra.mxu0 0
      %1043 = vmatprep.subr.bf16.mxu0 0
      %1044 = vmatpush1.bf16.msra.mxu0 %v1025
      %1045 = vmatprep.subr.bf16.mxu0 0
      %1046 = vmatpush1.bf16.msra.mxu0 %v1024
      %1047 = vmatprep.subr.bf16.mxu0 0
      %1048 = vmatpush2.bf16.msra.mxu0 0
      %1049 = vmatprep.subr.bf16.mxu0 0
      %1050 = vmatpush2.bf16.msra.mxu0 0
      %1051 = vmatprep.subr.bf16.mxu0 0
      %1052 = vmatpush2.bf16.msra.mxu0 0
      %1053 = vmatprep.subr.bf16.mxu0 0
      %1054 = vmatpush2.bf16.msra.mxu0 0
      %1055 = vmatprep.subr.bf16.mxu0 0
      %1056 = vmatpush2.bf16.msra.mxu0 0
      %1057 = vmatprep.subr.bf16.mxu0 0
      %1058 = vmatpush2.bf16.msra.mxu0 0
      %1059 = vmatprep.subr.bf16.mxu0 0
      %1060 = vmatpush2.bf16.msra.mxu0 0
      %1061 = vmatprep.subr.bf16.mxu0 0
      %1062 = vmatpush2.bf16.msra.mxu0 0
      %1063 = vmatprep.mubr.bf16.mxu0 0
      %1064 = vmatmul.mubr.bf16.gmra.mxu0 %v1029
      %v1065 = vpop.f32.mrf.mxu0
      %v1066 = vadd.f32 %v1014, %v1065
      %v1067 = vpop.f32.mrf.mxu0
      %v1068 = vpop.f32.mrf.mxu0
      %v1069 = vpop.f32.mrf.mxu0
      %1070 = vdwg.mxu0
      %v1071 = vadd.f32 %v437, %v1066
      %v1072 = vld [vmem:[%s7] sm:$0x1]
      %v1073 = vld [vmem:[%s8] sm:$0x1]
      %v1074 = vsel %vm440, %v1071, 0.0
      %1075 = vadd.xlane.f32.xlu0 %v1074
      %v1076 = vpop.xlane.xlu0 %1075
      %v1077 = vmul.f32 %v1076, %v444
      %v1078 = vsub.f32 %v1071, %v1077
      %v1079 = vmul.f32 %v1078, %v1078
      %v1080 = vsel %vm440, %v1079, 0.0
      %1081 = vadd.xlane.f32.xlu0 %v1080
      %v1082 = vpop.xlane.xlu0 %1081
      %v1083 = vmul.f32 %v1082, %v444
      %v1084 = vadd.f32 %v1083, 1e-05
      %v1085 = vrsqrt.pop %v1084
      %v1086 = vmul.f32 %v1078, %v1085
      %v1088 = vlaneseq
      %v1089 = vshrl.u32 %v1088, 7
      %v1090 = vsub.s32 0, %v1089
      %v1091 = vrot.slane %v1072, %v1090
      %v1093 = vmul.f32 %v1086, %v1091
      %v1095 = vlaneseq
      %v1096 = vshrl.u32 %v1095, 7
      %v1097 = vsub.s32 0, %v1096
      %v1098 = vrot.slane %v1073, %v1097
      %v1100 = vadd.f32 %v1093, %v1098
      %v1101 = vpack.c.bf16 %v1100, %v1100
      %v1102 = vld [vmem:[%s9] sm:$0xf]
      %v1103 = vld [vmem:[%s9 + $0x4] sm:$0xf]
      %v1104 = vld [vmem:[%s9 + $0x8] sm:$0xf]
      %v1105 = vld [vmem:[%s9 + $0xc] sm:$0xf]
      %v1106 = vld [vmem:[%s10] sm:$0x1]
      %v1108 = vlaneseq
      %v1109 = vshrl.u32 %v1108, 7
      %v1110 = vsub.s32 0, %v1109
      %v1111 = vrot.slane %v1106, %v1110
      %v1117 = vunpack.c.l.b16 %v1102
      %v1118 = vunpack.c.l.b16 %v1103
      %v1119 = vunpack.c.l.b16 %v1104
      %v1120 = vunpack.c.l.b16 %v1105
      %v1121 = vpack.c.b16 %v1118, %v1117
      %v1122 = vpack.c.b16 %v1120, %v1119
      %v1126 = vsel %vm440, %v1101, 0
      %1128 = vmatprep.subr.bf16.mxu0 0
      %1129 = vmatpush1.bf16.msra.mxu0 0
      %1130 = vmatprep.subr.bf16.mxu0 0
      %1131 = vmatpush1.bf16.msra.mxu0 0
      %1132 = vmatprep.subr.bf16.mxu0 0
      %1133 = vmatpush1.bf16.msra.mxu0 0
      %1134 = vmatprep.subr.bf16.mxu0 0
      %1135 = vmatpush1.bf16.msra.mxu0 0
      %1136 = vmatprep.subr.bf16.mxu0 0
      %1137 = vmatpush1.bf16.msra.mxu0 0
      %1138 = vmatprep.subr.bf16.mxu0 0
      %1139 = vmatpush1.bf16.msra.mxu0 0
      %1140 = vmatprep.subr.bf16.mxu0 0
      %1141 = vmatpush1.bf16.msra.mxu0 %v1122
      %1142 = vmatprep.subr.bf16.mxu0 0
      %1143 = vmatpush1.bf16.msra.mxu0 %v1121
      %1144 = vmatprep.subr.bf16.mxu0 0
      %1145 = vmatpush2.bf16.msra.mxu0 0
      %1146 = vmatprep.subr.bf16.mxu0 0
      %1147 = vmatpush2.bf16.msra.mxu0 0
      %1148 = vmatprep.subr.bf16.mxu0 0
      %1149 = vmatpush2.bf16.msra.mxu0 0
      %1150 = vmatprep.subr.bf16.mxu0 0
      %1151 = vmatpush2.bf16.msra.mxu0 0
      %1152 = vmatprep.subr.bf16.mxu0 0
      %1153 = vmatpush2.bf16.msra.mxu0 0
      %1154 = vmatprep.subr.bf16.mxu0 0
      %1155 = vmatpush2.bf16.msra.mxu0 0
      %1156 = vmatprep.subr.bf16.mxu0 0
      %1157 = vmatpush2.bf16.msra.mxu0 0
      %1158 = vmatprep.subr.bf16.mxu0 0
      %1159 = vmatpush2.bf16.msra.mxu0 0
      %1160 = vmatprep.mubr.bf16.mxu0 0
      %1161 = vmatmul.mubr.bf16.gmra.mxu0 %v1126
      %v1162 = vpop.f32.mrf.mxu0
      %v1163 = vadd.f32 %v1111, %v1162
      %v1164 = vpop.f32.mrf.mxu0
      %v1165 = vpop.f32.mrf.mxu0
      %v1166 = vpop.f32.mrf.mxu0
      %1167 = vdwg.mxu0
      %v1168 = vmul.f32 %v1163, 1.702
      %v1169 = vxor.u32 %v1168, 2147483648
      %v1170 = vmul.f32 %v1169, 1.442695
      %v1171 = vpow.pop %v1170
      %v1172 = vadd.f32 %v1171, 1.0
      %v1173 = vrcp.pop %v1172
      %v1174 = vmul.f32 1.0, %v1173
      %v1175 = vmul.f32 %v1163, %v1174
      %v1176 = vpack.c.bf16 %v1175, %v1175
      %v1177 = vld [vmem:[%s11] sm:$0xf]
      %v1178 = vld [vmem:[%s11 + $0x4] sm:$0xf]
      %v1179 = vld [vmem:[%s11 + $0x8] sm:$0xf]
      %v1180 = vld [vmem:[%s11 + $0xc] sm:$0xf]
      %v1181 = vld [vmem:[%s11 + $0x10] sm:$0xf]
      %v1182 = vld [vmem:[%s11 + $0x14] sm:$0xf]
      %v1183 = vld [vmem:[%s11 + $0x18] sm:$0xf]
      %v1184 = vld [vmem:[%s11 + $0x1c] sm:$0xf]
      %v1185 = vld [vmem:[%s11 + $0x20] sm:$0xf]
      %v1186 = vld [vmem:[%s11 + $0x24] sm:$0xf]
      %v1187 = vld [vmem:[%s11 + $0x28] sm:$0xf]
      %v1188 = vld [vmem:[%s11 + $0x2c] sm:$0xf]
      %v1189 = vld [vmem:[%s11 + $0x30] sm:$0xf]
      %v1190 = vld [vmem:[%s11 + $0x34] sm:$0xf]
      %v1191 = vld [vmem:[%s11 + $0x38] sm:$0xf]
      %v1192 = vld [vmem:[%s11 + $0x3c] sm:$0xf]
      %v1193 = vld [vmem:[%s12] sm:$0x1]
      %v1195 = vlaneseq
      %v1196 = vshrl.u32 %v1195, 7
      %v1197 = vsub.s32 0, %v1196
      %v1198 = vrot.slane %v1193, %v1197
      %v1216 = vunpack.c.l.b16 %v1177
      %v1217 = vunpack.c.l.b16 %v1178
      %v1218 = vunpack.c.l.b16 %v1179
      %v1219 = vunpack.c.l.b16 %v1180
      %v1220 = vunpack.c.l.b16 %v1181
      %v1221 = vunpack.c.l.b16 %v1182
      %v1222 = vunpack.c.l.b16 %v1183
      %v1223 = vunpack.c.l.b16 %v1184
      %v1224 = vunpack.c.l.b16 %v1185
      %v1225 = vunpack.c.l.b16 %v1186
      %v1226 = vunpack.c.l.b16 %v1187
      %v1227 = vunpack.c.l.b16 %v1188
      %v1228 = vunpack.c.l.b16 %v1189
      %v1229 = vunpack.c.l.b16 %v1190
      %v1230 = vunpack.c.l.b16 %v1191
      %v1231 = vunpack.c.l.b16 %v1192
      %v1232 = vpack.c.b16 %v1217, %v1216
      %v1233 = vpack.c.b16 %v1219, %v1218
      %v1234 = vpack.c.b16 %v1221, %v1220
      %v1235 = vpack.c.b16 %v1223, %v1222
      %v1236 = vpack.c.b16 %v1225, %v1224
      %v1237 = vpack.c.b16 %v1227, %v1226
      %v1238 = vpack.c.b16 %v1229, %v1228
      %v1239 = vpack.c.b16 %v1231, %v1230
      %1248 = vmatprep.subr.bf16.mxu0 0
      %1249 = vmatpush1.bf16.msra.mxu0 %v1239
      %1250 = vmatprep.subr.bf16.mxu0 0
      %1251 = vmatpush1.bf16.msra.mxu0 %v1238
      %1252 = vmatprep.subr.bf16.mxu0 0
      %1253 = vmatpush1.bf16.msra.mxu0 %v1237
      %1254 = vmatprep.subr.bf16.mxu0 0
      %1255 = vmatpush1.bf16.msra.mxu0 %v1236
      %1256 = vmatprep.subr.bf16.mxu0 0
      %1257 = vmatpush1.bf16.msra.mxu0 %v1235
      %1258 = vmatprep.subr.bf16.mxu0 0
      %1259 = vmatpush1.bf16.msra.mxu0 %v1234
      %1260 = vmatprep.subr.bf16.mxu0 0
      %1261 = vmatpush1.bf16.msra.mxu0 %v1233
      %1262 = vmatprep.subr.bf16.mxu0 0
      %1263 = vmatpush1.bf16.msra.mxu0 %v1232
      %1264 = vmatprep.subr.bf16.mxu0 0
      %1265 = vmatpush2.bf16.msra.mxu0 0
      %1266 = vmatprep.subr.bf16.mxu0 0
      %1267 = vmatpush2.bf16.msra.mxu0 0
      %1268 = vmatprep.subr.bf16.mxu0 0
      %1269 = vmatpush2.bf16.msra.mxu0 0
      %1270 = vmatprep.subr.bf16.mxu0 0
      %1271 = vmatpush2.bf16.msra.mxu0 0
      %1272 = vmatprep.subr.bf16.mxu0 0
      %1273 = vmatpush2.bf16.msra.mxu0 0
      %1274 = vmatprep.subr.bf16.mxu0 0
      %1275 = vmatpush2.bf16.msra.mxu0 0
      %1276 = vmatprep.subr.bf16.mxu0 0
      %1277 = vmatpush2.bf16.msra.mxu0 0
      %1278 = vmatprep.subr.bf16.mxu0 0
      %1279 = vmatpush2.bf16.msra.mxu0 0
      %1280 = vmatprep.mubr.bf16.mxu0 0
      %1281 = vmatmul.mubr.bf16.gmra.mxu0 %v1176
      %v1282 = vpop.f32.mrf.mxu0
      %v1283 = vadd.f32 %v1198, %v1282
      %v1284 = vpop.f32.mrf.mxu0
      %v1285 = vpop.f32.mrf.mxu0
      %v1286 = vpop.f32.mrf.mxu0
      %1287 = vdwg.mxu0
      %v1288 = vadd.f32 %v1071, %v1283
      %1289 = vst.msk [vmem:[%s435] sm:$0xff] %vm440, %v1288
      %p1290 = scmp.lt.s32.totalorder %s24, 1
      %s1291 = scalar_select %p1290, %s24, 1
      %s1292 = smul.addr %s1291, 8
      %s1293 = scalar_lea.vmem %s13, %s1292
      // Predicated region
      $region73: #{text_encoder_forward.4} parent=71 // pred_check
        %p1294 = pneg %p320
      $region74: #{text_encoder_forward.4} parent=71 // pred_check_branch
        %1296 = sbr.rel (%p1294) target = $region76
      $region75: #{text_encoder_forward.4} parent=71 // pred_region
        _
      $region76: #{text_encoder_forward.4} parent=71 // pred_fallthru
        _
    $region72: #{text_encoder_forward.4} parent=5 // pred_fallthru
      _
    %p1297 = scmp.le.s32.totalorder 2, %s19
    // Predicated region
    $region77: #{text_encoder_forward.4} parent=5 // pred_check
      %p1298 = pneg %p1297
    $region78: #{text_encoder_forward.4} parent=5 // pred_check_branch
      %1300 = sbr.rel (%p1298) target = $region80
    $region79: #{text_encoder_forward.4} parent=5 // pred_region
      %s1301 = ssub.s32 %s19, 2
      // Predicated region
      $region81: #{text_encoder_forward.4} parent=79 // pred_check
        %p1302 = pneg %p326
      $region82: #{text_encoder_forward.4} parent=79 // pred_check_branch
        %1304 = sbr.rel (%p1302) target = $region84
      $region83: #{text_encoder_forward.4} parent=79 // pred_region
        %p1305 = scmp.lt.s32.totalorder %s25, 1
        %s1306 = scalar_select %p1305, %s25, 1
        %s1307 = smul.addr %s1306, 8
        %s1308 = scalar_lea.vmem %s13, %s1307
      $region84: #{text_encoder_forward.4} parent=79 // pred_fallthru
        _
    $region80: #{text_encoder_forward.4} parent=5 // pred_fallthru
      _
  $region6: #{text_encoder_forward.4} parent=0 // loop_footer
    %s23 = sadd.s32 1, %s19
  $region7: #{text_encoder_forward.4} parent=0 // loop_footer_branch
    %18 = sbr.rel target = $region3
  $region8: #{text_encoder_forward.4} parent=0 // loop_exit
    _

// kernel: text_encoder_forward.3
$region0: #{text_encoder_forward.3}
  #allocation0 [shape = 'u32[]', space=smem, size = 0x4, offset = 0x4, fixed_abs, tag = 'smem constant byte address 0x4 - core index']
  #allocation1 [shape = 'u32[144,128]{1,0:T(1,128)}', space=vmem, size = 0x12000, scoped, tag = 'internal scratch']
  %s0 = inlined_call_operand.hbm [shape: f32[2,8,32], index: 0, kind: input, shape index: {}]
  %s1 = inlined_call_operand.hbm [shape: f32[8,32], index: 1, kind: input, shape index: {}]
  %s2 = inlined_call_operand.vmem [shape: f32[1,32], index: 2, kind: input, shape index: {}, may-alias: {2,8}]
  %s3 = inlined_call_operand.vmem [shape: f32[1,32], index: 3, kind: input, shape index: {}, may-alias: {3,9}]
  %s4 = inlined_call_operand.vmem [shape: bf16[32,96], index: 4, kind: input, shape index: {}]
  %s5 = inlined_call_operand.vmem [shape: f32[1,96], index: 5, kind: input, shape index: {}]
  %s6 = inlined_call_operand.vmem [shape: bf16[32,32], index: 6, kind: input, shape index: {}]
  %s7 = inlined_call_operand.hbm [shape: f32[1,32], index: 7, kind: input, shape index: {}]
  %s8 = inlined_call_operand.vmem [shape: f32[1,32], index: 8, kind: input, shape index: {}, may-alias: {2,8}]
  %s9 = inlined_call_operand.vmem [shape: f32[1,32], index: 9, kind: input, shape index: {}, may-alias: {3,9}]
  %s10 = inlined_call_operand.hbm [shape: bf16[32,128], index: 10, kind: input, shape index: {}]
  %s11 = inlined_call_operand.hbm [shape: f32[1,128], index: 11, kind: input, shape index: {}]
  %s12 = inlined_call_operand.hbm [shape: bf16[128,32], index: 12, kind: input, shape index: {}]
  %s13 = inlined_call_operand.hbm [shape: f32[1,32], index: 13, kind: input, shape index: {}]
  %s14 = inlined_call_operand.vmem [shape: f32[2,8,32], index: 14, kind: output, shape index: {}]
  %s15 = sld [smem:[#allocation0]]
  $region117: #{text_encoder_forward.3} parent=0
    _
  %s17 = ssub.s32 1, %s15
  %s18 = scalar_select 0, %s17, %s15
  $region1: #{text_encoder_forward.3} parent=0
    #allocation2 [shape = 'u8[8192]{0}', space=vmem, size = 0x2000, scoped, tag = 'input window, operand 0']
    #allocation3 [shape = 's32[2]{0}', space=sflag, size = 0x8, scoped, tag = 'scoped memory for text_encoder_forward.3']
    #allocation4 [shape = 'u8[4096]{0}', space=vmem, size = 0x1000, scoped, tag = 'input window, operand 1, single buffered']
    #allocation5 [shape = 's32[1]{0}', space=sflag, size = 0x4, scoped, tag = 'scoped memory for text_encoder_forward.3']
    #allocation6 [shape = 'u8[512]{0}', space=vmem, size = 0x400, scoped, tag = 'input window, operand 7, single buffered']
    #allocation7 [shape = 'u8[8192]{0}', space=vmem, size = 0x2000, scoped, tag = 'input window, operand 10, single buffered']
    #allocation8 [shape = 's32[1]{0}', space=sflag, size = 0x4, scoped, tag = 'scoped memory for text_encoder_forward.3']
    #allocation9 [shape = 'u8[512]{0}', space=vmem, size = 0x400, scoped, tag = 'input window, operand 11, single buffered']
    #allocation10 [shape = 'u8[32768]{0}', space=vmem, size = 0x8000, scoped, tag = 'input window, operand 12, single buffered']
    #allocation11 [shape = 's32[1]{0}', space=sflag, size = 0x4, scoped, tag = 'scoped memory for text_encoder_forward.3']
    #allocation12 [shape = 'u8[512]{0}', space=vmem, size = 0x400, scoped, tag = 'input window, operand 13, single buffered']
    %19 = vsyncpa [#allocation3], 0
    %s20 = scalar_lea.sflag [#allocation3], 1
    %21 = vsyncpa %s20, 0
    %22 = vsyncpa [#allocation5], 0
    %23 = vsyncpa [#allocation8], 0
    %24 = vsyncpa [#allocation11], 0
    loop: start=0, step=1, limit=4
    $region2: #{text_encoder_forward.3} parent=1 // loop_pre_header
      _
    $region3: #{text_encoder_forward.3} parent=1 // loop_header
      %s26 = sphi 0, %s30
      %p27 = scmp.ge.s32.totalorder %s26, 4
      %s36 = sphi 0, %s38
      %s39 = sphi 0, %s36
      %s40 = sphi 0, %s39
      %s56 = sphi 0, %s40
      %s60 = sphi 0, %s60
      %s62 = sphi 0, %s60
      %s63 = sphi 0, %s62
      %s77 = sphi 0, %s63
      %s81 = sphi 0, %s81
      %s83 = sphi 0, %s81
      %s84 = sphi 0, %s83
      %s98 = sphi 0, %s84
      %s102 = sphi 0, %s102
      %s104 = sphi 0, %s102
      %s105 = sphi 0, %s104
      %s119 = sphi 0, %s105
      %s123 = sphi 0, %s123
      %s125 = sphi 0, %s123
      %s126 = sphi 0, %s125
      %s140 = sphi 0, %s126
      %s144 = sphi 0, %s144
      %s146 = sphi 0, %s144
      %s147 = sphi 0, %s146
      %s161 = sphi 0, %s147
      %s165 = sphi 0, %s165
      %s167 = sphi 0, %s165
      %s168 = sphi 0, %s167
      %s182 = sphi 0, %s168
      %s186 = sphi 0, %s186
      %s188 = sphi 0, %s186
      %s189 = sphi 0, %s188
      %s203 = sphi 0, %s189
      %s207 = sphi 0, %s207
      %s209 = sphi 0, %s207
      %s210 = sphi 0, %s209
      %s224 = sphi 0, %s210
      %s228 = sphi 0, %s228
      %s230 = sphi 0, %s228
      %s231 = sphi 0, %s230
      %s245 = sphi 0, %s231
      %s249 = sphi 0, %s249
      %s251 = sphi 0, %s249
      %s252 = sphi 0, %s251
      %s266 = sphi 0, %s252
      %s270 = sphi 0, %s270
      %s272 = sphi 0, %s270
      %s273 = sphi 0, %s272
      %s287 = sphi 0, %s273
      %s291 = sphi 0, %s291
      %s293 = sphi 0, %s291
      %s294 = sphi 0, %s293
      %s308 = sphi 0, %s294
      %s312 = sphi 0, %s312
      %s314 = sphi 0, %s312
      %s315 = sphi 0, %s314
      %s329 = sphi 0, %s315
      %s335 = sphi 0, %s337
      %s338 = sphi 0, %s335
      %s339 = sphi 0, %s338
      %s355 = sphi 0, %s339
    $region4: #{text_encoder_forward.3} parent=1 // loop_header_branch
      %29 = sbr.rel (%p27) target = $region8
    $region5: #{text_encoder_forward.3} parent=1 // loop_body
      %s31 = ssub.s32 %s26, 1
      %s32 = ssub.s32 %s26, 2
      %s33 = sadd.s32 %s26, 1
      %s34 = ssub.s32 %s26, %s33
      %p35 = scmp.eq.s32.totalorder %s34, 0
      %s37 = sadd.s32 %s36, 1
      %s38 = scalar_select %p35, %s36, %s37
      %p41 = pneg %p35
      %p42 = scmp.eq.s32.totalorder %s26, 1
      %p43 = por %p41, %p42
      %p44 = scmp.ne.s32.totalorder %s36, %s39
      %p45 = scmp.eq.s32.totalorder %s26, 0
      %p46 = por %p44, %p45
      %p47 = scmp.ne.s32.totalorder %s36, %s39
      %p48 = scmp.eq.s32.totalorder %s31, 1
      %p49 = por %p47, %p48
      %p50 = scmp.ne.s32.totalorder %s39, %s40
      %p51 = scmp.eq.s32.totalorder %s31, 0
      %p52 = por %p50, %p51
      %p53 = scmp.ne.s32.totalorder %s39, %s40
      %p54 = scmp.eq.s32.totalorder %s32, 1
      %p55 = por %p53, %p54
      %p57 = scmp.ne.s32.totalorder %s40, %s56
      %p58 = scmp.eq.s32.totalorder %s32, 0
      %p59 = por %p57, %p58
      %s61 = sadd.s32 %s60, 1
      %p64 = scmp.eq.s32.totalorder %s26, 1
      %p65 = scmp.ne.s32.totalorder %s60, %s62
      %p66 = scmp.eq.s32.totalorder %s26, 0
      %p67 = por %p65, %p66
      %p68 = scmp.ne.s32.totalorder %s60, %s62
      %p69 = scmp.eq.s32.totalorder %s31, 1
      %p70 = por %p68, %p69
      %p71 = scmp.ne.s32.totalorder %s62, %s63
      %p72 = scmp.eq.s32.totalorder %s31, 0
      %p73 = por %p71, %p72
      %p74 = scmp.ne.s32.totalorder %s62, %s63
      %p75 = scmp.eq.s32.totalorder %s32, 1
      %p76 = por %p74, %p75
      %p78 = scmp.ne.s32.totalorder %s63, %s77
      %p79 = scmp.eq.s32.totalorder %s32, 0
      %p80 = por %p78, %p79
      %s82 = sadd.s32 %s81, 1
      %p85 = scmp.eq.s32.totalorder %s26, 1
      %p86 = scmp.ne.s32.totalorder %s81, %s83
      %p87 = scmp.eq.s32.totalorder %s26, 0
      %p88 = por %p86, %p87
      %p89 = scmp.ne.s32.totalorder %s81, %s83
      %p90 = scmp.eq.s32.totalorder %s31, 1
      %p91 = por %p89, %p90
      %p92 = scmp.ne.s32.totalorder %s83, %s84
      %p93 = scmp.eq.s32.totalorder %s31, 0
      %p94 = por %p92, %p93
      %p95 = scmp.ne.s32.totalorder %s83, %s84
      %p96 = scmp.eq.s32.totalorder %s32, 1
      %p97 = por %p95, %p96
      %p99 = scmp.ne.s32.totalorder %s84, %s98
      %p100 = scmp.eq.s32.totalorder %s32, 0
      %p101 = por %p99, %p100
      %s103 = sadd.s32 %s102, 1
      %p106 = scmp.eq.s32.totalorder %s26, 1
      %p107 = scmp.ne.s32.totalorder %s102, %s104
      %p108 = scmp.eq.s32.totalorder %s26, 0
      %p109 = por %p107, %p108
      %p110 = scmp.ne.s32.totalorder %s102, %s104
      %p111 = scmp.eq.s32.totalorder %s31, 1
      %p112 = por %p110, %p111
      %p113 = scmp.ne.s32.totalorder %s104, %s105
      %p114 = scmp.eq.s32.totalorder %s31, 0
      %p115 = por %p113, %p114
      %p116 = scmp.ne.s32.totalorder %s104, %s105
      %p117 = scmp.eq.s32.totalorder %s32, 1
      %p118 = por %p116, %p117
      %p120 = scmp.ne.s32.totalorder %s105, %s119
      %p121 = scmp.eq.s32.totalorder %s32, 0
      %p122 = por %p120, %p121
      %s124 = sadd.s32 %s123, 1
      %p127 = scmp.eq.s32.totalorder %s26, 1
      %p128 = scmp.ne.s32.totalorder %s123, %s125
      %p129 = scmp.eq.s32.totalorder %s26, 0
      %p130 = por %p128, %p129
      %p131 = scmp.ne.s32.totalorder %s123, %s125
      %p132 = scmp.eq.s32.totalorder %s31, 1
      %p133 = por %p131, %p132
      %p134 = scmp.ne.s32.totalorder %s125, %s126
      %p135 = scmp.eq.s32.totalorder %s31, 0
      %p136 = por %p134, %p135
      %p137 = scmp.ne.s32.totalorder %s125, %s126
      %p138 = scmp.eq.s32.totalorder %s32, 1
      %p139 = por %p137, %p138
      %p141 = scmp.ne.s32.totalorder %s126, %s140
      %p142 = scmp.eq.s32.totalorder %s32, 0
      %p143 = por %p141, %p142
      %s145 = sadd.s32 %s144, 1
      %p148 = scmp.eq.s32.totalorder %s26, 1
      %p149 = scmp.ne.s32.totalorder %s144, %s146
      %p150 = scmp.eq.s32.totalorder %s26, 0
      %p151 = por %p149, %p150
      %p152 = scmp.ne.s32.totalorder %s144, %s146
      %p153 = scmp.eq.s32.totalorder %s31, 1
      %p154 = por %p152, %p153
      %p155 = scmp.ne.s32.totalorder %s146, %s147
      %p156 = scmp.eq.s32.totalorder %s31, 0
      %p157 = por %p155, %p156
      %p158 = scmp.ne.s32.totalorder %s146, %s147
      %p159 = scmp.eq.s32.totalorder %s32, 1
      %p160 = por %p158, %p159
      %p162 = scmp.ne.s32.totalorder %s147, %s161
      %p163 = scmp.eq.s32.totalorder %s32, 0
      %p164 = por %p162, %p163
      %s166 = sadd.s32 %s165, 1
      %p169 = scmp.eq.s32.totalorder %s26, 1
      %p170 = scmp.ne.s32.totalorder %s165, %s167
      %p171 = scmp.eq.s32.totalorder %s26, 0
      %p172 = por %p170, %p171
      %p173 = scmp.ne.s32.totalorder %s165, %s167
      %p174 = scmp.eq.s32.totalorder %s31, 1
      %p175 = por %p173, %p174
      %p176 = scmp.ne.s32.totalorder %s167, %s168
      %p177 = scmp.eq.s32.totalorder %s31, 0
      %p178 = por %p176, %p177
      %p179 = scmp.ne.s32.totalorder %s167, %s168
      %p180 = scmp.eq.s32.totalorder %s32, 1
      %p181 = por %p179, %p180
      %p183 = scmp.ne.s32.totalorder %s168, %s182
      %p184 = scmp.eq.s32.totalorder %s32, 0
      %p185 = por %p183, %p184
      %s187 = sadd.s32 %s186, 1
      %p190 = scmp.eq.s32.totalorder %s26, 1
      %p191 = scmp.ne.s32.totalorder %s186, %s188
      %p192 = scmp.eq.s32.totalorder %s26, 0
      %p193 = por %p191, %p192
      %p194 = scmp.ne.s32.totalorder %s186, %s188
      %p195 = scmp.eq.s32.totalorder %s31, 1
      %p196 = por %p194, %p195
      %p197 = scmp.ne.s32.totalorder %s188, %s189
      %p198 = scmp.eq.s32.totalorder %s31, 0
      %p199 = por %p197, %p198
      %p200 = scmp.ne.s32.totalorder %s188, %s189
      %p201 = scmp.eq.s32.totalorder %s32, 1
      %p202 = por %p200, %p201
      %p204 = scmp.ne.s32.totalorder %s189, %s203
      %p205 = scmp.eq.s32.totalorder %s32, 0
      %p206 = por %p204, %p205
      %s208 = sadd.s32 %s207, 1
      %p211 = scmp.eq.s32.totalorder %s26, 1
      %p212 = scmp.ne.s32.totalorder %s207, %s209
      %p213 = scmp.eq.s32.totalorder %s26, 0
      %p214 = por %p212, %p213
      %p215 = scmp.ne.s32.totalorder %s207, %s209
      %p216 = scmp.eq.s32.totalorder %s31, 1
      %p217 = por %p215, %p216
      %p218 = scmp.ne.s32.totalorder %s209, %s210
      %p219 = scmp.eq.s32.totalorder %s31, 0
      %p220 = por %p218, %p219
      %p221 = scmp.ne.s32.totalorder %s209, %s210
      %p222 = scmp.eq.s32.totalorder %s32, 1
      %p223 = por %p221, %p222
      %p225 = scmp.ne.s32.totalorder %s210, %s224
      %p226 = scmp.eq.s32.totalorder %s32, 0
      %p227 = por %p225, %p226
      %s229 = sadd.s32 %s228, 1
      %p232 = scmp.eq.s32.totalorder %s26, 1
      %p233 = scmp.ne.s32.totalorder %s228, %s230
      %p234 = scmp.eq.s32.totalorder %s26, 0
      %p235 = por %p233, %p234
      %p236 = scmp.ne.s32.totalorder %s228, %s230
      %p237 = scmp.eq.s32.totalorder %s31, 1
      %p238 = por %p236, %p237
      %p239 = scmp.ne.s32.totalorder %s230, %s231
      %p240 = scmp.eq.s32.totalorder %s31, 0
      %p241 = por %p239, %p240
      %p242 = scmp.ne.s32.totalorder %s230, %s231
      %p243 = scmp.eq.s32.totalorder %s32, 1
      %p244 = por %p242, %p243
      %p246 = scmp.ne.s32.totalorder %s231, %s245
      %p247 = scmp.eq.s32.totalorder %s32, 0
      %p248 = por %p246, %p247
      %s250 = sadd.s32 %s249, 1
      %p253 = scmp.eq.s32.totalorder %s26, 1
      %p254 = scmp.ne.s32.totalorder %s249, %s251
      %p255 = scmp.eq.s32.totalorder %s26, 0
      %p256 = por %p254, %p255
      %p257 = scmp.ne.s32.totalorder %s249, %s251
      %p258 = scmp.eq.s32.totalorder %s31, 1
      %p259 = por %p257, %p258
      %p260 = scmp.ne.s32.totalorder %s251, %s252
      %p261 = scmp.eq.s32.totalorder %s31, 0
      %p262 = por %p260, %p261
      %p263 = scmp.ne.s32.totalorder %s251, %s252
      %p264 = scmp.eq.s32.totalorder %s32, 1
      %p265 = por %p263, %p264
      %p267 = scmp.ne.s32.totalorder %s252, %s266
      %p268 = scmp.eq.s32.totalorder %s32, 0
      %p269 = por %p267, %p268
      %s271 = sadd.s32 %s270, 1
      %p274 = scmp.eq.s32.totalorder %s26, 1
      %p275 = scmp.ne.s32.totalorder %s270, %s272
      %p276 = scmp.eq.s32.totalorder %s26, 0
      %p277 = por %p275, %p276
      %p278 = scmp.ne.s32.totalorder %s270, %s272
      %p279 = scmp.eq.s32.totalorder %s31, 1
      %p280 = por %p278, %p279
      %p281 = scmp.ne.s32.totalorder %s272, %s273
      %p282 = scmp.eq.s32.totalorder %s31, 0
      %p283 = por %p281, %p282
      %p284 = scmp.ne.s32.totalorder %s272, %s273
      %p285 = scmp.eq.s32.totalorder %s32, 1
      %p286 = por %p284, %p285
      %p288 = scmp.ne.s32.totalorder %s273, %s287
      %p289 = scmp.eq.s32.totalorder %s32, 0
      %p290 = por %p288, %p289
      %s292 = sadd.s32 %s291, 1
      %p295 = scmp.eq.s32.totalorder %s26, 1
      %p296 = scmp.ne.s32.totalorder %s291, %s293
      %p297 = scmp.eq.s32.totalorder %s26, 0
      %p298 = por %p296, %p297
      %p299 = scmp.ne.s32.totalorder %s291, %s293
      %p300 = scmp.eq.s32.totalorder %s31, 1
      %p301 = por %p299, %p300
      %p302 = scmp.ne.s32.totalorder %s293, %s294
      %p303 = scmp.eq.s32.totalorder %s31, 0
      %p304 = por %p302, %p303
      %p305 = scmp.ne.s32.totalorder %s293, %s294
      %p306 = scmp.eq.s32.totalorder %s32, 1
      %p307 = por %p305, %p306
      %p309 = scmp.ne.s32.totalorder %s294, %s308
      %p310 = scmp.eq.s32.totalorder %s32, 0
      %p311 = por %p309, %p310
      %s313 = sadd.s32 %s312, 1
      %p316 = scmp.eq.s32.totalorder %s26, 1
      %p317 = scmp.ne.s32.totalorder %s312, %s314
      %p318 = scmp.eq.s32.totalorder %s26, 0
      %p319 = por %p317, %p318
      %p320 = scmp.ne.s32.totalorder %s312, %s314
      %p321 = scmp.eq.s32.totalorder %s31, 1
      %p322 = por %p320, %p321
      %p323 = scmp.ne.s32.totalorder %s314, %s315
      %p324 = scmp.eq.s32.totalorder %s31, 0
      %p325 = por %p323, %p324
      %p326 = scmp.ne.s32.totalorder %s314, %s315
      %p327 = scmp.eq.s32.totalorder %s32, 1
      %p328 = por %p326, %p327
      %p330 = scmp.ne.s32.totalorder %s315, %s329
      %p331 = scmp.eq.s32.totalorder %s32, 0
      %p332 = por %p330, %p331
      %s333 = ssub.s32 %s26, %s33
      %p334 = scmp.eq.s32.totalorder %s333, 0
      %s336 = sadd.s32 %s335, 1
      %s337 = scalar_select %p334, %s335, %s336
      %p340 = pneg %p334
      %p341 = scmp.eq.s32.totalorder %s26, 1
      %p342 = por %p340, %p341
      %p343 = scmp.ne.s32.totalorder %s335, %s338
      %p344 = scmp.eq.s32.totalorder %s26, 0
      %p345 = por %p343, %p344
      %p346 = scmp.ne.s32.totalorder %s335, %s338
      %p347 = scmp.eq.s32.totalorder %s31, 1
      %p348 = por %p346, %p347
      %p349 = scmp.ne.s32.totalorder %s338, %s339
      %p350 = scmp.eq.s32.totalorder %s31, 0
      %p351 = por %p349, %p350
      %p352 = scmp.ne.s32.totalorder %s338, %s339
      %p353 = scmp.eq.s32.totalorder %s32, 1
      %p354 = por %p352, %p353
      %p356 = scmp.ne.s32.totalorder %s339, %s355
      %p357 = scmp.eq.s32.totalorder %s32, 0
      %p358 = por %p356, %p357
      %p359 = scmp.le.s32.totalorder 1, %s26
      %p360 = scmp.lt.s32.totalorder %s26, 3
      %p361 = pnand %p359, %p360
      %p362 = pneg %p361
      // Predicated region
      $region9: #{text_encoder_forward.3} parent=5 // pred_check
        _
      $region10: #{text_encoder_forward.3} parent=5 // pred_check_branch
        %364 = sbr.rel (%p361) target = $region12
      $region11: #{text_encoder_forward.3} parent=5 // pred_region
        %s365 = ssub.s32 %s26, 1
        // Predicated region
        $region13: #{text_encoder_forward.3} parent=11 // pred_check
          %p366 = pneg %p73
        $region14: #{text_encoder_forward.3} parent=11 // pred_check_branch
          %368 = sbr.rel (%p366) target = $region16
        $region15: #{text_encoder_forward.3} parent=11 // pred_region
          %s370 = ssub.s32 128, 128
          %371 = vsyncadd [#allocation5], %s370
          %s373 = sshll.u32 [#allocation4], 4
          %s374 = int_to_ptr.vmem [resolvable:$true] %s373
          %376 = dma.hbm_to_vmem [thread:$0]  %s1, 128, %s374, [#allocation5]
        $region16: #{text_encoder_forward.3} parent=11 // pred_fallthru
          _
        // Predicated region
        $region17: #{text_encoder_forward.3} parent=11 // pred_check
          %p377 = pneg %p94
        $region18: #{text_encoder_forward.3} parent=11 // pred_check_branch
          %379 = sbr.rel (%p377) target = $region20
        $region19: #{text_encoder_forward.3} parent=11 // pred_region
          _
        $region20: #{text_encoder_forward.3} parent=11 // pred_fallthru
          _
        // Predicated region
        $region21: #{text_encoder_forward.3} parent=11 // pred_check
          %p380 = pneg %p115
        $region22: #{text_encoder_forward.3} parent=11 // pred_check_branch
          %382 = sbr.rel (%p380) target = $region24
        $region23: #{text_encoder_forward.3} parent=11 // pred_region
          _
        $region24: #{text_encoder_forward.3} parent=11 // pred_fallthru
          _
        // Predicated region
        $region25: #{text_encoder_forward.3} parent=11 // pred_check
          %p383 = pneg %p136
        $region26: #{text_encoder_forward.3} parent=11 // pred_check_branch
          %385 = sbr.rel (%p383) target = $region28
        $region27: #{text_encoder_forward.3} parent=11 // pred_region
          _
        $region28: #{text_encoder_forward.3} parent=11 // pred_fallthru
          _
        // Predicated region
        $region29: #{text_encoder_forward.3} parent=11 // pred_check
          %p386 = pneg %p157
        $region30: #{text_encoder_forward.3} parent=11 // pred_check_branch
          %388 = sbr.rel (%p386) target = $region32
        $region31: #{text_encoder_forward.3} parent=11 // pred_region
          _
        $region32: #{text_encoder_forward.3} parent=11 // pred_fallthru
          _
        // Predicated region
        $region33: #{text_encoder_forward.3} parent=11 // pred_check
          %p389 = pneg %p178
        $region34: #{text_encoder_forward.3} parent=11 // pred_check_branch
          %391 = sbr.rel (%p389) target = $region36
        $region35: #{text_encoder_forward.3} parent=11 // pred_region
          _
        $region36: #{text_encoder_forward.3} parent=11 // pred_fallthru
          _
        // Predicated region
        $region37: #{text_encoder_forward.3} parent=11 // pred_check
          %p392 = pneg %p199
        $region38: #{text_encoder_forward.3} parent=11 // pred_check_branch
          %394 = sbr.rel (%p392) target = $region40
        $region39: #{text_encoder_forward.3} parent=11 // pred_region
          %s396 = ssub.s32 16, 16
          %397 = vsyncadd [#allocation5], %s396
          %s399 = sshll.u32 [#allocation6], 4
          %s400 = int_to_ptr.vmem [resolvable:$true] %s399
          %402 = dma.hbm_to_vmem [thread:$0]  %s7, 16, %s400, [#allocation5]
        $region40: #{text_encoder_forward.3} parent=11 // pred_fallthru
          _
        // Predicated region
        $region41: #{text_encoder_forward.3} parent=11 // pred_check
          %p403 = pneg %p220
        $region42: #{text_encoder_forward.3} parent=11 // pred_check_branch
          %405 = sbr.rel (%p403) target = $region44
        $region43: #{text_encoder_forward.3} parent=11 // pred_region
          _
        $region44: #{text_encoder_forward.3} parent=11 // pred_fallthru
          _
        // Predicated region
        $region45: #{text_encoder_forward.3} parent=11 // pred_check
          %p406 = pneg %p241
        $region46: #{text_encoder_forward.3} parent=11 // pred_check_branch
          %408 = sbr.rel (%p406) target = $region48
        $region47: #{text_encoder_forward.3} parent=11 // pred_region
          _
        $region48: #{text_encoder_forward.3} parent=11 // pred_fallthru
          _
        // Predicated region
        $region49: #{text_encoder_forward.3} parent=11 // pred_check
          %p409 = pneg %p262
        $region50: #{text_encoder_forward.3} parent=11 // pred_check_branch
          %411 = sbr.rel (%p409) target = $region52
        $region51: #{text_encoder_forward.3} parent=11 // pred_region
          %s413 = ssub.s32 256, 256
          %414 = vsyncadd [#allocation8], %s413
          %s415 = sshll.u32 [#allocation7], 4
          %s416 = int_to_ptr.vmem [resolvable:$true] %s415
          %421 = dma.hbm_to_vmem [thread:$0]  %s10, 256, %s416, [#allocation8], 64, 64, 4
        $region52: #{text_encoder_forward.3} parent=11 // pred_fallthru
          _
        // Predicated region
        $region53: #{text_encoder_forward.3} parent=11 // pred_check
          %p422 = pneg %p283
        $region54: #{text_encoder_forward.3} parent=11 // pred_check_branch
          %424 = sbr.rel (%p422) target = $region56
        $region55: #{text_encoder_forward.3} parent=11 // pred_region
          %s426 = ssub.s32 16, 16
          %427 = vsyncadd [#allocation8], %s426
          %s429 = sshll.u32 [#allocation9], 4
          %s430 = int_to_ptr.vmem [resolvable:$true] %s429
          %432 = dma.hbm_to_vmem [thread:$0]  %s11, 16, %s430, [#allocation8]
        $region56: #{text_encoder_forward.3} parent=11 // pred_fallthru
          _
        // Predicated region
        $region57: #{text_encoder_forward.3} parent=11 // pred_check
          %p433 = pneg %p304
        $region58: #{text_encoder_forward.3} parent=11 // pred_check_branch
          %435 = sbr.rel (%p433) target = $region60
        $region59: #{text_encoder_forward.3} parent=11 // pred_region
          %s437 = ssub.s32 1024, 1024
          %438 = vsyncadd [#allocation11], %s437
          %s439 = sshll.u32 [#allocation10], 4
          %s440 = int_to_ptr.vmem [resolvable:$true] %s439
          %445 = dma.hbm_to_vmem [thread:$0]  %s12, 1024, %s440, [#allocation11], 64, 64, 4
        $region60: #{text_encoder_forward.3} parent=11 // pred_fallthru
          _
        // Predicated region
        $region61: #{text_encoder_forward.3} parent=11 // pred_check
          %p446 = pneg %p325
        $region62: #{text_encoder_forward.3} parent=11 // pred_check_branch
          %448 = sbr.rel (%p446) target = $region64
        $region63: #{text_encoder_forward.3} parent=11 // pred_region
          %s450 = ssub.s32 16, 16
          %451 = vsyncadd [#allocation11], %s450
          %s453 = sshll.u32 [#allocation12], 4
          %s454 = int_to_ptr.vmem [resolvable:$true] %s453
          %456 = dma.hbm_to_vmem [thread:$0]  %s13, 16, %s454, [#allocation11]
        $region64: #{text_encoder_forward.3} parent=11 // pred_fallthru
          _
      $region12: #{text_encoder_forward.3} parent=5 // pred_fallthru
        _
      %p457 = scmp.lt.s32.totalorder %s26, 2
      // Predicated region
      $region65: #{text_encoder_forward.3} parent=5 // pred_check
        %p458 = pneg %p457
      $region66: #{text_encoder_forward.3} parent=5 // pred_check_branch
        %460 = sbr.rel (%p458) target = $region68
      $region67: #{text_encoder_forward.3} parent=5 // pred_region
        // Predicated region
        $region69: #{text_encoder_forward.3} parent=67 // pred_check
          %p461 = pneg %p46
        $region70: #{text_encoder_forward.3} parent=67 // pred_check_branch
          %463 = sbr.rel (%p461) target = $region72
        $region71: #{text_encoder_forward.3} parent=67 // pred_region
          %s464 = sand.u32 %s36, 1
          %s465 = scalar_lea.sflag [#allocation3], %s464
          %s466 = sand.u32 %s36, 1
          %s467 = smul.addr %s466, 8
          %s468 = scalar_lea.vmem [#allocation2], %s467
          %s470 = ssub.s32 128, 128
          %471 = vsyncadd %s465, %s470
          %s472 = smul.addr %s26, 128
          %s473 = scalar_lea.hbm %s0, %s472
          %s475 = sshll.u32 %s468, 4
          %s476 = int_to_ptr.vmem [resolvable:$true] %s475
          %478 = dma.hbm_to_vmem [thread:$0]  %s473, 128, %s476, %s465
        $region72: #{text_encoder_forward.3} parent=67 // pred_fallthru
          _
      $region68: #{text_encoder_forward.3} parent=5 // pred_fallthru
        _
      %p479 = scmp.le.s32.totalorder 1, %s26
      %p480 = scmp.lt.s32.totalorder %s26, 3
      %p481 = pnand %p479, %p480
      %p482 = pneg %p481
      // Predicated region
      $region73: #{text_encoder_forward.3} parent=5 // pred_check
        _
      $region74: #{text_encoder_forward.3} parent=5 // pred_check_branch
        %484 = sbr.rel (%p481) target = $region76
      $region75: #{text_encoder_forward.3} parent=5 // pred_region
        %s485 = ssub.s32 %s26, 1
        %s486 = sand.u32 %s39, 1
        %s487 = scalar_lea.sflag [#allocation3], %s486
        %s488 = sand.u32 %s39, 1
        %s489 = smul.addr %s488, 8
        %s490 = scalar_lea.vmem [#allocation2], %s489
        // Predicated region
        $region77: #{text_encoder_forward.3} parent=75 // pred_check
          %p491 = pneg %p52
        $region78: #{text_encoder_forward.3} parent=75 // pred_check_branch
          %493 = sbr.rel (%p491) target = $region80
        $region79: #{text_encoder_forward.3} parent=75 // pred_region
          %494 = dma.done %s487, 128
        $region80: #{text_encoder_forward.3} parent=75 // pred_fallthru
          _
        // Predicated region
        $region81: #{text_encoder_forward.3} parent=75 // pred_check
          %p495 = pneg %p73
        $region82: #{text_encoder_forward.3} parent=75 // pred_check_branch
          %497 = sbr.rel (%p495) target = $region84
        $region83: #{text_encoder_forward.3} parent=75 // pred_region
          %498 = dma.done [#allocation5], 128
        $region84: #{text_encoder_forward.3} parent=75 // pred_fallthru
          _
        // Predicated region
        $region85: #{text_encoder_forward.3} parent=75 // pred_check
          %p499 = pneg %p199
        $region86: #{text_encoder_forward.3} parent=75 // pred_check_branch
          %501 = sbr.rel (%p499) target = $region88
        $region87: #{text_encoder_forward.3} parent=75 // pred_region
          %502 = dma.done [#allocation5], 16
        $region88: #{text_encoder_forward.3} parent=75 // pred_fallthru
          _
        // Predicated region
        $region89: #{text_encoder_forward.3} parent=75 // pred_check
          %p503 = pneg %p262
        $region90: #{text_encoder_forward.3} parent=75 // pred_check_branch
          %505 = sbr.rel (%p503) target = $region92
        $region91: #{text_encoder_forward.3} parent=75 // pred_region
          %506 = dma.done [#allocation8], 256
        $region92: #{text_encoder_forward.3} parent=75 // pred_fallthru
          _
        // Predicated region
        $region93: #{text_encoder_forward.3} parent=75 // pred_check
          %p507 = pneg %p283
        $region94: #{text_encoder_forward.3} parent=75 // pred_check_branch
          %509 = sbr.rel (%p507) target = $region96
        $region95: #{text_encoder_forward.3} parent=75 // pred_region
          %510 = dma.done [#allocation8], 16
        $region96: #{text_encoder_forward.3} parent=75 // pred_fallthru
          _
        // Predicated region
        $region97: #{text_encoder_forward.3} parent=75 // pred_check
          %p511 = pneg %p304
        $region98: #{text_encoder_forward.3} parent=75 // pred_check_branch
          %513 = sbr.rel (%p511) target = $region100
        $region99: #{text_encoder_forward.3} parent=75 // pred_region
          %514 = dma.done [#allocation11], 1024
        $region100: #{text_encoder_forward.3} parent=75 // pred_fallthru
          _
        // Predicated region
        $region101: #{text_encoder_forward.3} parent=75 // pred_check
          %p515 = pneg %p325
        $region102: #{text_encoder_forward.3} parent=75 // pred_check_branch
          %517 = sbr.rel (%p515) target = $region104
        $region103: #{text_encoder_forward.3} parent=75 // pred_region
          %518 = dma.done [#allocation11], 16
        $region104: #{text_encoder_forward.3} parent=75 // pred_fallthru
          _
        %s519 = sand.u32 %s39, 1
        %s520 = scalar_lea.sflag [#allocation3], %s519
        %s521 = sand.u32 %s39, 1
        %s522 = smul.addr %s521, 8
        %s523 = scalar_lea.vmem [#allocation2], %s522
        %p524 = pneg %p52
        %p525 = pneg %p49
        %p526 = pneg %p73
        %p527 = pneg %p70
        %p528 = pneg %p94
        %p529 = pneg %p91
        %p530 = pneg %p115
        %p531 = pneg %p112
        %p532 = pneg %p136
        %p533 = pneg %p133
        %p534 = pneg %p157
        %p535 = pneg %p154
        %p536 = pneg %p178
        %p537 = pneg %p175
        %p538 = pneg %p199
        %p539 = pneg %p196
        %p540 = pneg %p220
        %p541 = pneg %p217
        %p542 = pneg %p241
        %p543 = pneg %p238
        %p544 = pneg %p262
        %p545 = pneg %p259
        %p546 = pneg %p283
        %p547 = pneg %p280
        %p548 = pneg %p304
        %p549 = pneg %p301
        %p550 = pneg %p325
        %p551 = pneg %p322
        %p552 = pneg %p351
        %p553 = pneg %p348
        %p554 = scmp.lt.s32.totalorder %s31, 1
        %s555 = scalar_select %p554, %s31, 1
        %s556 = smul.addr %s555, 8
        %s557 = scalar_lea.vmem %s14, %s556
        %p558 = scmp.lt.s32.totalorder %s31, 1
        %s559 = scalar_select %p558, %s31, 1
        %s560 = smul.addr %s559, 8
        %s561 = scalar_lea.vmem %s14, %s560
        %v563 = vld [vmem:[%s490] sm:$0xff]
        %v564 = vld [vmem:[#allocation4] sm:$0xff]
        %v565 = vadd.f32 %v563, %v564
        %v566 = vld [vmem:[%s2] sm:$0x1]
        %v567 = vld [vmem:[%s3] sm:$0x1]
        %vm568 = vcmask 261120
        %v569 = vsel %vm568, %v565, 0.0
        %570 = vadd.xlane.f32.xlu0 %v569
        %v571 = vpop.xlane.xlu0 %570
        %v572 = vrcp.pop 32.0
        %v573 = vmul.f32 %v571, %v572
        %v574 = vsub.f32 %v565, %v573
        %v575 = vmul.f32 %v574, %v574
        %v576 = vsel %vm568, %v575, 0.0
        %577 = vadd.xlane.f32.xlu0 %v576
        %v578 = vpop.xlane.xlu0 %577
        %v579 = vmul.f32 %v578, %v572
        %v580 = vadd.f32 %v579, 1e-05
        %v581 = vrsqrt.pop %v580
        %v582 = vmul.f32 %v574, %v581
        %v584 = vlaneseq
        %v585 = vshrl.u32 %v584, 7
        %v586 = vsub.s32 0, %v585
        %v587 = vrot.slane %v566, %v586
        %v589 = vmul.f32 %v582, %v587
        %v591 = vlaneseq
        %v592 = vshrl.u32 %v591, 7
        %v593 = vsub.s32 0, %v592
        %v594 = vrot.slane %v567, %v593
        %v596 = vadd.f32 %v589, %v594
        %v597 = vpack.c.bf16 %v596, %v596
        %v598 = vld [vmem:[%s4] sm:$0xf]
        %v599 = vld [vmem:[%s4 + $0x4] sm:$0xf]
        %v600 = vld [vmem:[%s4 + $0x8] sm:$0xf]
        %v601 = vld [vmem:[%s4 + $0xc] sm:$0xf]
        %v602 = vld [vmem:[%s5] sm:$0x1]
        %v604 = vlaneseq
        %v605 = vshrl.u32 %v604, 7
        %v606 = vsub.s32 0, %v605
        %v607 = vrot.slane %v602, %v606
        %v613 = vunpack.c.l.b16 %v598
        %v614 = vunpack.c.l.b16 %v599
        %v615 = vunpack.c.l.b16 %v600
        %v616 = vunpack.c.l.b16 %v601
        %v617 = vpack.c.b16 %v614, %v613
        %v618 = vpack.c.b16 %v616, %v615
        %v622 = vsel %vm568, %v597, 0
        %624 = vmatprep.subr.bf16.mxu0 0
        %625 = vmatpush1.bf16.msra.mxu0 0
        %626 = vmatprep.subr.bf16.mxu0 0
        %627 = vmatpush1.bf16.msra.mxu0 0
        %628 = vmatprep.subr.bf16.mxu0 0
        %629 = vmatpush1.bf16.msra.mxu0 0
        %630 = vmatprep.subr.bf16.mxu0 0
        %631 = vmatpush1.bf16.msra.mxu0 0
        %632 = vmatprep.subr.bf16.mxu0 0
        %633 = vmatpush1.bf16.msra.mxu0 0
        %634 = vmatprep.subr.bf16.mxu0 0
        %635 = vmatpush1.bf16.msra.mxu0 0
        %636 = vmatprep.subr.bf16.mxu0 0
        %637 = vmatpush1.bf16.msra.mxu0 %v618
        %638 = vmatprep.subr.bf16.mxu0 0
        %639 = vmatpush1.bf16.msra.mxu0 %v617
        %640 = vmatprep.subr.bf16.mxu0 0
        %641 = vmatpush2.bf16.msra.mxu0 0
        %642 = vmatprep.subr.bf16.mxu0 0
        %643 = vmatpush2.bf16.msra.mxu0 0
        %644 = vmatprep.subr.bf16.mxu0 0
        %645 = vmatpush2.bf16.msra.mxu0 0
        %646 = vmatprep.subr.bf16.mxu0 0
        %647 = vmatpush2.bf16.msra.mxu0 0
        %648 = vmatprep.subr.bf16.mxu0 0
        %649 = vmatpush2.bf16.msra.mxu0 0
        %650 = vmatprep.subr.bf16.mxu0 0
        %651 = vmatpush2.bf16.msra.mxu0 0
        %652 = vmatprep.subr.bf16.mxu0 0
        %653 = vmatpush2.bf16.msra.mxu0 0
        %654 = vmatprep.subr.bf16.mxu0 0
        %655 = vmatpush2.bf16.msra.mxu0 0
        %656 = vmatprep.mubr.bf16.mxu0 0
        %657 = vmatmul.mubr.bf16.gmra.mxu0 %v622
        %v658 = vpop.f32.mrf.mxu0
        %v659 = vadd.f32 %v607, %v658
        %v660 = vpop.f32.mrf.mxu0
        %v661 = vpop.f32.mrf.mxu0
        %v662 = vpop.f32.mrf.mxu0
        %663 = vdwg.mxu0
        %v664 = vlaneseq
        %v665 = vshrl.u32 %v664, 7
        %v666 = vlaneseq
        %v667 = vand.u32 %v666, 127
        %vm668 = vcmp.gt.s32.totalorder %v667, %v665
        %v669 = vsel %vm668, -1e+30, 0.0
        %v670 = vmul.f32 %v659, 0.35355338
        %v671 = vpack.c.bf16 %v670, %v670
        %v672 = vpack.c.bf16 %v659, %v659
        %674 = vrot.lane.b32.xlu0 %v672, 96
        %v675 = vpop.permute.xlu0 %674
        %vm676 = vcmask 64512
        %v678 = vsel %vm676, %v671, 0
        %v681 = vsel %vm676, %v675, 0
        %683 = vmatprep.subr.bf16.mxu0 0
        %684 = vmatpush1.bf16.xpose.msra.mxu0 0
        %685 = vmatprep.subr.bf16.mxu0 0
        %686 = vmatpush1.bf16.xpose.msra.mxu0 0
        %687 = vmatprep.subr.bf16.mxu0 0
        %688 = vmatpush1.bf16.xpose.msra.mxu0 0
        %689 = vmatprep.subr.bf16.mxu0 0
        %690 = vmatpush1.bf16.xpose.msra.mxu0 0
        %691 = vmatprep.subr.bf16.mxu0 0
        %692 = vmatpush1.bf16.xpose.msra.mxu0 0
        %693 = vmatprep.subr.bf16.mxu0 0
        %694 = vmatpush1.bf16.xpose.msra.mxu0 0
        %695 = vmatprep.subr.bf16.mxu0 0
        %696 = vmatpush1.bf16.xpose.msra.mxu0 0
        %697 = vmatprep.subr.bf16.mxu0 0
        %698 = vmatpush1.bf16.xpose.msra.mxu0 %v681
        %699 = vmatprep.subr.bf16.mxu0 0
        %700 = vmatpush2.bf16.xpose.msra.mxu0 0
        %701 = vmatprep.subr.bf16.mxu0 0
        %702 = vmatpush2.bf16.xpose.msra.mxu0 0
        %703 = vmatprep.subr.bf16.mxu0 0
        %704 = vmatpush2.bf16.xpose.msra.mxu0 0
        %705 = vmatprep.subr.bf16.mxu0 0
        %706 = vmatpush2.bf16.xpose.msra.mxu0 0
        %707 = vmatprep.subr.bf16.mxu0 0
        %708 = vmatpush2.bf16.xpose.msra.mxu0 0
        %709 = vmatprep.subr.bf16.mxu0 0
        %710 = vmatpush2.bf16.xpose.msra.mxu0 0
        %711 = vmatprep.subr.bf16.mxu0 0
        %712 = vmatpush2.bf16.xpose.msra.mxu0 0
        %713 = vmatprep.subr.bf16.mxu0 0
        %714 = vmatpush2.bf16.xpose.msra.mxu0 0
        %715 = vmatprep.mubr.bf16.mxu0 0
        %716 = vmatmul.mubr.bf16.gmra.mxu0 %v678
        %v717 = vpop.f32.mrf.mxu0
        %v718 = vadd.f32 %v669, %v717
        %v719 = vpop.f32.mrf.mxu0
        %v720 = vpop.f32.mrf.mxu0
        %v721 = vpop.f32.mrf.mxu0
        %722 = vdwg.mxu0
        %v723 = vsel %vm676, %v718, -inf
        %724 = vmax.xlane.f32.xlu0 %v723
        %v725 = vpop.xlane.xlu0 %724
        %v726 = vsub.f32 %v718, %v725
        %v727 = vmul.f32 %v726, 1.442695
        %v728 = vpow.pop %v727
        %v729 = vsel %vm676, %v728, 0.0
        %730 = vadd.xlane.f32.xlu0 %v729
        %v731 = vpop.xlane.xlu0 %730
        %v732 = vpack.c.bf16 %v728, %v728
        %733 = vrot.lane.b32.xlu0 %v672, 64
        %v734 = vpop.permute.xlu0 %733
        %v736 = vsel %vm676, %v732, 0
        %vm738 = vcmask 1043456
        %v740 = vsel %vm738, %v734, 0
        %742 = vmatprep.subr.bf16.mxu0 0
        %743 = vmatpush1.bf16.msra.mxu0 0
        %744 = vmatprep.subr.bf16.mxu0 0
        %745 = vmatpush1.bf16.msra.mxu0 0
        %746 = vmatprep.subr.bf16.mxu0 0
        %747 = vmatpush1.bf16.msra.mxu0 0
        %748 = vmatprep.subr.bf16.mxu0 0
        %749 = vmatpush1.bf16.msra.mxu0 0
        %750 = vmatprep.subr.bf16.mxu0 0
        %751 = vmatpush1.bf16.msra.mxu0 0
        %752 = vmatprep.subr.bf16.mxu0 0
        %753 = vmatpush1.bf16.msra.mxu0 0
        %754 = vmatprep.subr.bf16.mxu0 0
        %755 = vmatpush1.bf16.msra.mxu0 0
        %756 = vmatprep.subr.bf16.mxu0 0
        %757 = vmatpush1.bf16.msra.mxu0 %v740
        %758 = vmatprep.subr.bf16.mxu0 0
        %759 = vmatpush2.bf16.msra.mxu0 0
        %760 = vmatprep.subr.bf16.mxu0 0
        %761 = vmatpush2.bf16.msra.mxu0 0
        %762 = vmatprep.subr.bf16.mxu0 0
        %763 = vmatpush2.bf16.msra.mxu0 0
        %764 = vmatprep.subr.bf16.mxu0 0
        %765 = vmatpush2.bf16.msra.mxu0 0
        %766 = vmatprep.subr.bf16.mxu0 0
        %767 = vmatpush2.bf16.msra.mxu0 0
        %768 = vmatprep.subr.bf16.mxu0 0
        %769 = vmatpush2.bf16.msra.mxu0 0
        %770 = vmatprep.subr.bf16.mxu0 0
        %771 = vmatpush2.bf16.msra.mxu0 0
        %772 = vmatprep.subr.bf16.mxu0 0
        %773 = vmatpush2.bf16.msra.mxu0 0
        %774 = vmatprep.mubr.bf16.mxu0 0
        %775 = vmatmul.mubr.bf16.gmra.mxu0 %v736
        %v776 = vpop.f32.mrf.mxu0
        %v777 = vadd.f32 0.0, %v776
        %v778 = vpop.f32.mrf.mxu0
        %v779 = vpop.f32.mrf.mxu0
        %v780 = vpop.f32.mrf.mxu0
        %781 = vdwg.mxu0
        %v782 = vrcp.pop %v731
        %v783 = vmul.f32 %v777, %v782
        %785 = vrot.lane.b32.xlu0 %v671, 120
        %v786 = vpop.permute.xlu0 %785
        %787 = vrot.lane.b32.xlu0 %v672, 88
        %v788 = vpop.permute.xlu0 %787
        %v790 = vsel %vm676, %v786, 0
        %v793 = vsel %vm676, %v788, 0
        %795 = vmatprep.subr.bf16.mxu0 0
        %796 = vmatpush1.bf16.xpose.msra.mxu0 0
        %797 = vmatprep.subr.bf16.mxu0 0
        %798 = vmatpush1.bf16.xpose.msra.mxu0 0
        %799 = vmatprep.subr.bf16.mxu0 0
        %800 = vmatpush1.bf16.xpose.msra.mxu0 0
        %801 = vmatprep.subr.bf16.mxu0 0
        %802 = vmatpush1.bf16.xpose.msra.mxu0 0
        %803 = vmatprep.subr.bf16.mxu0 0
        %804 = vmatpush1.bf16.xpose.msra.mxu0 0
        %805 = vmatprep.subr.bf16.mxu0 0
        %806 = vmatpush1.bf16.xpose.msra.mxu0 0
        %807 = vmatprep.subr.bf16.mxu0 0
        %808 = vmatpush1.bf16.xpose.msra.mxu0 0
        %809 = vmatprep.subr.bf16.mxu0 0
        %810 = vmatpush1.bf16.xpose.msra.mxu0 %v793
        %811 = vmatprep.subr.bf16.mxu0 0
        %812 = vmatpush2.bf16.xpose.msra.mxu0 0
        %813 = vmatprep.subr.bf16.mxu0 0
        %814 = vmatpush2.bf16.xpose.msra.mxu0 0
        %815 = vmatprep.subr.bf16.mxu0 0
        %816 = vmatpush2.bf16.xpose.msra.mxu0 0
        %817 = vmatprep.subr.bf16.mxu0 0
        %818 = vmatpush2.bf16.xpose.msra.mxu0 0
        %819 = vmatprep.subr.bf16.mxu0 0
        %820 = vmatpush2.bf16.xpose.msra.mxu0 0
        %821 = vmatprep.subr.bf16.mxu0 0
        %822 = vmatpush2.bf16.xpose.msra.mxu0 0
        %823 = vmatprep.subr.bf16.mxu0 0
        %824 = vmatpush2.bf16.xpose.msra.mxu0 0
        %825 = vmatprep.subr.bf16.mxu0 0
        %826 = vmatpush2.bf16.xpose.msra.mxu0 0
        %827 = vmatprep.mubr.bf16.mxu0 0
        %828 = vmatmul.mubr.bf16.gmra.mxu0 %v790
        %v829 = vpop.f32.mrf.mxu0
        %v830 = vadd.f32 %v669, %v829
        %v831 = vpop.f32.mrf.mxu0
        %v832 = vpop.f32.mrf.mxu0
        %v833 = vpop.f32.mrf.mxu0
        %834 = vdwg.mxu0
        %v835 = vsel %vm676, %v830, -inf
        %836 = vmax.xlane.f32.xlu0 %v835
        %v837 = vpop.xlane.xlu0 %836
        %v838 = vsub.f32 %v830, %v837
        %v839 = vmul.f32 %v838, 1.442695
        %v840 = vpow.pop %v839
        %v841 = vsel %vm676, %v840, 0.0
        %842 = vadd.xlane.f32.xlu0 %v841
        %v843 = vpop.xlane.xlu0 %842
        %v844 = vpack.c.bf16 %v840, %v840
        %845 = vrot.lane.b32.xlu0 %v672, 56
        %v846 = vpop.permute.xlu0 %845
        %v848 = vsel %vm676, %v844, 0
        %v851 = vsel %vm738, %v846, 0
        %853 = vmatprep.subr.bf16.mxu0 0
        %854 = vmatpush1.bf16.msra.mxu0 0
        %855 = vmatprep.subr.bf16.mxu0 0
        %856 = vmatpush1.bf16.msra.mxu0 0
        %857 = vmatprep.subr.bf16.mxu0 0
        %858 = vmatpush1.bf16.msra.mxu0 0
        %859 = vmatprep.subr.bf16.mxu0 0
        %860 = vmatpush1.bf16.msra.mxu0 0
        %861 = vmatprep.subr.bf16.mxu0 0
        %862 = vmatpush1.bf16.msra.mxu0 0
        %863 = vmatprep.subr.bf16.mxu0 0
        %864 = vmatpush1.bf16.msra.mxu0 0
        %865 = vmatprep.subr.bf16.mxu0 0
        %866 = vmatpush1.bf16.msra.mxu0 0
        %867 = vmatprep.subr.bf16.mxu0 0
        %868 = vmatpush1.bf16.msra.mxu0 %v851
        %869 = vmatprep.subr.bf16.mxu0 0
        %870 = vmatpush2.bf16.msra.mxu0 0
        %871 = vmatprep.subr.bf16.mxu0 0
        %872 = vmatpush2.bf16.msra.mxu0 0
        %873 = vmatprep.subr.bf16.mxu0 0
        %874 = vmatpush2.bf16.msra.mxu0 0
        %875 = vmatprep.subr.bf16.mxu0 0
        %876 = vmatpush2.bf16.msra.mxu0 0
        %877 = vmatprep.subr.bf16.mxu0 0
        %878 = vmatpush2.bf16.msra.mxu0 0
        %879 = vmatprep.subr.bf16.mxu0 0
        %880 = vmatpush2.bf16.msra.mxu0 0
        %881 = vmatprep.subr.bf16.mxu0 0
        %882 = vmatpush2.bf16.msra.mxu0 0
        %883 = vmatprep.subr.bf16.mxu0 0
        %884 = vmatpush2.bf16.msra.mxu0 0
        %885 = vmatprep.mubr.bf16.mxu0 0
        %886 = vmatmul.mubr.bf16.gmra.mxu0 %v848
        %v887 = vpop.f32.mrf.mxu0
        %v888 = vadd.f32 0.0, %v887
        %v889 = vpop.f32.mrf.mxu0
        %v890 = vpop.f32.mrf.mxu0
        %v891 = vpop.f32.mrf.mxu0
        %892 = vdwg.mxu0
        %v893 = vrcp.pop %v843
        %v894 = vmul.f32 %v888, %v893
        %895 = vrot.lane.b32.xlu0 %v671, 112
        %v896 = vpop.permute.xlu0 %895
        %897 = vrot.lane.b32.xlu0 %v672, 80
        %v898 = vpop.permute.xlu0 %897
        %v900 = vsel %vm676, %v896, 0
        %v903 = vsel %vm676, %v898, 0
        %905 = vmatprep.subr.bf16.mxu0 0
        %906 = vmatpush1.bf16.xpose.msra.mxu0 0
        %907 = vmatprep.subr.bf16.mxu0 0
        %908 = vmatpush1.bf16.xpose.msra.mxu0 0
        %909 = vmatprep.subr.bf16.mxu0 0
        %910 = vmatpush1.bf16.xpose.msra.mxu0 0
        %911 = vmatprep.subr.bf16.mxu0 0
        %912 = vmatpush1.bf16.xpose.msra.mxu0 0
        %913 = vmatprep.subr.bf16.mxu0 0
        %914 = vmatpush1.bf16.xpose.msra.mxu0 0
        %915 = vmatprep.subr.bf16.mxu0 0
        %916 = vmatpush1.bf16.xpose.msra.mxu0 0
        %917 = vmatprep.subr.bf16.mxu0 0
        %918 = vmatpush1.bf16.xpose.msra.mxu0 0
        %919 = vmatprep.subr.bf16.mxu0 0
        %920 = vmatpush1.bf16.xpose.msra.mxu0 %v903
        %921 = vmatprep.subr.bf16.mxu0 0
        %922 = vmatpush2.bf16.xpose.msra.mxu0 0
        %923 = vmatprep.subr.bf16.mxu0 0
        %924 = vmatpush2.bf16.xpose.msra.mxu0 0
        %925 = vmatprep.subr.bf16.mxu0 0
        %926 = vmatpush2.bf16.xpose.msra.mxu0 0
        %927 = vmatprep.subr.bf16.mxu0 0
        %928 = vmatpush2.bf16.xpose.msra.mxu0 0
        %929 = vmatprep.subr.bf16.mxu0 0
        %930 = vmatpush2.bf16.xpose.msra.mxu0 0
        %931 = vmatprep.subr.bf16.mxu0 0
        %932 = vmatpush2.bf16.xpose.msra.mxu0 0
        %933 = vmatprep.subr.bf16.mxu0 0
        %934 = vmatpush2.bf16.xpose.msra.mxu0 0
        %935 = vmatprep.subr.bf16.mxu0 0
        %936 = vmatpush2.bf16.xpose.msra.mxu0 0
        %937 = vmatprep.mubr.bf16.mxu0 0
        %938 = vmatmul.mubr.bf16.gmra.mxu0 %v900
        %v939 = vpop.f32.mrf.mxu0
        %v940 = vadd.f32 %v669, %v939
        %v941 = vpop.f32.mrf.mxu0
        %v942 = vpop.f32.mrf.mxu0
        %v943 = vpop.f32.mrf.mxu0
        %944 = vdwg.mxu0
        %v945 = vsel %vm676, %v940, -inf
        %946 = vmax.xlane.f32.xlu0 %v945
        %v947 = vpop.xlane.xlu0 %946
        %v948 = vsub.f32 %v940, %v947
        %v949 = vmul.f32 %v948, 1.442695
        %v950 = vpow.pop %v949
        %v951 = vsel %vm676, %v950, 0.0
        %952 = vadd.xlane.f32.xlu0 %v951
        %v953 = vpop.xlane.xlu0 %952
        %v954 = vpack.c.bf16 %v950, %v950
        %955 = vrot.lane.b32.xlu0 %v672, 48
        %v956 = vpop.permute.xlu0 %955
        %v958 = vsel %vm676, %v954, 0
        %v961 = vsel %vm738, %v956, 0
        %963 = vmatprep.subr.bf16.mxu0 0
        %964 = vmatpush1.bf16.msra.mxu0 0
        %965 = vmatprep.subr.bf16.mxu0 0
        %966 = vmatpush1.bf16.msra.mxu0 0
        %967 = vmatprep.subr.bf16.mxu0 0
        %968 = vmatpush1.bf16.msra.mxu0 0
        %969 = vmatprep.subr.bf16.mxu0 0
        %970 = vmatpush1.bf16.msra.mxu0 0
        %971 = vmatprep.subr.bf16.mxu0 0
        %972 = vmatpush1.bf16.msra.mxu0 0
        %973 = vmatprep.subr.bf16.mxu0 0
        %974 = vmatpush1.bf16.msra.mxu0 0
        %975 = vmatprep.subr.bf16.mxu0 0
        %976 = vmatpush1.bf16.msra.mxu0 0
        %977 = vmatprep.subr.bf16.mxu0 0
        %978 = vmatpush1.bf16.msra.mxu0 %v961
        %979 = vmatprep.subr.bf16.mxu0 0
        %980 = vmatpush2.bf16.msra.mxu0 0
        %981 = vmatprep.subr.bf16.mxu0 0
        %982 = vmatpush2.bf16.msra.mxu0 0
        %983 = vmatprep.subr.bf16.mxu0 0
        %984 = vmatpush2.bf16.msra.mxu0 0
        %985 = vmatprep.subr.bf16.mxu0 0
        %986 = vmatpush2.bf16.msra.mxu0 0
        %987 = vmatprep.subr.bf16.mxu0 0
        %988 = vmatpush2.bf16.msra.mxu0 0
        %989 = vmatprep.subr.bf16.mxu0 0
        %990 = vmatpush2.bf16.msra.mxu0 0
        %991 = vmatprep.subr.bf16.mxu0 0
        %992 = vmatpush2.bf16.msra.mxu0 0
        %993 = vmatprep.subr.bf16.mxu0 0
        %994 = vmatpush2.bf16.msra.mxu0 0
        %995 = vmatprep.mubr.bf16.mxu0 0
        %996 = vmatmul.mubr.bf16.gmra.mxu0 %v958
        %v997 = vpop.f32.mrf.mxu0
        %v998 = vadd.f32 0.0, %v997
        %v999 = vpop.f32.mrf.mxu0
        %v1000 = vpop.f32.mrf.mxu0
        %v1001 = vpop.f32.mrf.mxu0
        %1002 = vdwg.mxu0
        %v1003 = vrcp.pop %v953
        %v1004 = vmul.f32 %v998, %v1003
        %1005 = vrot.lane.b32.xlu0 %v671, 104
        %v1006 = vpop.permute.xlu0 %1005
        %1007 = vrot.lane.b32.xlu0 %v672, 72
        %v1008 = vpop.permute.xlu0 %1007
        %v1010 = vsel %vm676, %v1006, 0
        %v1013 = vsel %vm676, %v1008, 0
        %1015 = vmatprep.subr.bf16.mxu0 0
        %1016 = vmatpush1.bf16.xpose.msra.mxu0 0
        %1017 = vmatprep.subr.bf16.mxu0 0
        %1018 = vmatpush1.bf16.xpose.msra.mxu0 0
        %1019 = vmatprep.subr.bf16.mxu0 0
        %1020 = vmatpush1.bf16.xpose.msra.mxu0 0
        %1021 = vmatprep.subr.bf16.mxu0 0
        %1022 = vmatpush1.bf16.xpose.msra.mxu0 0
        %1023 = vmatprep.subr.bf16.mxu0 0
        %1024 = vmatpush1.bf16.xpose.msra.mxu0 0
        %1025 = vmatprep.subr.bf16.mxu0 0
        %1026 = vmatpush1.bf16.xpose.msra.mxu0 0
        %1027 = vmatprep.subr.bf16.mxu0 0
        %1028 = vmatpush1.bf16.xpose.msra.mxu0 0
        %1029 = vmatprep.subr.bf16.mxu0 0
        %1030 = vmatpush1.bf16.xpose.msra.mxu0 %v1013
        %1031 = vmatprep.subr.bf16.mxu0 0
        %1032 = vmatpush2.bf16.xpose.msra.mxu0 0
        %1033 = vmatprep.subr.bf16.mxu0 0
        %1034 = vmatpush2.bf16.xpose.msra.mxu0 0
        %1035 = vmatprep.subr.bf16.mxu0 0
        %1036 = vmatpush2.bf16.xpose.msra.mxu0 0
        %1037 = vmatprep.subr.bf16.mxu0 0
        %1038 = vmatpush2.bf16.xpose.msra.mxu0 0
        %1039 = vmatprep.subr.bf16.mxu0 0
        %1040 = vmatpush2.bf16.xpose.msra.mxu0 0
        %1041 = vmatprep.subr.bf16.mxu0 0
        %1042 = vmatpush2.bf16.xpose.msra.mxu0 0
        %1043 = vmatprep.subr.bf16.mxu0 0
        %1044 = vmatpush2.bf16.xpose.msra.mxu0 0
        %1045 = vmatprep.subr.bf16.mxu0 0
        %1046 = vmatpush2.bf16.xpose.msra.mxu0 0
        %1047 = vmatprep.mubr.bf16.mxu0 0
        %1048 = vmatmul.mubr.bf16.gmra.mxu0 %v1010
        %v1049 = vpop.f32.mrf.mxu0
        %v1050 = vadd.f32 %v669, %v1049
        %v1051 = vpop.f32.mrf.mxu0
        %v1052 = vpop.f32.mrf.mxu0
        %v1053 = vpop.f32.mrf.mxu0
        %1054 = vdwg.mxu0
        %v1055 = vsel %vm676, %v1050, -inf
        %1056 = vmax.xlane.f32.xlu0 %v1055
        %v1057 = vpop.xlane.xlu0 %1056
        %v1058 = vsub.f32 %v1050, %v1057
        %v1059 = vmul.f32 %v1058, 1.442695
        %v1060 = vpow.pop %v1059
        %v1061 = vsel %vm676, %v1060, 0.0
        %1062 = vadd.xlane.f32.xlu0 %v1061
        %v1063 = vpop.xlane.xlu0 %1062
        %v1064 = vpack.c.bf16 %v1060, %v1060
        %1065 = vrot.lane.b32.xlu0 %v672, 40
        %v1066 = vpop.permute.xlu0 %1065
        %v1068 = vsel %vm676, %v1064, 0
        %v1071 = vsel %vm738, %v1066, 0
        %1073 = vmatprep.subr.bf16.mxu0 0
        %1074 = vmatpush1.bf16.msra.mxu0 0
        %1075 = vmatprep.subr.bf16.mxu0 0
        %1076 = vmatpush1.bf16.msra.mxu0 0
        %1077 = vmatprep.subr.bf16.mxu0 0
        %1078 = vmatpush1.bf16.msra.mxu0 0
        %1079 = vmatprep.subr.bf16.mxu0 0
        %1080 = vmatpush1.bf16.msra.mxu0 0
        %1081 = vmatprep.subr.bf16.mxu0 0
        %1082 = vmatpush1.bf16.msra.mxu0 0
        %1083 = vmatprep.subr.bf16.mxu0 0
        %1084 = vmatpush1.bf16.msra.mxu0 0
        %1085 = vmatprep.subr.bf16.mxu0 0
        %1086 = vmatpush1.bf16.msra.mxu0 0
        %1087 = vmatprep.subr.bf16.mxu0 0
        %1088 = vmatpush1.bf16.msra.mxu0 %v1071
        %1089 = vmatprep.subr.bf16.mxu0 0
        %1090 = vmatpush2.bf16.msra.mxu0 0
        %1091 = vmatprep.subr.bf16.mxu0 0
        %1092 = vmatpush2.bf16.msra.mxu0 0
        %1093 = vmatprep.subr.bf16.mxu0 0
        %1094 = vmatpush2.bf16.msra.mxu0 0
        %1095 = vmatprep.subr.bf16.mxu0 0
        %1096 = vmatpush2.bf16.msra.mxu0 0
        %1097 = vmatprep.subr.bf16.mxu0 0
        %1098 = vmatpush2.bf16.msra.mxu0 0
        %1099 = vmatprep.subr.bf16.mxu0 0
        %1100 = vmatpush2.bf16.msra.mxu0 0
        %1101 = vmatprep.subr.bf16.mxu0 0
        %1102 = vmatpush2.bf16.msra.mxu0 0
        %1103 = vmatprep.subr.bf16.mxu0 0
        %1104 = vmatpush2.bf16.msra.mxu0 0
        %1105 = vmatprep.mubr.bf16.mxu0 0
        %1106 = vmatmul.mubr.bf16.gmra.mxu0 %v1068
        %v1107 = vpop.f32.mrf.mxu0
        %v1108 = vadd.f32 0.0, %v1107
        %v1109 = vpop.f32.mrf.mxu0
        %v1110 = vpop.f32.mrf.mxu0
        %v1111 = vpop.f32.mrf.mxu0
        %1112 = vdwg.mxu0
        %v1113 = vrcp.pop %v1063
        %v1114 = vmul.f32 %v1108, %v1113
        %1116 = vrot.lane.b32.xlu0 %v894, 8
        %v1117 = vpop.permute.xlu0 %1116
        %1120 = vrot.lane.b32.xlu0 %v1004, 16
        %v1121 = vpop.permute.xlu0 %1120
        %1124 = vrot.lane.b32.xlu0 %v1114, 24
        %v1125 = vpop.permute.xlu0 %1124
        %v1127 = vsel %vm676, %v783, %v1117
        %vm1128 = vcmask 130048
        %v1129 = vsel %vm1128, %v1127, %v1121
        %vm1130 = vcmask 195584
        %v1131 = vsel %vm1130, %v1129, %v1125
        %v1132 = vpack.c.bf16 %v1131, %v1131
        %v1133 = vld [vmem:[%s6] sm:$0xf]
        %v1134 = vld [vmem:[%s6 + $0x4] sm:$0xf]
        %v1135 = vld [vmem:[%s6 + $0x8] sm:$0xf]
        %v1136 = vld [vmem:[%s6 + $0xc] sm:$0xf]
        %v1137 = vld [vmem:[#allocation6] sm:$0x1]
        %v1139 = vlaneseq
        %v1140 = vshrl.u32 %v1139, 7
        %v1141 = vsub.s32 0, %v1140
        %v1142 = vrot.slane %v1137, %v1141
        %v1148 = vunpack.c.l.b16 %v1133
        %v1149 = vunpack.c.l.b16 %v1134
        %v1150 = vunpack.c.l.b16 %v1135
        %v1151 = vunpack.c.l.b16 %v1136
        %v1152 = vpack.c.b16 %v1149, %v1148
        %v1153 = vpack.c.b16 %v1151, %v1150
        %v1157 = vsel %vm568, %v1132, 0
        %1159 = vmatprep.subr.bf16.mxu0 0
        %1160 = vmatpush1.bf16.msra.mxu0 0
        %1161 = vmatprep.subr.bf16.mxu0 0
        %1162 = vmatpush1.bf16.msra.mxu0 0
        %1163 = vmatprep.subr.bf16.mxu0 0
        %1164 = vmatpush1.bf16.msra.mxu0 0
        %1165 = vmatprep.subr.bf16.mxu0 0
        %1166 = vmatpush1.bf16.msra.mxu0 0
        %1167 = vmatprep.subr.bf16.mxu0 0
        %1168 = vmatpush1.bf16.msra.mxu0 0
        %1169 = vmatprep.subr.bf16.mxu0 0
        %1170 = vmatpush1.bf16.msra.mxu0 0
        %1171 = vmatprep.subr.bf16.mxu0 0
        %1172 = vmatpush1.bf16.msra.mxu0 %v1153
        %1173 = vmatprep.subr.bf16.mxu0 0
        %1174 = vmatpush1.bf16.msra.mxu0 %v1152
        %1175 = vmatprep.subr.bf16.mxu0 0
        %1176 = vmatpush2.bf16.msra.mxu0 0
        %1177 = vmatprep.subr.bf16.mxu0 0
        %1178 = vmatpush2.bf16.msra.mxu0 0
        %1179 = vmatprep.subr.bf16.mxu0 0
        %1180 = vmatpush2.bf16.msra.mxu0 0
        %1181 = vmatprep.subr.bf16.mxu0 0
        %1182 = vmatpush2.bf16.msra.mxu0 0
        %1183 = vmatprep.subr.bf16.mxu0 0
        %1184 = vmatpush2.bf16.msra.mxu0 0
        %1185 = vmatprep.subr.bf16.mxu0 0
        %1186 = vmatpush2.bf16.msra.mxu0 0
        %1187 = vmatprep.subr.bf16.mxu0 0
        %1188 = vmatpush2.bf16.msra.mxu0 0
        %1189 = vmatprep.subr.bf16.mxu0 0
        %1190 = vmatpush2.bf16.msra.mxu0 0
        %1191 = vmatprep.mubr.bf16.mxu0 0
        %1192 = vmatmul.mubr.bf16.gmra.mxu0 %v1157
        %v1193 = vpop.f32.mrf.mxu0
        %v1194 = vadd.f32 %v1142, %v1193
        %v1195 = vpop.f32.mrf.mxu0
        %v1196 = vpop.f32.mrf.mxu0
        %v1197 = vpop.f32.mrf.mxu0
        %1198 = vdwg.mxu0
        %v1199 = vadd.f32 %v565, %v1194
        %v1200 = vld [vmem:[%s8] sm:$0x1]
        %v1201 = vld [vmem:[%s9] sm:$0x1]
        %v1202 = vsel %vm568, %v1199, 0.0
        %1203 = vadd.xlane.f32.xlu0 %v1202
        %v1204 = vpop.xlane.xlu0 %1203
        %v1205 = vmul.f32 %v1204, %v572
        %v1206 = vsub.f32 %v1199, %v1205
        %v1207 = vmul.f32 %v1206, %v1206
        %v1208 = vsel %vm568, %v1207, 0.0
        %1209 = vadd.xlane.f32.xlu0 %v1208
        %v1210 = vpop.xlane.xlu0 %1209
        %v1211 = vmul.f32 %v1210, %v572
        %v1212 = vadd.f32 %v1211, 1e-05
        %v1213 = vrsqrt.pop %v1212
        %v1214 = vmul.f32 %v1206, %v1213
        %v1216 = vlaneseq
        %v1217 = vshrl.u32 %v1216, 7
        %v1218 = vsub.s32 0, %v1217
        %v1219 = vrot.slane %v1200, %v1218
        %v1221 = vmul.f32 %v1214, %v1219
        %v1223 = vlaneseq
        %v1224 = vshrl.u32 %v1223, 7
        %v1225 = vsub.s32 0, %v1224
        %v1226 = vrot.slane %v1201, %v1225
        %v1228 = vadd.f32 %v1221, %v1226
        %v1229 = vpack.c.bf16 %v1228, %v1228
        %v1230 = vld [vmem:[#allocation7] sm:$0xf]
        %v1231 = vld [vmem:[#allocation7 + $0x4] sm:$0xf]
        %v1232 = vld [vmem:[#allocation7 + $0x8] sm:$0xf]
        %v1233 = vld [vmem:[#allocation7 + $0xc] sm:$0xf]
        %v1234 = vld [vmem:[#allocation9] sm:$0x1]
        %v1236 = vlaneseq
        %v1237 = vshrl.u32 %v1236, 7
        %v1238 = vsub.s32 0, %v1237
        %v1239 = vrot.slane %v1234, %v1238
        %v1245 = vunpack.c.l.b16 %v1230
        %v1246 = vunpack.c.l.b16 %v1231
        %v1247 = vunpack.c.l.b16 %v1232
        %v1248 = vunpack.c.l.b16 %v1233
        %v1249 = vpack.c.b16 %v1246, %v1245
        %v1250 = vpack.c.b16 %v1248, %v1247
        %v1254 = vsel %vm568, %v1229, 0
        %1256 = vmatprep.subr.bf16.mxu0 0
        %1257 = vmatpush1.bf16.msra.mxu0 0
        %1258 = vmatprep.subr.bf16.mxu0 0
        %1259 = vmatpush1.bf16.msra.mxu0 0
        %1260 = vmatprep.subr.bf16.mxu0 0
        %1261 = vmatpush1.bf16.msra.mxu0 0
        %1262 = vmatprep.subr.bf16.mxu0 0
        %1263 = vmatpush1.bf16.msra.mxu0 0
        %1264 = vmatprep.subr.bf16.mxu0 0
        %1265 = vmatpush1.bf16.msra.mxu0 0
        %1266 = vmatprep.subr.bf16.mxu0 0
        %1267 = vmatpush1.bf16.msra.mxu0 0
        %1268 = vmatprep.subr.bf16.mxu0 0
        %1269 = vmatpush1.bf16.msra.mxu0 %v1250
        %1270 = vmatprep.subr.bf16.mxu0 0
        %1271 = vmatpush1.bf16.msra.mxu0 %v1249
        %1272 = vmatprep.subr.bf16.mxu0 0
        %1273 = vmatpush2.bf16.msra.mxu0 0
        %1274 = vmatprep.subr.bf16.mxu0 0
        %1275 = vmatpush2.bf16.msra.mxu0 0
        %1276 = vmatprep.subr.bf16.mxu0 0
        %1277 = vmatpush2.bf16.msra.mxu0 0
        %1278 = vmatprep.subr.bf16.mxu0 0
        %1279 = vmatpush2.bf16.msra.mxu0 0
        %1280 = vmatprep.subr.bf16.mxu0 0
        %1281 = vmatpush2.bf16.msra.mxu0 0
        %1282 = vmatprep.subr.bf16.mxu0 0
        %1283 = vmatpush2.bf16.msra.mxu0 0
        %1284 = vmatprep.subr.bf16.mxu0 0
        %1285 = vmatpush2.bf16.msra.mxu0 0
        %1286 = vmatprep.subr.bf16.mxu0 0
        %1287 = vmatpush2.bf16.msra.mxu0 0
        %1288 = vmatprep.mubr.bf16.mxu0 0
        %1289 = vmatmul.mubr.bf16.gmra.mxu0 %v1254
        %v1290 = vpop.f32.mrf.mxu0
        %v1291 = vadd.f32 %v1239, %v1290
        %v1292 = vpop.f32.mrf.mxu0
        %v1293 = vpop.f32.mrf.mxu0
        %v1294 = vpop.f32.mrf.mxu0
        %1295 = vdwg.mxu0
        %v1296 = vmul.f32 %v1291, 1.702
        %v1297 = vxor.u32 %v1296, 2147483648
        %v1298 = vmul.f32 %v1297, 1.442695
        %v1299 = vpow.pop %v1298
        %v1300 = vadd.f32 %v1299, 1.0
        %v1301 = vrcp.pop %v1300
        %v1302 = vmul.f32 1.0, %v1301
        %v1303 = vmul.f32 %v1291, %v1302
        %v1304 = vpack.c.bf16 %v1303, %v1303
        %v1305 = vld [vmem:[#allocation10] sm:$0xf]
        %v1306 = vld [vmem:[#allocation10 + $0x4] sm:$0xf]
        %v1307 = vld [vmem:[#allocation10 + $0x8] sm:$0xf]
        %v1308 = vld [vmem:[#allocation10 + $0xc] sm:$0xf]
        %v1309 = vld [vmem:[#allocation10 + $0x10] sm:$0xf]
        %v1310 = vld [vmem:[#allocation10 + $0x14] sm:$0xf]
        %v1311 = vld [vmem:[#allocation10 + $0x18] sm:$0xf]
        %v1312 = vld [vmem:[#allocation10 + $0x1c] sm:$0xf]
        %v1313 = vld [vmem:[#allocation10 + $0x20] sm:$0xf]
        %v1314 = vld [vmem:[#allocation10 + $0x24] sm:$0xf]
        %v1315 = vld [vmem:[#allocation10 + $0x28] sm:$0xf]
        %v1316 = vld [vmem:[#allocation10 + $0x2c] sm:$0xf]
        %v1317 = vld [vmem:[#allocation10 + $0x30] sm:$0xf]
        %v1318 = vld [vmem:[#allocation10 + $0x34] sm:$0xf]
        %v1319 = vld [vmem:[#allocation10 + $0x38] sm:$0xf]
        %v1320 = vld [vmem:[#allocation10 + $0x3c] sm:$0xf]
        %v1321 = vld [vmem:[#allocation12] sm:$0x1]
        %v1323 = vlaneseq
        %v1324 = vshrl.u32 %v1323, 7
        %v1325 = vsub.s32 0, %v1324
        %v1326 = vrot.slane %v1321, %v1325
        %v1344 = vunpack.c.l.b16 %v1305
        %v1345 = vunpack.c.l.b16 %v1306
        %v1346 = vunpack.c.l.b16 %v1307
        %v1347 = vunpack.c.l.b16 %v1308
        %v1348 = vunpack.c.l.b16 %v1309
        %v1349 = vunpack.c.l.b16 %v1310
        %v1350 = vunpack.c.l.b16 %v1311
        %v1351 = vunpack.c.l.b16 %v1312
        %v1352 = vunpack.c.l.b16 %v1313
        %v1353 = vunpack.c.l.b16 %v1314
        %v1354 = vunpack.c.l.b16 %v1315
        %v1355 = vunpack.c.l.b16 %v1316
        %v1356 = vunpack.c.l.b16 %v1317
        %v1357 = vunpack.c.l.b16 %v1318
        %v1358 = vunpack.c.l.b16 %v1319
        %v1359 = vunpack.c.l.b16 %v1320
        %v1360 = vpack.c.b16 %v1345, %v1344
        %v1361 = vpack.c.b16 %v1347, %v1346
        %v1362 = vpack.c.b16 %v1349, %v1348
        %v1363 = vpack.c.b16 %v1351, %v1350
        %v1364 = vpack.c.b16 %v1353, %v1352
        %v1365 = vpack.c.b16 %v1355, %v1354
        %v1366 = vpack.c.b16 %v1357, %v1356
        %v1367 = vpack.c.b16 %v1359, %v1358
        %1376 = vmatprep.subr.bf16.mxu0 0
        %1377 = vmatpush1.bf16.msra.mxu0 %v1367
        %1378 = vmatprep.subr.bf16.mxu0 0
        %1379 = vmatpush1.bf16.msra.mxu0 %v1366
        %1380 = vmatprep.subr.bf16.mxu0 0
        %1381 = vmatpush1.bf16.msra.mxu0 %v1365
        %1382 = vmatprep.subr.bf16.mxu0 0
        %1383 = vmatpush1.bf16.msra.mxu0 %v1364
        %1384 = vmatprep.subr.bf16.mxu0 0
        %1385 = vmatpush1.bf16.msra.mxu0 %v1363
        %1386 = vmatprep.subr.bf16.mxu0 0
        %1387 = vmatpush1.bf16.msra.mxu0 %v1362
        %1388 = vmatprep.subr.bf16.mxu0 0
        %1389 = vmatpush1.bf16.msra.mxu0 %v1361
        %1390 = vmatprep.subr.bf16.mxu0 0
        %1391 = vmatpush1.bf16.msra.mxu0 %v1360
        %1392 = vmatprep.subr.bf16.mxu0 0
        %1393 = vmatpush2.bf16.msra.mxu0 0
        %1394 = vmatprep.subr.bf16.mxu0 0
        %1395 = vmatpush2.bf16.msra.mxu0 0
        %1396 = vmatprep.subr.bf16.mxu0 0
        %1397 = vmatpush2.bf16.msra.mxu0 0
        %1398 = vmatprep.subr.bf16.mxu0 0
        %1399 = vmatpush2.bf16.msra.mxu0 0
        %1400 = vmatprep.subr.bf16.mxu0 0
        %1401 = vmatpush2.bf16.msra.mxu0 0
        %1402 = vmatprep.subr.bf16.mxu0 0
        %1403 = vmatpush2.bf16.msra.mxu0 0
        %1404 = vmatprep.subr.bf16.mxu0 0
        %1405 = vmatpush2.bf16.msra.mxu0 0
        %1406 = vmatprep.subr.bf16.mxu0 0
        %1407 = vmatpush2.bf16.msra.mxu0 0
        %1408 = vmatprep.mubr.bf16.mxu0 0
        %1409 = vmatmul.mubr.bf16.gmra.mxu0 %v1304
        %v1410 = vpop.f32.mrf.mxu0
        %v1411 = vadd.f32 %v1326, %v1410
        %v1412 = vpop.f32.mrf.mxu0
        %v1413 = vpop.f32.mrf.mxu0
        %v1414 = vpop.f32.mrf.mxu0
        %1415 = vdwg.mxu0
        %v1416 = vadd.f32 %v1199, %v1411
        %1417 = vst.msk [vmem:[%s561] sm:$0xff] %vm568, %v1416
        %p1418 = scmp.lt.s32.totalorder %s31, 1
        %s1419 = scalar_select %p1418, %s31, 1
        %s1420 = smul.addr %s1419, 8
        %s1421 = scalar_lea.vmem %s14, %s1420
        // Predicated region
        $region105: #{text_encoder_forward.3} parent=75 // pred_check
          %p1422 = pneg %p348
        $region106: #{text_encoder_forward.3} parent=75 // pred_check_branch
          %1424 = sbr.rel (%p1422) target = $region108
        $region107: #{text_encoder_forward.3} parent=75 // pred_region
          _
        $region108: #{text_encoder_forward.3} parent=75 // pred_fallthru
          _
      $region76: #{text_encoder_forward.3} parent=5 // pred_fallthru
        _
      %p1425 = scmp.le.s32.totalorder 2, %s26
      // Predicated region
      $region109: #{text_encoder_forward.3} parent=5 // pred_check
        %p1426 = pneg %p1425
      $region110: #{text_encoder_forward.3} parent=5 // pred_check_branch
        %1428 = sbr.rel (%p1426) target = $region112
      $region111: #{text_encoder_forward.3} parent=5 // pred_region
        %s1429 = ssub.s32 %s26, 2
        // Predicated region
        $region113: #{text_encoder_forward.3} parent=111 // pred_check
          %p1430 = pneg %p354
        $region114: #{text_encoder_forward.3} parent=111 // pred_check_branch
          %1432 = sbr.rel (%p1430) target = $region116
        $region115: #{text_encoder_forward.3} parent=111 // pred_region
          %p1433 = scmp.lt.s32.totalorder %s32, 1
          %s1434 = scalar_select %p1433, %s32, 1
          %s1435 = smul.addr %s1434, 8
          %s1436 = scalar_lea.vmem %s14, %s1435
        $region116: #{text_encoder_forward.3} parent=111 // pred_fallthru
          _
      $region112: #{text_encoder_forward.3} parent=5 // pred_fallthru
        _
    $region6: #{text_encoder_forward.3} parent=1 // loop_footer
      %s30 = sadd.s32 1, %s26
    $region7: #{text_encoder_forward.3} parent=1 // loop_footer_branch
      %25 = sbr.rel target = $region3
    $region8: #{text_encoder_forward.3} parent=1 // loop_exit
      _
    %1437 = vsyncpa [#allocation3], 1
    %s1438 = scalar_lea.sflag [#allocation3], 1
    %1439 = vsyncpa %s1438, 1
    %1440 = vsyncpa [#allocation5], 1
    %1441 = vsyncpa [#allocation8], 1
    %1442 = vsyncpa [#allocation11], 1

</llo_original>
